<compile_context>
chip_gen: v5e
topology: v5e:2x2
jax: 0.10.0
libtpu: 0.0.40
codegen_flags: <defaults>
</compile_context>

<pallas_src>
import jax
import jax.numpy as jnp
from jax import lax
from jax.experimental import pallas as pl
from jax.experimental.pallas import tpu as pltpu


ATTN_TILE = 256        # attention is VPU-bound; 256 keeps temps ~1 MiB and N/tq >= 2
MM_TILE = 512          # adj@(.) / readout are HBM-bound; bigger tiles -> roofline
_VMEM_LIMIT = 40 << 20  # safe scoped-VMEM headroom on v5e / v6e / v7x


def _pick_tile(n, pref):
    t = min(n, pref)
    if n % t != 0:
        # TODO(synk): pad the node dimension to a tile multiple (masking the
        # tail via edge_mask / graph_neigh) for graphs whose size is not a
        # multiple of the tile.
        raise ValueError(f"N={n} must be divisible by tile={t}")
    return t


def _tile_counts(mask, tq, tk):
    """Per-(qi, ki) nonzero count of the edge mask (scalar-prefetch operand)."""
    n = mask.shape[0]
    nq, nk = n // tq, n // tk
    return (mask != 0).astype(jnp.int32).reshape(nq, tq, nk, tk).sum(axis=(1, 3))


# ---------------------------------------------------------------------------
# Kernel 1: dense GATv2 attention, flash-style online softmax.
#   e[i, j] = att . leaky_relu(gr[i] + gl[j])   for existing edges j -> i
#   alpha   = softmax_j(e[i, j]);  out[i] = sum_j alpha[i, j] * gl[j]
# Both branches are folded into the block (B leading dim); grid = (qi, ki),
# ki is the (arbitrary) reduction axis.  Empty mask tiles are skipped.
# ---------------------------------------------------------------------------
def _gatv2_attn_kernel(cnt_ref, gr_ref, glt_ref, att_ref, mask_ref, o_ref,
                       m_sc, l_sc, acc_sc):
    qi = pl.program_id(0)
    ki = pl.program_id(1)

    @pl.when(ki == 0)
    def _():
        m_sc[...] = jnp.full_like(m_sc, -1e30)
        l_sc[...] = jnp.zeros_like(l_sc)
        acc_sc[...] = jnp.zeros_like(acc_sc)

    @pl.when(cnt_ref[qi, ki] > 0)               # skip tiles with zero edges
    def _():
        nb, tq, d = gr_ref.shape
        tk = glt_ref.shape[2]
        edge = mask_ref[...] > 0                # one mask compare for all branches
        for b in range(nb):                     # static: B in {1, 2}
            gr = gr_ref[b]                      # (tq, D) f32
            glt = glt_ref[b]                    # (D, tk) f32 (lane-dense)
            # lane-dense score accumulation: e is (tq, tk), tk on the lane axis
            e = jnp.zeros((tq, tk), jnp.float32)
            for di in range(d):                 # static unrolled, D is small
                s = gr[:, di:di + 1] + glt[di:di + 1, :]
                e = e + att_ref[di] * jnp.maximum(s, 0.2 * s)   # leaky_relu(0.2)
            e = jnp.where(edge, e, -1e30)

            m_prev = m_sc[b]
            m_new = jnp.maximum(m_prev, jnp.max(e, axis=1, keepdims=True))
            rescale = jnp.exp(m_prev - m_new)
            p = jnp.where(edge, jnp.exp(e - m_new), 0.0)
            l_sc[b] = rescale * l_sc[b] + jnp.sum(p, axis=1, keepdims=True)
            acc_sc[b] = rescale * acc_sc[b] + lax.dot_general(
                p, glt, (((1,), (1,)), ((), ())),
                preferred_element_type=jnp.float32)             # p @ gl
            m_sc[b] = m_new

    @pl.when(ki == pl.num_programs(1) - 1)
    def _():
        inv_l = pl.reciprocal(jnp.maximum(l_sc[...], 1e-12), approx=True)
        o_ref[...] = (acc_sc[...] * inv_l).astype(o_ref.dtype)


def gatv2_attention(gr, glt, att, edge_mask, tile_counts, tq, tk):
    """gr: (B,N,D) target proj; glt: (B,D,N) source proj^T; att: (D,) SMEM."""
    B, N, D = gr.shape
    nq, nk = N // tq, N // tk
    return pl.pallas_call(
        _gatv2_attn_kernel,
        out_shape=jax.ShapeDtypeStruct((B, N, D), jnp.float32),
        grid_spec=pltpu.PrefetchScalarGridSpec(
            num_scalar_prefetch=1,
            grid=(nq, nk),
            in_specs=[
                pl.BlockSpec((B, tq, D), lambda qi, ki, cnt: (0, qi, 0)),   # gr
                pl.BlockSpec((B, D, tk), lambda qi, ki, cnt: (0, 0, ki)),   # gl^T
                pl.BlockSpec(memory_space=pltpu.MemorySpace.SMEM),          # att
                pl.BlockSpec((tq, tk), lambda qi, ki, cnt: (qi, ki)),       # edge mask
            ],
            out_specs=pl.BlockSpec((B, tq, D), lambda qi, ki, cnt: (0, qi, 0)),
            scratch_shapes=[
                pltpu.VMEM((B, tq, 1), jnp.float32),    # running max
                pltpu.VMEM((B, tq, 1), jnp.float32),    # running denom
                pltpu.VMEM((B, tq, D), jnp.float32),    # running accumulator
            ],
        ),
        compiler_params=pltpu.CompilerParams(
            dimension_semantics=("parallel", "arbitrary"),
            vmem_limit_bytes=_VMEM_LIMIT,
        ),
    )(tile_counts, gr, glt, att, edge_mask)


# ---------------------------------------------------------------------------
# Kernel 2: fused  z[b] = adj @ y[b]  (+ optional emb = relu(z)), branches
# folded into the block.  grid = (row_block, k_block); k is the reduction axis.
# adj / y stream as bf16; accumulation is f32.
# ---------------------------------------------------------------------------
def _adj_mm_body(adj_ref, y_ref, acc_sc):
    @pl.when(pl.program_id(1) == 0)
    def _():
        acc_sc[...] = jnp.zeros_like(acc_sc)
    adj_blk = adj_ref[...]                          # one load serves all branches
    for b in range(y_ref.shape[0]):
        acc_sc[b] = acc_sc[b] + jnp.dot(adj_blk, y_ref[b],
                                        preferred_element_type=jnp.float32)


def _adj_mm_kernel(adj_ref, y_ref, z_ref, acc_sc):
    _adj_mm_body(adj_ref, y_ref, acc_sc)

    @pl.when(pl.program_id(1) == pl.num_programs(1) - 1)
    def _():
        z_ref[...] = acc_sc[...].astype(z_ref.dtype)


def _adj_mm_relu_kernel(adj_ref, y_ref, z0_ref, emb_ref, acc_sc):
    _adj_mm_body(adj_ref, y_ref, acc_sc)

    @pl.when(pl.program_id(1) == pl.num_programs(1) - 1)
    def _():
        acc = acc_sc[...]
        z0_ref[...] = acc[0].astype(z0_ref.dtype)    # only branch-0 pre-ReLU is used
        emb_ref[...] = jnp.maximum(acc, 0.0).astype(emb_ref.dtype)


def adj_apply(adj, y, *, with_relu, tile=MM_TILE):
    B, N, d = y.shape
    tm = _pick_tile(N, tile)
    tk = _pick_tile(N, tile)
    grid = (N // tm, N // tk)
    in_specs = [
        pl.BlockSpec((tm, tk), lambda mi, ki: (mi, ki)),        # adj (bf16)
        pl.BlockSpec((B, tk, d), lambda mi, ki: (0, ki, 0)),    # y   (bf16)
    ]
    scratch = [pltpu.VMEM((B, tm, d), jnp.float32)]
    cp = pltpu.CompilerParams(
        dimension_semantics=("parallel", "arbitrary"),
        vmem_limit_bytes=_VMEM_LIMIT,
    )
    if with_relu:
        return pl.pallas_call(
            _adj_mm_relu_kernel,
            out_shape=(jax.ShapeDtypeStruct((N, d), jnp.float32),       # z (branch 0)
                       jax.ShapeDtypeStruct((B, N, d), jnp.float32)),   # relu(z)
            grid_spec=pltpu.PrefetchScalarGridSpec(
                num_scalar_prefetch=0, grid=grid, in_specs=in_specs,
                out_specs=(pl.BlockSpec((tm, d), lambda mi, ki: (mi, 0)),
                           pl.BlockSpec((B, tm, d), lambda mi, ki: (0, mi, 0))),
                scratch_shapes=scratch),
            compiler_params=cp,
        )(adj, y)
    return pl.pallas_call(
        _adj_mm_kernel,
        out_shape=jax.ShapeDtypeStruct((B, N, d), jnp.float32),
        grid_spec=pltpu.PrefetchScalarGridSpec(
            num_scalar_prefetch=0, grid=grid, in_specs=in_specs,
            out_specs=pl.BlockSpec((B, tm, d), lambda mi, ki: (0, mi, 0)),
            scratch_shapes=scratch),
        compiler_params=cp,
    )(adj, y)


# ---------------------------------------------------------------------------
# Kernel 3: fused AvgReadout + L2-normalize + sigmoid + BOTH Bilinear
# discriminators.  grid = (row_block, k_block); k is the reduction axis of
# graph_neigh @ emb.  Output is lane-dense (4, N):
#   row 0: ret[:,0]   = f_k(emb,   g)    row 2: ret_a[:,0] = f_k(emb_a, g_a)
#   row 1: ret[:,1]   = f_k(emb_a, g)    row 3: ret_a[:,1] = f_k(emb,   g_a)
# ---------------------------------------------------------------------------
def _readout_disc_kernel(mask_ref, ek_ref, eq_ref, wt_ref, b_ref,
                         out_ref, vs0_sc, vs1_sc, rs_sc):
    ki = pl.program_id(1)

    @pl.when(ki == 0)
    def _():
        vs0_sc[...] = jnp.zeros_like(vs0_sc)
        vs1_sc[...] = jnp.zeros_like(vs1_sc)
        rs_sc[...] = jnp.zeros_like(rs_sc)

    mask = mask_ref[...]                                     # (tm, tk) bf16
    vs0_sc[...] += jnp.dot(mask, ek_ref[0], preferred_element_type=jnp.float32)
    vs1_sc[...] += jnp.dot(mask, ek_ref[1], preferred_element_type=jnp.float32)
    rs_sc[...] += jnp.sum(mask.astype(jnp.float32), axis=1, keepdims=True)

    @pl.when(ki == pl.num_programs(1) - 1)
    def _():
        inv_rows = pl.reciprocal(jnp.maximum(rs_sc[...], 1e-12), approx=True)
        bias = b_ref[0]

        def global_vec(vsum):
            g = vsum * inv_rows                                          # mean
            inv_nrm = lax.rsqrt(jnp.maximum(
                jnp.sum(g * g, axis=1, keepdims=True), 1e-24))           # L2 norm
            g = g * inv_nrm
            return 1.0 / (1.0 + jnp.exp(-g))                             # sigmoid

        g0 = global_vec(vs0_sc[...])                                     # (tm, D)
        g1 = global_vec(vs1_sc[...])
        wc0 = jnp.dot(g0, wt_ref[...], preferred_element_type=jnp.float32)  # (W g)
        wc1 = jnp.dot(g1, wt_ref[...], preferred_element_type=jnp.float32)

        e0 = eq_ref[0]                                                   # emb   (f32)
        e1 = eq_ref[1]                                                   # emb_a (f32)
        lhs = jnp.stack([e0, e1, e1, e0], axis=0)                        # (4, tm, D)
        rhs = jnp.stack([wc0, wc0, wc1, wc1], axis=0)
        out_ref[...] = (jnp.sum(lhs * rhs, axis=-1) + bias).astype(out_ref.dtype)


def readout_disc(graph_neigh, emb, w_t, bias, *, tile=MM_TILE):
    _, N, d = emb.shape
    tm = _pick_tile(N, tile)
    tk = _pick_tile(N, tile)
    grid = (N // tm, N // tk)
    logits = pl.pallas_call(
        _readout_disc_kernel,
        out_shape=jax.ShapeDtypeStruct((4, N), jnp.float32),
        grid_spec=pltpu.PrefetchScalarGridSpec(
            num_scalar_prefetch=0,
            grid=grid,
            in_specs=[
                pl.BlockSpec((tm, tk), lambda mi, ki: (mi, ki)),      # graph_neigh bf16
                pl.BlockSpec((2, tk, d), lambda mi, ki: (0, ki, 0)),  # emb kv view bf16
                pl.BlockSpec((2, tm, d), lambda mi, ki: (0, mi, 0)),  # emb row view f32
                pl.BlockSpec((d, d), lambda mi, ki: (0, 0)),          # W^T
                pl.BlockSpec(memory_space=pltpu.MemorySpace.SMEM),    # bias scalar
            ],
            out_specs=pl.BlockSpec((4, tm), lambda mi, ki: (0, mi)),
            scratch_shapes=[pltpu.VMEM((tm, d), jnp.float32),
                            pltpu.VMEM((tm, d), jnp.float32),
                            pltpu.VMEM((tm, 1), jnp.float32)],
        ),
        compiler_params=pltpu.CompilerParams(
            dimension_semantics=("parallel", "arbitrary"),
            vmem_limit_bytes=_VMEM_LIMIT,
        ),
    )(graph_neigh, emb.astype(jnp.bfloat16), emb, w_t, bias)
    ret = logits[0:2].T          # (N, 2)  = disc(g,   emb,   emb_a)
    ret_a = logits[2:4].T        # (N, 2)  = disc(g_a, emb_a, emb)
    return ret, ret_a


# ---------------------------------------------------------------------------
# Parameters & forward
# ---------------------------------------------------------------------------
def glorot(key, shape):
    fan_in, fan_out = shape
    limit = jnp.sqrt(6.0 / (fan_in + fan_out))
    return jax.random.uniform(key, shape, jnp.float32, -limit, limit)


def init_params(key, f_in, f_out):
    ks = jax.random.split(key, 7)
    return dict(
        zip_wl=glorot(ks[0], (f_in, f_out)),   # GATv2 lin_l (source)
        zip_wr=glorot(ks[1], (f_in, f_out)),   # GATv2 lin_r (target)
        zip_att=glorot(ks[2], (1, f_out)),     # GATv2 attention vector
        eco_wl=glorot(ks[3], (f_out, f_in)),
        eco_wr=glorot(ks[4], (f_out, f_in)),
        eco_att=glorot(ks[5], (1, f_in)),
        disc_w=glorot(ks[6], (f_out, f_out)),  # nn.Bilinear weight (xavier_uniform)
        disc_b=jnp.zeros((1,), jnp.float32),   # nn.Bilinear bias (filled with 0)
    )


@jax.jit
def encoder_forward(p, feat, feat_a, adj, graph_neigh, edge_mask):
    N = feat.shape[0]
    # N x N operands streamed from HBM as bf16 (0/1 masks are exact in bf16).
    adj_bf = adj.astype(jnp.bfloat16)
    mask_bf = edge_mask.astype(jnp.bfloat16)
    gn_bf = graph_neigh.astype(jnp.bfloat16)

    tq = _pick_tile(N, ATTN_TILE)
    tk = _pick_tile(N, ATTN_TILE)
    cnt = _tile_counts(edge_mask, tq, tk)        # per-tile edge occupancy (once)

    # ---- zip stage: both branches share weights & mask -> folded (B = 2) ----
    x2 = jnp.stack([feat, feat_a], axis=0)                           # (2, N, Fin)
    gr = jnp.einsum("bnf,fd->bnd", x2, p["zip_wr"])                  # target proj
    glt = jnp.einsum("bnf,fd->bdn", x2, p["zip_wl"])                 # source proj^T
    zip_attn = gatv2_attention(gr, glt, p["zip_att"].reshape(-1),
                               mask_bf, cnt, tq, tk)

    z0, emb2 = adj_apply(adj_bf, zip_attn.astype(jnp.bfloat16), with_relu=True)
    hiden_emb = z0                                                   # pre-ReLU z

    # ---- eco stage: h = adj @ eco_layer(z), branch 0 only (B = 1) ----
    z_in = z0[None]                                                  # (1, N, Fout)
    gr_e = jnp.einsum("bnf,fd->bnd", z_in, p["eco_wr"])
    glt_e = jnp.einsum("bnf,fd->bdn", z_in, p["eco_wl"])
    eco_attn = gatv2_attention(gr_e, glt_e, p["eco_att"].reshape(-1),
                               mask_bf, cnt, tq, tk)
    h = adj_apply(adj_bf, eco_attn.astype(jnp.bfloat16), with_relu=False)[0]

    # ---- fused AvgReadout + sigmoid + both discriminators ----
    ret, ret_a = readout_disc(gn_bf, emb2, p["disc_w"].T, p["disc_b"])
    return hiden_emb, h, ret, ret_a


# ---------------------------------------------------------------------------
if __name__ == "__main__":
    N, F_IN, F_OUT = 16, 32, 16
    key = jax.random.PRNGKey(0)
    k_adj, k_feat, k_perm, k_par = jax.random.split(key, 4)

    # Synthetic graph: symmetric random adjacency + self connections (avoids
    # isolated nodes so softmax / readout row-sums are well defined).
    a_rand = (jax.random.uniform(k_adj, (N, N)) < 0.3).astype(jnp.float32)
    a_sym = jnp.clip(a_rand + a_rand.T, 0.0, 1.0)
    edge_mask = jnp.clip(a_sym + jnp.eye(N, dtype=jnp.float32), 0.0, 1.0)
    graph_neigh = edge_mask
    adj = edge_mask / jnp.sum(edge_mask, axis=1, keepdims=True)   # row-normalized

    feat = jax.random.normal(k_feat, (N, F_IN), jnp.float32)
    feat_a = feat[jax.random.permutation(k_perm, N)]              # corrupted features

    params = init_params(k_par, F_IN, F_OUT)

    out = encoder_forward(params, feat, feat_a, adj, graph_neigh, edge_mask)
    out = jax.block_until_ready(out)
    hiden_emb, h, ret, ret_a = out

    assert hiden_emb.shape == (N, F_OUT)
    assert h.shape == (N, F_IN)
    assert ret.shape == (N, 2) and ret_a.shape == (N, 2)
    for o in out:
        assert bool(jnp.all(jnp.isfinite(o)))

    print("KERNEL_OK")
</pallas_src>

<mosaic_0001>
module attributes {stable_mosaic.version = 11 : i64} {
  func.func @_gatv2_attn_kernel(%arg0: i32, %arg1: i32, %arg2: memref<1x1xi32, #tpu.memory_space<smem>>, %arg3: memref<1x16x32xf32, #tpu.memory_space<vmem>>, %arg4: memref<1x32x16xf32, #tpu.memory_space<vmem>>, %arg5: memref<32xf32, #tpu.memory_space<smem>>, %arg6: memref<16x16xbf16, #tpu.memory_space<vmem>>, %arg7: memref<1x16x32xf32, #tpu.memory_space<vmem>>, %arg8: memref<1x16x1xf32, #tpu.memory_space<vmem>>, %arg9: memref<1x16x1xf32, #tpu.memory_space<vmem>>, %arg10: memref<1x16x32xf32, #tpu.memory_space<vmem>>) attributes {dimension_semantics = [#tpu.dimension_semantics<parallel>, #tpu.dimension_semantics<arbitrary>], iteration_bounds = array<i64: 1, 1>, scalar_prefetch = 1 : i64, scratch_operands = 3 : i64, tpu.core_type = #tpu.core_type<tc>, window_params = [{transform_indices = @transform_0, window_bounds = array<i64: 1, 16, 32>}, {transform_indices = @transform_1, window_bounds = array<i64: 1, 32, 16>}, {transform_indices = @transform_2, window_bounds = array<i64: 32>}, {transform_indices = @transform_3, window_bounds = array<i64: 16, 16>}, {transform_indices = @transform_4, window_bounds = array<i64: 1, 16, 32>}]} {
    %c0_i32 = arith.constant 0 : i32
    %0 = arith.cmpi eq, %arg1, %c0_i32 : i32
    %1 = arith.extui %0 : i1 to i32
    %c0_i32_0 = arith.constant 0 : i32
    %2 = arith.cmpi ne, %1, %c0_i32_0 : i32
    scf.if %2 {
      %cst = arith.constant -1.000000e+30 : f32
      %12 = vector.broadcast %cst : f32 to vector<1x16x1xf32>
      %c0 = arith.constant 0 : index
      %c0_5 = arith.constant 0 : index
      %c0_6 = arith.constant 0 : index
      %13 = vector.load %arg8[%c0, %c0_5, %c0_6] : memref<1x16x1xf32, #tpu.memory_space<vmem>>, vector<1x16x1xf32>
      tpu.vector_store %arg8[%c0, %c0_5, %c0_6], %12 {strides = array<i32>} : memref<1x16x1xf32, #tpu.memory_space<vmem>>, vector<1x16x1xf32>,
      %cst_7 = arith.constant 0.000000e+00 : f32
      %14 = vector.broadcast %cst_7 : f32 to vector<1x16x1xf32>
      %c0_8 = arith.constant 0 : index
      %c0_9 = arith.constant 0 : index
      %c0_10 = arith.constant 0 : index
      %15 = vector.load %arg9[%c0_8, %c0_9, %c0_10] : memref<1x16x1xf32, #tpu.memory_space<vmem>>, vector<1x16x1xf32>
      tpu.vector_store %arg9[%c0_8, %c0_9, %c0_10], %14 {strides = array<i32>} : memref<1x16x1xf32, #tpu.memory_space<vmem>>, vector<1x16x1xf32>,
      %cst_11 = arith.constant 0.000000e+00 : f32
      %16 = vector.broadcast %cst_11 : f32 to vector<1x16x32xf32>
      %c0_12 = arith.constant 0 : index
      %c0_13 = arith.constant 0 : index
      %c0_14 = arith.constant 0 : index
      %17 = vector.load %arg10[%c0_12, %c0_13, %c0_14] : memref<1x16x32xf32, #tpu.memory_space<vmem>>, vector<1x16x32xf32>
      tpu.vector_store %arg10[%c0_12, %c0_13, %c0_14], %16 {strides = array<i32>} : memref<1x16x32xf32, #tpu.memory_space<vmem>>, vector<1x16x32xf32>,
    } else {
    }
    %3 = arith.index_cast %arg0 : i32 to index
    %4 = arith.index_cast %arg1 : i32 to index
    %5 = memref.load %arg2[%3, %4] : memref<1x1xi32, #tpu.memory_space<smem>>
    %c0_i32_1 = arith.constant 0 : i32
    %6 = arith.cmpi sgt, %5, %c0_i32_1 : i32
    %7 = arith.extui %6 : i1 to i32
    %c0_i32_2 = arith.constant 0 : i32
    %8 = arith.cmpi ne, %7, %c0_i32_2 : i32
    scf.if %8 {
      %c0 = arith.constant 0 : index
      %c0_5 = arith.constant 0 : index
      %12 = vector.load %arg6[%c0, %c0_5] : memref<16x16xbf16, #tpu.memory_space<vmem>>, vector<16x16xbf16>
      %cst = arith.constant 0.000000e+00 : bf16
      %13 = vector.broadcast %cst : bf16 to vector<16x16xbf16>
      %14 = arith.cmpf ogt, %12, %13 : vector<16x16xbf16>
      %c0_6 = arith.constant 0 : index
      %c0_7 = arith.constant 0 : index
      %c0_8 = arith.constant 0 : index
      %15 = vector.load %arg3[%c0_6, %c0_7, %c0_8] : memref<1x16x32xf32, #tpu.memory_space<vmem>>, vector<1x16x32xf32>
      %16 = vector.shape_cast %15 : vector<1x16x32xf32> to vector<16x32xf32>
      %c0_9 = arith.constant 0 : index
      %c0_10 = arith.constant 0 : index
      %c0_11 = arith.constant 0 : index
      %17 = vector.load %arg4[%c0_9, %c0_10, %c0_11] : memref<1x32x16xf32, #tpu.memory_space<vmem>>, vector<1x32x16xf32>
      %18 = vector.shape_cast %17 : vector<1x32x16xf32> to vector<32x16xf32>
      %cst_12 = arith.constant 0.000000e+00 : f32
      %19 = vector.broadcast %cst_12 : f32 to vector<16x16xf32>
      %20 = vector.extract_strided_slice %16 {offsets = [0, 0], sizes = [16, 1], strides = [1, 1]} : vector<16x32xf32> to vector<16x1xf32>
      %21 = vector.extract_strided_slice %18 {offsets = [0, 0], sizes = [1, 16], strides = [1, 1]} : vector<32x16xf32> to vector<1x16xf32>
      %22 = vector.broadcast %20 : vector<16x1xf32> to vector<16x16xf32>
      %23 = vector.broadcast %21 : vector<1x16xf32> to vector<16x16xf32>
      %24 = arith.addf %22, %23 : vector<16x16xf32>
      %c0_13 = arith.constant 0 : index
      %25 = memref.load %arg5[%c0_13] : memref<32xf32, #tpu.memory_space<smem>>
      %cst_14 = arith.constant 2.000000e-01 : f32
      %26 = vector.broadcast %cst_14 : f32 to vector<16x16xf32>
      %27 = arith.mulf %26, %24 : vector<16x16xf32>
      %28 = arith.maximumf %24, %27 : vector<16x16xf32>
      %29 = vector.broadcast %25 : f32 to vector<16x16xf32>
      %30 = arith.mulf %29, %28 : vector<16x16xf32>
      %31 = arith.addf %19, %30 : vector<16x16xf32>
      %32 = vector.extract_strided_slice %16 {offsets = [0, 1], sizes = [16, 1], strides = [1, 1]} : vector<16x32xf32> to vector<16x1xf32>
      %33 = vector.extract_strided_slice %18 {offsets = [1, 0], sizes = [1, 16], strides = [1, 1]} : vector<32x16xf32> to vector<1x16xf32>
      %34 = vector.broadcast %32 : vector<16x1xf32> to vector<16x16xf32>
      %35 = vector.broadcast %33 : vector<1x16xf32> to vector<16x16xf32>
      %36 = arith.addf %34, %35 : vector<16x16xf32>
      %c1 = arith.constant 1 : index
      %37 = memref.load %arg5[%c1] : memref<32xf32, #tpu.memory_space<smem>>
      %cst_15 = arith.constant 2.000000e-01 : f32
      %38 = vector.broadcast %cst_15 : f32 to vector<16x16xf32>
      %39 = arith.mulf %38, %36 : vector<16x16xf32>
      %40 = arith.maximumf %36, %39 : vector<16x16xf32>
      %41 = vector.broadcast %37 : f32 to vector<16x16xf32>
      %42 = arith.mulf %41, %40 : vector<16x16xf32>
      %43 = arith.addf %31, %42 : vector<16x16xf32>
      %44 = vector.extract_strided_slice %16 {offsets = [0, 2], sizes = [16, 1], strides = [1, 1]} : vector<16x32xf32> to vector<16x1xf32>
      %45 = vector.extract_strided_slice %18 {offsets = [2, 0], sizes = [1, 16], strides = [1, 1]} : vector<32x16xf32> to vector<1x16xf32>
      %46 = vector.broadcast %44 : vector<16x1xf32> to vector<16x16xf32>
      %47 = vector.broadcast %45 : vector<1x16xf32> to vector<16x16xf32>
      %48 = arith.addf %46, %47 : vector<16x16xf32>
      %c2 = arith.constant 2 : index
      %49 = memref.load %arg5[%c2] : memref<32xf32, #tpu.memory_space<smem>>
      %cst_16 = arith.constant 2.000000e-01 : f32
      %50 = vector.broadcast %cst_16 : f32 to vector<16x16xf32>
      %51 = arith.mulf %50, %48 : vector<16x16xf32>
      %52 = arith.maximumf %48, %51 : vector<16x16xf32>
      %53 = vector.broadcast %49 : f32 to vector<16x16xf32>
      %54 = arith.mulf %53, %52 : vector<16x16xf32>
      %55 = arith.addf %43, %54 : vector<16x16xf32>
      %56 = vector.extract_strided_slice %16 {offsets = [0, 3], sizes = [16, 1], strides = [1, 1]} : vector<16x32xf32> to vector<16x1xf32>
      %57 = vector.extract_strided_slice %18 {offsets = [3, 0], sizes = [1, 16], strides = [1, 1]} : vector<32x16xf32> to vector<1x16xf32>
      %58 = vector.broadcast %56 : vector<16x1xf32> to vector<16x16xf32>
      %59 = vector.broadcast %57 : vector<1x16xf32> to vector<16x16xf32>
      %60 = arith.addf %58, %59 : vector<16x16xf32>
      %c3 = arith.constant 3 : index
      %61 = memref.load %arg5[%c3] : memref<32xf32, #tpu.memory_space<smem>>
      %cst_17 = arith.constant 2.000000e-01 : f32
      %62 = vector.broadcast %cst_17 : f32 to vector<16x16xf32>
      %63 = arith.mulf %62, %60 : vector<16x16xf32>
      %64 = arith.maximumf %60, %63 : vector<16x16xf32>
      %65 = vector.broadcast %61 : f32 to vector<16x16xf32>
      %66 = arith.mulf %65, %64 : vector<16x16xf32>
      %67 = arith.addf %55, %66 : vector<16x16xf32>
      %68 = vector.extract_strided_slice %16 {offsets = [0, 4], sizes = [16, 1], strides = [1, 1]} : vector<16x32xf32> to vector<16x1xf32>
      %69 = vector.extract_strided_slice %18 {offsets = [4, 0], sizes = [1, 16], strides = [1, 1]} : vector<32x16xf32> to vector<1x16xf32>
      %70 = vector.broadcast %68 : vector<16x1xf32> to vector<16x16xf32>
      %71 = vector.broadcast %69 : vector<1x16xf32> to vector<16x16xf32>
      %72 = arith.addf %70, %71 : vector<16x16xf32>
      %c4 = arith.constant 4 : index
      %73 = memref.load %arg5[%c4] : memref<32xf32, #tpu.memory_space<smem>>
      %cst_18 = arith.constant 2.000000e-01 : f32
      %74 = vector.broadcast %cst_18 : f32 to vector<16x16xf32>
      %75 = arith.mulf %74, %72 : vector<16x16xf32>
      %76 = arith.maximumf %72, %75 : vector<16x16xf32>
      %77 = vector.broadcast %73 : f32 to vector<16x16xf32>
      %78 = arith.mulf %77, %76 : vector<16x16xf32>
      %79 = arith.addf %67, %78 : vector<16x16xf32>
      %80 = vector.extract_strided_slice %16 {offsets = [0, 5], sizes = [16, 1], strides = [1, 1]} : vector<16x32xf32> to vector<16x1xf32>
      %81 = vector.extract_strided_slice %18 {offsets = [5, 0], sizes = [1, 16], strides = [1, 1]} : vector<32x16xf32> to vector<1x16xf32>
      %82 = vector.broadcast %80 : vector<16x1xf32> to vector<16x16xf32>
      %83 = vector.broadcast %81 : vector<1x16xf32> to vector<16x16xf32>
      %84 = arith.addf %82, %83 : vector<16x16xf32>
      %c5 = arith.constant 5 : index
      %85 = memref.load %arg5[%c5] : memref<32xf32, #tpu.memory_space<smem>>
      %cst_19 = arith.constant 2.000000e-01 : f32
      %86 = vector.broadcast %cst_19 : f32 to vector<16x16xf32>
      %87 = arith.mulf %86, %84 : vector<16x16xf32>
      %88 = arith.maximumf %84, %87 : vector<16x16xf32>
      %89 = vector.broadcast %85 : f32 to vector<16x16xf32>
      %90 = arith.mulf %89, %88 : vector<16x16xf32>
      %91 = arith.addf %79, %90 : vector<16x16xf32>
      %92 = vector.extract_strided_slice %16 {offsets = [0, 6], sizes = [16, 1], strides = [1, 1]} : vector<16x32xf32> to vector<16x1xf32>
      %93 = vector.extract_strided_slice %18 {offsets = [6, 0], sizes = [1, 16], strides = [1, 1]} : vector<32x16xf32> to vector<1x16xf32>
      %94 = vector.broadcast %92 : vector<16x1xf32> to vector<16x16xf32>
      %95 = vector.broadcast %93 : vector<1x16xf32> to vector<16x16xf32>
      %96 = arith.addf %94, %95 : vector<16x16xf32>
      %c6 = arith.constant 6 : index
      %97 = memref.load %arg5[%c6] : memref<32xf32, #tpu.memory_space<smem>>
      %cst_20 = arith.constant 2.000000e-01 : f32
      %98 = vector.broadcast %cst_20 : f32 to vector<16x16xf32>
      %99 = arith.mulf %98, %96 : vector<16x16xf32>
      %100 = arith.maximumf %96, %99 : vector<16x16xf32>
      %101 = vector.broadcast %97 : f32 to vector<16x16xf32>
      %102 = arith.mulf %101, %100 : vector<16x16xf32>
      %103 = arith.addf %91, %102 : vector<16x16xf32>
      %104 = vector.extract_strided_slice %16 {offsets = [0, 7], sizes = [16, 1], strides = [1, 1]} : vector<16x32xf32> to vector<16x1xf32>
      %105 = vector.extract_strided_slice %18 {offsets = [7, 0], sizes = [1, 16], strides = [1, 1]} : vector<32x16xf32> to vector<1x16xf32>
      %106 = vector.broadcast %104 : vector<16x1xf32> to vector<16x16xf32>
      %107 = vector.broadcast %105 : vector<1x16xf32> to vector<16x16xf32>
      %108 = arith.addf %106, %107 : vector<16x16xf32>
      %c7 = arith.constant 7 : index
      %109 = memref.load %arg5[%c7] : memref<32xf32, #tpu.memory_space<smem>>
      %cst_21 = arith.constant 2.000000e-01 : f32
      %110 = vector.broadcast %cst_21 : f32 to vector<16x16xf32>
      %111 = arith.mulf %110, %108 : vector<16x16xf32>
      %112 = arith.maximumf %108, %111 : vector<16x16xf32>
      %113 = vector.broadcast %109 : f32 to vector<16x16xf32>
      %114 = arith.mulf %113, %112 : vector<16x16xf32>
      %115 = arith.addf %103, %114 : vector<16x16xf32>
      %116 = vector.extract_strided_slice %16 {offsets = [0, 8], sizes = [16, 1], strides = [1, 1]} : vector<16x32xf32> to vector<16x1xf32>
      %117 = vector.extract_strided_slice %18 {offsets = [8, 0], sizes = [1, 16], strides = [1, 1]} : vector<32x16xf32> to vector<1x16xf32>
      %118 = vector.broadcast %116 : vector<16x1xf32> to vector<16x16xf32>
      %119 = vector.broadcast %117 : vector<1x16xf32> to vector<16x16xf32>
      %120 = arith.addf %118, %119 : vector<16x16xf32>
      %c8 = arith.constant 8 : index
      %121 = memref.load %arg5[%c8] : memref<32xf32, #tpu.memory_space<smem>>
      %cst_22 = arith.constant 2.000000e-01 : f32
      %122 = vector.broadcast %cst_22 : f32 to vector<16x16xf32>
      %123 = arith.mulf %122, %120 : vector<16x16xf32>
      %124 = arith.maximumf %120, %123 : vector<16x16xf32>
      %125 = vector.broadcast %121 : f32 to vector<16x16xf32>
      %126 = arith.mulf %125, %124 : vector<16x16xf32>
      %127 = arith.addf %115, %126 : vector<16x16xf32>
      %128 = vector.extract_strided_slice %16 {offsets = [0, 9], sizes = [16, 1], strides = [1, 1]} : vector<16x32xf32> to vector<16x1xf32>
      %129 = vector.extract_strided_slice %18 {offsets = [9, 0], sizes = [1, 16], strides = [1, 1]} : vector<32x16xf32> to vector<1x16xf32>
      %130 = vector.broadcast %128 : vector<16x1xf32> to vector<16x16xf32>
      %131 = vector.broadcast %129 : vector<1x16xf32> to vector<16x16xf32>
      %132 = arith.addf %130, %131 : vector<16x16xf32>
      %c9 = arith.constant 9 : index
      %133 = memref.load %arg5[%c9] : memref<32xf32, #tpu.memory_space<smem>>
      %cst_23 = arith.constant 2.000000e-01 : f32
      %134 = vector.broadcast %cst_23 : f32 to vector<16x16xf32>
      %135 = arith.mulf %134, %132 : vector<16x16xf32>
      %136 = arith.maximumf %132, %135 : vector<16x16xf32>
      %137 = vector.broadcast %133 : f32 to vector<16x16xf32>
      %138 = arith.mulf %137, %136 : vector<16x16xf32>
      %139 = arith.addf %127, %138 : vector<16x16xf32>
      %140 = vector.extract_strided_slice %16 {offsets = [0, 10], sizes = [16, 1], strides = [1, 1]} : vector<16x32xf32> to vector<16x1xf32>
      %141 = vector.extract_strided_slice %18 {offsets = [10, 0], sizes = [1, 16], strides = [1, 1]} : vector<32x16xf32> to vector<1x16xf32>
      %142 = vector.broadcast %140 : vector<16x1xf32> to vector<16x16xf32>
      %143 = vector.broadcast %141 : vector<1x16xf32> to vector<16x16xf32>
      %144 = arith.addf %142, %143 : vector<16x16xf32>
      %c10 = arith.constant 10 : index
      %145 = memref.load %arg5[%c10] : memref<32xf32, #tpu.memory_space<smem>>
      %cst_24 = arith.constant 2.000000e-01 : f32
      %146 = vector.broadcast %cst_24 : f32 to vector<16x16xf32>
      %147 = arith.mulf %146, %144 : vector<16x16xf32>
      %148 = arith.maximumf %144, %147 : vector<16x16xf32>
      %149 = vector.broadcast %145 : f32 to vector<16x16xf32>
      %150 = arith.mulf %149, %148 : vector<16x16xf32>
      %151 = arith.addf %139, %150 : vector<16x16xf32>
      %152 = vector.extract_strided_slice %16 {offsets = [0, 11], sizes = [16, 1], strides = [1, 1]} : vector<16x32xf32> to vector<16x1xf32>
      %153 = vector.extract_strided_slice %18 {offsets = [11, 0], sizes = [1, 16], strides = [1, 1]} : vector<32x16xf32> to vector<1x16xf32>
      %154 = vector.broadcast %152 : vector<16x1xf32> to vector<16x16xf32>
      %155 = vector.broadcast %153 : vector<1x16xf32> to vector<16x16xf32>
      %156 = arith.addf %154, %155 : vector<16x16xf32>
      %c11 = arith.constant 11 : index
      %157 = memref.load %arg5[%c11] : memref<32xf32, #tpu.memory_space<smem>>
      %cst_25 = arith.constant 2.000000e-01 : f32
      %158 = vector.broadcast %cst_25 : f32 to vector<16x16xf32>
      %159 = arith.mulf %158, %156 : vector<16x16xf32>
      %160 = arith.maximumf %156, %159 : vector<16x16xf32>
      %161 = vector.broadcast %157 : f32 to vector<16x16xf32>
      %162 = arith.mulf %161, %160 : vector<16x16xf32>
      %163 = arith.addf %151, %162 : vector<16x16xf32>
      %164 = vector.extract_strided_slice %16 {offsets = [0, 12], sizes = [16, 1], strides = [1, 1]} : vector<16x32xf32> to vector<16x1xf32>
      %165 = vector.extract_strided_slice %18 {offsets = [12, 0], sizes = [1, 16], strides = [1, 1]} : vector<32x16xf32> to vector<1x16xf32>
      %166 = vector.broadcast %164 : vector<16x1xf32> to vector<16x16xf32>
      %167 = vector.broadcast %165 : vector<1x16xf32> to vector<16x16xf32>
      %168 = arith.addf %166, %167 : vector<16x16xf32>
      %c12 = arith.constant 12 : index
      %169 = memref.load %arg5[%c12] : memref<32xf32, #tpu.memory_space<smem>>
      %cst_26 = arith.constant 2.000000e-01 : f32
      %170 = vector.broadcast %cst_26 : f32 to vector<16x16xf32>
      %171 = arith.mulf %170, %168 : vector<16x16xf32>
      %172 = arith.maximumf %168, %171 : vector<16x16xf32>
      %173 = vector.broadcast %169 : f32 to vector<16x16xf32>
      %174 = arith.mulf %173, %172 : vector<16x16xf32>
      %175 = arith.addf %163, %174 : vector<16x16xf32>
      %176 = vector.extract_strided_slice %16 {offsets = [0, 13], sizes = [16, 1], strides = [1, 1]} : vector<16x32xf32> to vector<16x1xf32>
      %177 = vector.extract_strided_slice %18 {offsets = [13, 0], sizes = [1, 16], strides = [1, 1]} : vector<32x16xf32> to vector<1x16xf32>
      %178 = vector.broadcast %176 : vector<16x1xf32> to vector<16x16xf32>
      %179 = vector.broadcast %177 : vector<1x16xf32> to vector<16x16xf32>
      %180 = arith.addf %178, %179 : vector<16x16xf32>
      %c13 = arith.constant 13 : index
      %181 = memref.load %arg5[%c13] : memref<32xf32, #tpu.memory_space<smem>>
      %cst_27 = arith.constant 2.000000e-01 : f32
      %182 = vector.broadcast %cst_27 : f32 to vector<16x16xf32>
      %183 = arith.mulf %182, %180 : vector<16x16xf32>
      %184 = arith.maximumf %180, %183 : vector<16x16xf32>
      %185 = vector.broadcast %181 : f32 to vector<16x16xf32>
      %186 = arith.mulf %185, %184 : vector<16x16xf32>
      %187 = arith.addf %175, %186 : vector<16x16xf32>
      %188 = vector.extract_strided_slice %16 {offsets = [0, 14], sizes = [16, 1], strides = [1, 1]} : vector<16x32xf32> to vector<16x1xf32>
      %189 = vector.extract_strided_slice %18 {offsets = [14, 0], sizes = [1, 16], strides = [1, 1]} : vector<32x16xf32> to vector<1x16xf32>
      %190 = vector.broadcast %188 : vector<16x1xf32> to vector<16x16xf32>
      %191 = vector.broadcast %189 : vector<1x16xf32> to vector<16x16xf32>
      %192 = arith.addf %190, %191 : vector<16x16xf32>
      %c14 = arith.constant 14 : index
      %193 = memref.load %arg5[%c14] : memref<32xf32, #tpu.memory_space<smem>>
      %cst_28 = arith.constant 2.000000e-01 : f32
      %194 = vector.broadcast %cst_28 : f32 to vector<16x16xf32>
      %195 = arith.mulf %194, %192 : vector<16x16xf32>
      %196 = arith.maximumf %192, %195 : vector<16x16xf32>
      %197 = vector.broadcast %193 : f32 to vector<16x16xf32>
      %198 = arith.mulf %197, %196 : vector<16x16xf32>
      %199 = arith.addf %187, %198 : vector<16x16xf32>
      %200 = vector.extract_strided_slice %16 {offsets = [0, 15], sizes = [16, 1], strides = [1, 1]} : vector<16x32xf32> to vector<16x1xf32>
      %201 = vector.extract_strided_slice %18 {offsets = [15, 0], sizes = [1, 16], strides = [1, 1]} : vector<32x16xf32> to vector<1x16xf32>
      %202 = vector.broadcast %200 : vector<16x1xf32> to vector<16x16xf32>
      %203 = vector.broadcast %201 : vector<1x16xf32> to vector<16x16xf32>
      %204 = arith.addf %202, %203 : vector<16x16xf32>
      %c15 = arith.constant 15 : index
      %205 = memref.load %arg5[%c15] : memref<32xf32, #tpu.memory_space<smem>>
      %cst_29 = arith.constant 2.000000e-01 : f32
      %206 = vector.broadcast %cst_29 : f32 to vector<16x16xf32>
      %207 = arith.mulf %206, %204 : vector<16x16xf32>
      %208 = arith.maximumf %204, %207 : vector<16x16xf32>
      %209 = vector.broadcast %205 : f32 to vector<16x16xf32>
      %210 = arith.mulf %209, %208 : vector<16x16xf32>
      %211 = arith.addf %199, %210 : vector<16x16xf32>
      %212 = vector.extract_strided_slice %16 {offsets = [0, 16], sizes = [16, 1], strides = [1, 1]} : vector<16x32xf32> to vector<16x1xf32>
      %213 = vector.extract_strided_slice %18 {offsets = [16, 0], sizes = [1, 16], strides = [1, 1]} : vector<32x16xf32> to vector<1x16xf32>
      %214 = vector.broadcast %212 : vector<16x1xf32> to vector<16x16xf32>
      %215 = vector.broadcast %213 : vector<1x16xf32> to vector<16x16xf32>
      %216 = arith.addf %214, %215 : vector<16x16xf32>
      %c16 = arith.constant 16 : index
      %217 = memref.load %arg5[%c16] : memref<32xf32, #tpu.memory_space<smem>>
      %cst_30 = arith.constant 2.000000e-01 : f32
      %218 = vector.broadcast %cst_30 : f32 to vector<16x16xf32>
      %219 = arith.mulf %218, %216 : vector<16x16xf32>
      %220 = arith.maximumf %216, %219 : vector<16x16xf32>
      %221 = vector.broadcast %217 : f32 to vector<16x16xf32>
      %222 = arith.mulf %221, %220 : vector<16x16xf32>
      %223 = arith.addf %211, %222 : vector<16x16xf32>
      %224 = vector.extract_strided_slice %16 {offsets = [0, 17], sizes = [16, 1], strides = [1, 1]} : vector<16x32xf32> to vector<16x1xf32>
      %225 = vector.extract_strided_slice %18 {offsets = [17, 0], sizes = [1, 16], strides = [1, 1]} : vector<32x16xf32> to vector<1x16xf32>
      %226 = vector.broadcast %224 : vector<16x1xf32> to vector<16x16xf32>
      %227 = vector.broadcast %225 : vector<1x16xf32> to vector<16x16xf32>
      %228 = arith.addf %226, %227 : vector<16x16xf32>
      %c17 = arith.constant 17 : index
      %229 = memref.load %arg5[%c17] : memref<32xf32, #tpu.memory_space<smem>>
      %cst_31 = arith.constant 2.000000e-01 : f32
      %230 = vector.broadcast %cst_31 : f32 to vector<16x16xf32>
      %231 = arith.mulf %230, %228 : vector<16x16xf32>
      %232 = arith.maximumf %228, %231 : vector<16x16xf32>
      %233 = vector.broadcast %229 : f32 to vector<16x16xf32>
      %234 = arith.mulf %233, %232 : vector<16x16xf32>
      %235 = arith.addf %223, %234 : vector<16x16xf32>
      %236 = vector.extract_strided_slice %16 {offsets = [0, 18], sizes = [16, 1], strides = [1, 1]} : vector<16x32xf32> to vector<16x1xf32>
      %237 = vector.extract_strided_slice %18 {offsets = [18, 0], sizes = [1, 16], strides = [1, 1]} : vector<32x16xf32> to vector<1x16xf32>
      %238 = vector.broadcast %236 : vector<16x1xf32> to vector<16x16xf32>
      %239 = vector.broadcast %237 : vector<1x16xf32> to vector<16x16xf32>
      %240 = arith.addf %238, %239 : vector<16x16xf32>
      %c18 = arith.constant 18 : index
      %241 = memref.load %arg5[%c18] : memref<32xf32, #tpu.memory_space<smem>>
      %cst_32 = arith.constant 2.000000e-01 : f32
      %242 = vector.broadcast %cst_32 : f32 to vector<16x16xf32>
      %243 = arith.mulf %242, %240 : vector<16x16xf32>
      %244 = arith.maximumf %240, %243 : vector<16x16xf32>
      %245 = vector.broadcast %241 : f32 to vector<16x16xf32>
      %246 = arith.mulf %245, %244 : vector<16x16xf32>
      %247 = arith.addf %235, %246 : vector<16x16xf32>
      %248 = vector.extract_strided_slice %16 {offsets = [0, 19], sizes = [16, 1], strides = [1, 1]} : vector<16x32xf32> to vector<16x1xf32>
      %249 = vector.extract_strided_slice %18 {offsets = [19, 0], sizes = [1, 16], strides = [1, 1]} : vector<32x16xf32> to vector<1x16xf32>
      %250 = vector.broadcast %248 : vector<16x1xf32> to vector<16x16xf32>
      %251 = vector.broadcast %249 : vector<1x16xf32> to vector<16x16xf32>
      %252 = arith.addf %250, %251 : vector<16x16xf32>
      %c19 = arith.constant 19 : index
      %253 = memref.load %arg5[%c19] : memref<32xf32, #tpu.memory_space<smem>>
      %cst_33 = arith.constant 2.000000e-01 : f32
      %254 = vector.broadcast %cst_33 : f32 to vector<16x16xf32>
      %255 = arith.mulf %254, %252 : vector<16x16xf32>
      %256 = arith.maximumf %252, %255 : vector<16x16xf32>
      %257 = vector.broadcast %253 : f32 to vector<16x16xf32>
      %258 = arith.mulf %257, %256 : vector<16x16xf32>
      %259 = arith.addf %247, %258 : vector<16x16xf32>
      %260 = vector.extract_strided_slice %16 {offsets = [0, 20], sizes = [16, 1], strides = [1, 1]} : vector<16x32xf32> to vector<16x1xf32>
      %261 = vector.extract_strided_slice %18 {offsets = [20, 0], sizes = [1, 16], strides = [1, 1]} : vector<32x16xf32> to vector<1x16xf32>
      %262 = vector.broadcast %260 : vector<16x1xf32> to vector<16x16xf32>
      %263 = vector.broadcast %261 : vector<1x16xf32> to vector<16x16xf32>
      %264 = arith.addf %262, %263 : vector<16x16xf32>
      %c20 = arith.constant 20 : index
      %265 = memref.load %arg5[%c20] : memref<32xf32, #tpu.memory_space<smem>>
      %cst_34 = arith.constant 2.000000e-01 : f32
      %266 = vector.broadcast %cst_34 : f32 to vector<16x16xf32>
      %267 = arith.mulf %266, %264 : vector<16x16xf32>
      %268 = arith.maximumf %264, %267 : vector<16x16xf32>
      %269 = vector.broadcast %265 : f32 to vector<16x16xf32>
      %270 = arith.mulf %269, %268 : vector<16x16xf32>
      %271 = arith.addf %259, %270 : vector<16x16xf32>
      %272 = vector.extract_strided_slice %16 {offsets = [0, 21], sizes = [16, 1], strides = [1, 1]} : vector<16x32xf32> to vector<16x1xf32>
      %273 = vector.extract_strided_slice %18 {offsets = [21, 0], sizes = [1, 16], strides = [1, 1]} : vector<32x16xf32> to vector<1x16xf32>
      %274 = vector.broadcast %272 : vector<16x1xf32> to vector<16x16xf32>
      %275 = vector.broadcast %273 : vector<1x16xf32> to vector<16x16xf32>
      %276 = arith.addf %274, %275 : vector<16x16xf32>
      %c21 = arith.constant 21 : index
      %277 = memref.load %arg5[%c21] : memref<32xf32, #tpu.memory_space<smem>>
      %cst_35 = arith.constant 2.000000e-01 : f32
      %278 = vector.broadcast %cst_35 : f32 to vector<16x16xf32>
      %279 = arith.mulf %278, %276 : vector<16x16xf32>
      %280 = arith.maximumf %276, %279 : vector<16x16xf32>
      %281 = vector.broadcast %277 : f32 to vector<16x16xf32>
      %282 = arith.mulf %281, %280 : vector<16x16xf32>
      %283 = arith.addf %271, %282 : vector<16x16xf32>
      %284 = vector.extract_strided_slice %16 {offsets = [0, 22], sizes = [16, 1], strides = [1, 1]} : vector<16x32xf32> to vector<16x1xf32>
      %285 = vector.extract_strided_slice %18 {offsets = [22, 0], sizes = [1, 16], strides = [1, 1]} : vector<32x16xf32> to vector<1x16xf32>
      %286 = vector.broadcast %284 : vector<16x1xf32> to vector<16x16xf32>
      %287 = vector.broadcast %285 : vector<1x16xf32> to vector<16x16xf32>
      %288 = arith.addf %286, %287 : vector<16x16xf32>
      %c22 = arith.constant 22 : index
      %289 = memref.load %arg5[%c22] : memref<32xf32, #tpu.memory_space<smem>>
      %cst_36 = arith.constant 2.000000e-01 : f32
      %290 = vector.broadcast %cst_36 : f32 to vector<16x16xf32>
      %291 = arith.mulf %290, %288 : vector<16x16xf32>
      %292 = arith.maximumf %288, %291 : vector<16x16xf32>
      %293 = vector.broadcast %289 : f32 to vector<16x16xf32>
      %294 = arith.mulf %293, %292 : vector<16x16xf32>
      %295 = arith.addf %283, %294 : vector<16x16xf32>
      %296 = vector.extract_strided_slice %16 {offsets = [0, 23], sizes = [16, 1], strides = [1, 1]} : vector<16x32xf32> to vector<16x1xf32>
      %297 = vector.extract_strided_slice %18 {offsets = [23, 0], sizes = [1, 16], strides = [1, 1]} : vector<32x16xf32> to vector<1x16xf32>
      %298 = vector.broadcast %296 : vector<16x1xf32> to vector<16x16xf32>
      %299 = vector.broadcast %297 : vector<1x16xf32> to vector<16x16xf32>
      %300 = arith.addf %298, %299 : vector<16x16xf32>
      %c23 = arith.constant 23 : index
      %301 = memref.load %arg5[%c23] : memref<32xf32, #tpu.memory_space<smem>>
      %cst_37 = arith.constant 2.000000e-01 : f32
      %302 = vector.broadcast %cst_37 : f32 to vector<16x16xf32>
      %303 = arith.mulf %302, %300 : vector<16x16xf32>
      %304 = arith.maximumf %300, %303 : vector<16x16xf32>
      %305 = vector.broadcast %301 : f32 to vector<16x16xf32>
      %306 = arith.mulf %305, %304 : vector<16x16xf32>
      %307 = arith.addf %295, %306 : vector<16x16xf32>
      %308 = vector.extract_strided_slice %16 {offsets = [0, 24], sizes = [16, 1], strides = [1, 1]} : vector<16x32xf32> to vector<16x1xf32>
      %309 = vector.extract_strided_slice %18 {offsets = [24, 0], sizes = [1, 16], strides = [1, 1]} : vector<32x16xf32> to vector<1x16xf32>
      %310 = vector.broadcast %308 : vector<16x1xf32> to vector<16x16xf32>
      %311 = vector.broadcast %309 : vector<1x16xf32> to vector<16x16xf32>
      %312 = arith.addf %310, %311 : vector<16x16xf32>
      %c24 = arith.constant 24 : index
      %313 = memref.load %arg5[%c24] : memref<32xf32, #tpu.memory_space<smem>>
      %cst_38 = arith.constant 2.000000e-01 : f32
      %314 = vector.broadcast %cst_38 : f32 to vector<16x16xf32>
      %315 = arith.mulf %314, %312 : vector<16x16xf32>
      %316 = arith.maximumf %312, %315 : vector<16x16xf32>
      %317 = vector.broadcast %313 : f32 to vector<16x16xf32>
      %318 = arith.mulf %317, %316 : vector<16x16xf32>
      %319 = arith.addf %307, %318 : vector<16x16xf32>
      %320 = vector.extract_strided_slice %16 {offsets = [0, 25], sizes = [16, 1], strides = [1, 1]} : vector<16x32xf32> to vector<16x1xf32>
      %321 = vector.extract_strided_slice %18 {offsets = [25, 0], sizes = [1, 16], strides = [1, 1]} : vector<32x16xf32> to vector<1x16xf32>
      %322 = vector.broadcast %320 : vector<16x1xf32> to vector<16x16xf32>
      %323 = vector.broadcast %321 : vector<1x16xf32> to vector<16x16xf32>
      %324 = arith.addf %322, %323 : vector<16x16xf32>
      %c25 = arith.constant 25 : index
      %325 = memref.load %arg5[%c25] : memref<32xf32, #tpu.memory_space<smem>>
      %cst_39 = arith.constant 2.000000e-01 : f32
      %326 = vector.broadcast %cst_39 : f32 to vector<16x16xf32>
      %327 = arith.mulf %326, %324 : vector<16x16xf32>
      %328 = arith.maximumf %324, %327 : vector<16x16xf32>
      %329 = vector.broadcast %325 : f32 to vector<16x16xf32>
      %330 = arith.mulf %329, %328 : vector<16x16xf32>
      %331 = arith.addf %319, %330 : vector<16x16xf32>
      %332 = vector.extract_strided_slice %16 {offsets = [0, 26], sizes = [16, 1], strides = [1, 1]} : vector<16x32xf32> to vector<16x1xf32>
      %333 = vector.extract_strided_slice %18 {offsets = [26, 0], sizes = [1, 16], strides = [1, 1]} : vector<32x16xf32> to vector<1x16xf32>
      %334 = vector.broadcast %332 : vector<16x1xf32> to vector<16x16xf32>
      %335 = vector.broadcast %333 : vector<1x16xf32> to vector<16x16xf32>
      %336 = arith.addf %334, %335 : vector<16x16xf32>
      %c26 = arith.constant 26 : index
      %337 = memref.load %arg5[%c26] : memref<32xf32, #tpu.memory_space<smem>>
      %cst_40 = arith.constant 2.000000e-01 : f32
      %338 = vector.broadcast %cst_40 : f32 to vector<16x16xf32>
      %339 = arith.mulf %338, %336 : vector<16x16xf32>
      %340 = arith.maximumf %336, %339 : vector<16x16xf32>
      %341 = vector.broadcast %337 : f32 to vector<16x16xf32>
      %342 = arith.mulf %341, %340 : vector<16x16xf32>
      %343 = arith.addf %331, %342 : vector<16x16xf32>
      %344 = vector.extract_strided_slice %16 {offsets = [0, 27], sizes = [16, 1], strides = [1, 1]} : vector<16x32xf32> to vector<16x1xf32>
      %345 = vector.extract_strided_slice %18 {offsets = [27, 0], sizes = [1, 16], strides = [1, 1]} : vector<32x16xf32> to vector<1x16xf32>
      %346 = vector.broadcast %344 : vector<16x1xf32> to vector<16x16xf32>
      %347 = vector.broadcast %345 : vector<1x16xf32> to vector<16x16xf32>
      %348 = arith.addf %346, %347 : vector<16x16xf32>
      %c27 = arith.constant 27 : index
      %349 = memref.load %arg5[%c27] : memref<32xf32, #tpu.memory_space<smem>>
      %cst_41 = arith.constant 2.000000e-01 : f32
      %350 = vector.broadcast %cst_41 : f32 to vector<16x16xf32>
      %351 = arith.mulf %350, %348 : vector<16x16xf32>
      %352 = arith.maximumf %348, %351 : vector<16x16xf32>
      %353 = vector.broadcast %349 : f32 to vector<16x16xf32>
      %354 = arith.mulf %353, %352 : vector<16x16xf32>
      %355 = arith.addf %343, %354 : vector<16x16xf32>
      %356 = vector.extract_strided_slice %16 {offsets = [0, 28], sizes = [16, 1], strides = [1, 1]} : vector<16x32xf32> to vector<16x1xf32>
      %357 = vector.extract_strided_slice %18 {offsets = [28, 0], sizes = [1, 16], strides = [1, 1]} : vector<32x16xf32> to vector<1x16xf32>
      %358 = vector.broadcast %356 : vector<16x1xf32> to vector<16x16xf32>
      %359 = vector.broadcast %357 : vector<1x16xf32> to vector<16x16xf32>
      %360 = arith.addf %358, %359 : vector<16x16xf32>
      %c28 = arith.constant 28 : index
      %361 = memref.load %arg5[%c28] : memref<32xf32, #tpu.memory_space<smem>>
      %cst_42 = arith.constant 2.000000e-01 : f32
      %362 = vector.broadcast %cst_42 : f32 to vector<16x16xf32>
      %363 = arith.mulf %362, %360 : vector<16x16xf32>
      %364 = arith.maximumf %360, %363 : vector<16x16xf32>
      %365 = vector.broadcast %361 : f32 to vector<16x16xf32>
      %366 = arith.mulf %365, %364 : vector<16x16xf32>
      %367 = arith.addf %355, %366 : vector<16x16xf32>
      %368 = vector.extract_strided_slice %16 {offsets = [0, 29], sizes = [16, 1], strides = [1, 1]} : vector<16x32xf32> to vector<16x1xf32>
      %369 = vector.extract_strided_slice %18 {offsets = [29, 0], sizes = [1, 16], strides = [1, 1]} : vector<32x16xf32> to vector<1x16xf32>
      %370 = vector.broadcast %368 : vector<16x1xf32> to vector<16x16xf32>
      %371 = vector.broadcast %369 : vector<1x16xf32> to vector<16x16xf32>
      %372 = arith.addf %370, %371 : vector<16x16xf32>
      %c29 = arith.constant 29 : index
      %373 = memref.load %arg5[%c29] : memref<32xf32, #tpu.memory_space<smem>>
      %cst_43 = arith.constant 2.000000e-01 : f32
      %374 = vector.broadcast %cst_43 : f32 to vector<16x16xf32>
      %375 = arith.mulf %374, %372 : vector<16x16xf32>
      %376 = arith.maximumf %372, %375 : vector<16x16xf32>
      %377 = vector.broadcast %373 : f32 to vector<16x16xf32>
      %378 = arith.mulf %377, %376 : vector<16x16xf32>
      %379 = arith.addf %367, %378 : vector<16x16xf32>
      %380 = vector.extract_strided_slice %16 {offsets = [0, 30], sizes = [16, 1], strides = [1, 1]} : vector<16x32xf32> to vector<16x1xf32>
      %381 = vector.extract_strided_slice %18 {offsets = [30, 0], sizes = [1, 16], strides = [1, 1]} : vector<32x16xf32> to vector<1x16xf32>
      %382 = vector.broadcast %380 : vector<16x1xf32> to vector<16x16xf32>
      %383 = vector.broadcast %381 : vector<1x16xf32> to vector<16x16xf32>
      %384 = arith.addf %382, %383 : vector<16x16xf32>
      %c30 = arith.constant 30 : index
      %385 = memref.load %arg5[%c30] : memref<32xf32, #tpu.memory_space<smem>>
      %cst_44 = arith.constant 2.000000e-01 : f32
      %386 = vector.broadcast %cst_44 : f32 to vector<16x16xf32>
      %387 = arith.mulf %386, %384 : vector<16x16xf32>
      %388 = arith.maximumf %384, %387 : vector<16x16xf32>
      %389 = vector.broadcast %385 : f32 to vector<16x16xf32>
      %390 = arith.mulf %389, %388 : vector<16x16xf32>
      %391 = arith.addf %379, %390 : vector<16x16xf32>
      %392 = vector.extract_strided_slice %16 {offsets = [0, 31], sizes = [16, 1], strides = [1, 1]} : vector<16x32xf32> to vector<16x1xf32>
      %393 = vector.extract_strided_slice %18 {offsets = [31, 0], sizes = [1, 16], strides = [1, 1]} : vector<32x16xf32> to vector<1x16xf32>
      %394 = vector.broadcast %392 : vector<16x1xf32> to vector<16x16xf32>
      %395 = vector.broadcast %393 : vector<1x16xf32> to vector<16x16xf32>
      %396 = arith.addf %394, %395 : vector<16x16xf32>
      %c31 = arith.constant 31 : index
      %397 = memref.load %arg5[%c31] : memref<32xf32, #tpu.memory_space<smem>>
      %cst_45 = arith.constant 2.000000e-01 : f32
      %398 = vector.broadcast %cst_45 : f32 to vector<16x16xf32>
      %399 = arith.mulf %398, %396 : vector<16x16xf32>
      %400 = arith.maximumf %396, %399 : vector<16x16xf32>
      %401 = vector.broadcast %397 : f32 to vector<16x16xf32>
      %402 = arith.mulf %401, %400 : vector<16x16xf32>
      %403 = arith.addf %391, %402 : vector<16x16xf32>
      %cst_46 = arith.constant -1.000000e+30 : f32
      %404 = vector.broadcast %cst_46 : f32 to vector<16x16xf32>
      %405 = arith.select %14, %403, %404 : vector<16x16xi1>, vector<16x16xf32>
      %c0_47 = arith.constant 0 : index
      %c0_48 = arith.constant 0 : index
      %c0_49 = arith.constant 0 : index
      %406 = vector.load %arg8[%c0_47, %c0_48, %c0_49] : memref<1x16x1xf32, #tpu.memory_space<vmem>>, vector<1x16x1xf32>
      %407 = vector.shape_cast %406 : vector<1x16x1xf32> to vector<16x1xf32>
      %cst_50 = arith.constant dense<0xFF800000> : vector<16xf32>
      %408 = vector.multi_reduction <maximumf>, %405, %cst_50 [1] : vector<16x16xf32> to vector<16xf32>
      %409 = vector.shape_cast %408 : vector<16xf32> to vector<16x1xf32>
      %410 = arith.maximumf %407, %409 : vector<16x1xf32>
      %411 = arith.subf %407, %410 : vector<16x1xf32>
      %412 = math.exp %411 : vector<16x1xf32>
      %413 = vector.broadcast %410 : vector<16x1xf32> to vector<16x16xf32>
      %414 = arith.subf %405, %413 : vector<16x16xf32>
      %415 = math.exp %414 : vector<16x16xf32>
      %cst_51 = arith.constant 0.000000e+00 : f32
      %416 = vector.broadcast %cst_51 : f32 to vector<16x16xf32>
      %417 = arith.select %14, %415, %416 : vector<16x16xi1>, vector<16x16xf32>
      %c0_52 = arith.constant 0 : index
      %c0_53 = arith.constant 0 : index
      %c0_54 = arith.constant 0 : index
      %418 = vector.load %arg9[%c0_52, %c0_53, %c0_54] : memref<1x16x1xf32, #tpu.memory_space<vmem>>, vector<1x16x1xf32>
      %419 = vector.shape_cast %418 : vector<1x16x1xf32> to vector<16x1xf32>
      %420 = arith.mulf %412, %419 : vector<16x1xf32>
      %cst_55 = arith.constant dense<0.000000e+00> : vector<16xf32>
      %421 = vector.multi_reduction <add>, %417, %cst_55 [1] : vector<16x16xf32> to vector<16xf32>
      %422 = vector.shape_cast %421 : vector<16xf32> to vector<16x1xf32>
      %423 = arith.addf %420, %422 : vector<16x1xf32>
      %c0_56 = arith.constant 0 : index
      %c0_57 = arith.constant 0 : index
      %c0_58 = arith.constant 0 : index
      %424 = vector.load %arg9[%c0_56, %c0_57, %c0_58] : memref<1x16x1xf32, #tpu.memory_space<vmem>>, vector<1x16x1xf32>
      %425 = vector.shape_cast %424 : vector<1x16x1xf32> to vector<16x1xf32>
      %426 = vector.shape_cast %423 : vector<16x1xf32> to vector<1x16x1xf32>
      tpu.vector_store %arg9[%c0_56, %c0_57, %c0_58], %426 {strides = array<i32>} : memref<1x16x1xf32, #tpu.memory_space<vmem>>, vector<1x16x1xf32>,
      %c0_59 = arith.constant 0 : index
      %c0_60 = arith.constant 0 : index
      %c0_61 = arith.constant 0 : index
      %427 = vector.load %arg10[%c0_59, %c0_60, %c0_61] : memref<1x16x32xf32, #tpu.memory_space<vmem>>, vector<1x16x32xf32>
      %428 = vector.shape_cast %427 : vector<1x16x32xf32> to vector<16x32xf32>
      %429 = vector.broadcast %412 : vector<16x1xf32> to vector<16x32xf32>
      %430 = arith.mulf %429, %428 : vector<16x32xf32>
      %cst_62 = arith.constant dense<0.000000e+00> : vector<16x32xf32>
      %431 = tpu.matmul %417, %18, %cst_62 {dimension_numbers = #tpu.dot_dimension_numbers<[1], [1], [0], [0], [0, 0, 1, 0], [], []>} : vector<16x16xf32>, vector<32x16xf32>, vector<16x32xf32> -> vector<16x32xf32>
      %432 = arith.addf %430, %431 : vector<16x32xf32>
      %c0_63 = arith.constant 0 : index
      %c0_64 = arith.constant 0 : index
      %c0_65 = arith.constant 0 : index
      %433 = vector.load %arg10[%c0_63, %c0_64, %c0_65] : memref<1x16x32xf32, #tpu.memory_space<vmem>>, vector<1x16x32xf32>
      %434 = vector.shape_cast %433 : vector<1x16x32xf32> to vector<16x32xf32>
      %435 = vector.shape_cast %432 : vector<16x32xf32> to vector<1x16x32xf32>
      tpu.vector_store %arg10[%c0_63, %c0_64, %c0_65], %435 {strides = array<i32>} : memref<1x16x32xf32, #tpu.memory_space<vmem>>, vector<1x16x32xf32>,
      %c0_66 = arith.constant 0 : index
      %c0_67 = arith.constant 0 : index
      %c0_68 = arith.constant 0 : index
      %436 = vector.load %arg8[%c0_66, %c0_67, %c0_68] : memref<1x16x1xf32, #tpu.memory_space<vmem>>, vector<1x16x1xf32>
      %437 = vector.shape_cast %436 : vector<1x16x1xf32> to vector<16x1xf32>
      %438 = vector.shape_cast %410 : vector<16x1xf32> to vector<1x16x1xf32>
      tpu.vector_store %arg8[%c0_66, %c0_67, %c0_68], %438 {strides = array<i32>} : memref<1x16x1xf32, #tpu.memory_space<vmem>>, vector<1x16x1xf32>,
    } else {
    }
    %c0_i32_3 = arith.constant 0 : i32
    %9 = arith.cmpi eq, %arg1, %c0_i32_3 : i32
    %10 = arith.extui %9 : i1 to i32
    %c0_i32_4 = arith.constant 0 : i32
    %11 = arith.cmpi ne, %10, %c0_i32_4 : i32
    scf.if %11 {
      %c0 = arith.constant 0 : index
      %c0_5 = arith.constant 0 : index
      %c0_6 = arith.constant 0 : index
      %12 = vector.load %arg9[%c0, %c0_5, %c0_6] : memref<1x16x1xf32, #tpu.memory_space<vmem>>, vector<1x16x1xf32>
      %cst = arith.constant 9.99999996E-13 : f32
      %13 = vector.broadcast %cst : f32 to vector<1x16x1xf32>
      %14 = arith.maximumf %12, %13 : vector<1x16x1xf32>
      %15 = tpu.reciprocal %14 {approx = true} : vector<1x16x1xf32> -> vector<1x16x1xf32>
      %c0_7 = arith.constant 0 : index
      %c0_8 = arith.constant 0 : index
      %c0_9 = arith.constant 0 : index
      %16 = vector.load %arg10[%c0_7, %c0_8, %c0_9] : memref<1x16x32xf32, #tpu.memory_space<vmem>>, vector<1x16x32xf32>
      %17 = vector.broadcast %15 : vector<1x16x1xf32> to vector<1x16x32xf32>
      %18 = arith.mulf %16, %17 : vector<1x16x32xf32>
      %c0_10 = arith.constant 0 : index
      %c0_11 = arith.constant 0 : index
      %c0_12 = arith.constant 0 : index
      %19 = vector.load %arg7[%c0_10, %c0_11, %c0_12] : memref<1x16x32xf32, #tpu.memory_space<vmem>>, vector<1x16x32xf32>
      tpu.vector_store %arg7[%c0_10, %c0_11, %c0_12], %18 {strides = array<i32>} : memref<1x16x32xf32, #tpu.memory_space<vmem>>, vector<1x16x32xf32>,
    } else {
    }
    return
  }
  func.func @transform_0(%arg0: i32, %arg1: i32, %arg2: memref<1x1xi32, #tpu.memory_space<smem>>) -> (i32, i32, i32) {
    %c0_i32 = arith.constant 0 : i32
    %c0_i32_0 = arith.constant 0 : i32
    %c0_i32_1 = arith.constant 0 : i32
    return %c0_i32, %arg0, %c0_i32_0 : i32, i32, i32
  }
  func.func @transform_1(%arg0: i32, %arg1: i32, %arg2: memref<1x1xi32, #tpu.memory_space<smem>>) -> (i32, i32, i32) {
    %c0_i32 = arith.constant 0 : i32
    %c0_i32_0 = arith.constant 0 : i32
    %c0_i32_1 = arith.constant 0 : i32
    return %c0_i32, %c0_i32_0, %arg1 : i32, i32, i32
  }
  func.func @transform_2(%arg0: i32, %arg1: i32, %arg2: memref<1x1xi32, #tpu.memory_space<smem>>) -> i32 {
    %c0_i32 = arith.constant 0 : i32
    %c0_i32_0 = arith.constant 0 : i32
    return %c0_i32 : i32
  }
  func.func @transform_3(%arg0: i32, %arg1: i32, %arg2: memref<1x1xi32, #tpu.memory_space<smem>>) -> (i32, i32) {
    %c0_i32 = arith.constant 0 : i32
    return %arg0, %arg1 : i32, i32
  }
  func.func @transform_4(%arg0: i32, %arg1: i32, %arg2: memref<1x1xi32, #tpu.memory_space<smem>>) -> (i32, i32, i32) {
    %c0_i32 = arith.constant 0 : i32
    %c0_i32_0 = arith.constant 0 : i32
    %c0_i32_1 = arith.constant 0 : i32
    return %c0_i32, %arg0, %c0_i32_0 : i32, i32, i32
  }
}

module attributes {stable_mosaic.version = 11 : i64} {
  func.func @_adj_mm_relu_kernel(%arg0: i32, %arg1: i32, %arg2: memref<16x16xbf16, #tpu.memory_space<vmem>>, %arg3: memref<2x16x16xbf16, #tpu.memory_space<vmem>>, %arg4: memref<16x16xf32, #tpu.memory_space<vmem>>, %arg5: memref<2x16x16xf32, #tpu.memory_space<vmem>>, %arg6: memref<2x16x16xf32, #tpu.memory_space<vmem>>) attributes {dimension_semantics = [#tpu.dimension_semantics<parallel>, #tpu.dimension_semantics<arbitrary>], iteration_bounds = array<i64: 1, 1>, scalar_prefetch = 0 : i64, scratch_operands = 1 : i64, tpu.core_type = #tpu.core_type<tc>, window_params = [{transform_indices = @transform_0, window_bounds = array<i64: 16, 16>}, {transform_indices = @transform_1, window_bounds = array<i64: 2, 16, 16>}, {transform_indices = @transform_2, window_bounds = array<i64: 16, 16>}, {transform_indices = @transform_3, window_bounds = array<i64: 2, 16, 16>}]} {
    %c0_i32 = arith.constant 0 : i32
    %0 = arith.cmpi eq, %arg1, %c0_i32 : i32
    %1 = arith.extui %0 : i1 to i32
    %c0_i32_0 = arith.constant 0 : i32
    %2 = arith.cmpi ne, %1, %c0_i32_0 : i32
    scf.if %2 {
      %cst_22 = arith.constant 0.000000e+00 : f32
      %25 = vector.broadcast %cst_22 : f32 to vector<2x16x16xf32>
      %c0_23 = arith.constant 0 : index
      %c0_24 = arith.constant 0 : index
      %c0_25 = arith.constant 0 : index
      %26 = vector.load %arg6[%c0_23, %c0_24, %c0_25] : memref<2x16x16xf32, #tpu.memory_space<vmem>>, vector<2x16x16xf32>
      tpu.vector_store %arg6[%c0_23, %c0_24, %c0_25], %25 {strides = array<i32>} : memref<2x16x16xf32, #tpu.memory_space<vmem>>, vector<2x16x16xf32>,
    } else {
    }
    %c0 = arith.constant 0 : index
    %c0_1 = arith.constant 0 : index
    %3 = vector.load %arg2[%c0, %c0_1] : memref<16x16xbf16, #tpu.memory_space<vmem>>, vector<16x16xbf16>
    %c0_2 = arith.constant 0 : index
    %c0_3 = arith.constant 0 : index
    %c0_4 = arith.constant 0 : index
    %4 = vector.load %arg6[%c0_2, %c0_3, %c0_4] : memref<2x16x16xf32, #tpu.memory_space<vmem>>, vector<1x16x16xf32>
    %5 = vector.shape_cast %4 : vector<1x16x16xf32> to vector<16x16xf32>
    %c0_5 = arith.constant 0 : index
    %c0_6 = arith.constant 0 : index
    %c0_7 = arith.constant 0 : index
    %6 = vector.load %arg3[%c0_5, %c0_6, %c0_7] : memref<2x16x16xbf16, #tpu.memory_space<vmem>>, vector<1x16x16xbf16>
    %7 = vector.shape_cast %6 : vector<1x16x16xbf16> to vector<16x16xbf16>
    %cst = arith.constant dense<0.000000e+00> : vector<16x16xf32>
    %8 = tpu.matmul %3, %7, %cst {dimension_numbers = #tpu.dot_dimension_numbers<[1], [0], [0], [1], [0, 0, 1, 1], [], []>} : vector<16x16xbf16>, vector<16x16xbf16>, vector<16x16xf32> -> vector<16x16xf32>
    %9 = arith.addf %5, %8 : vector<16x16xf32>
    %c0_8 = arith.constant 0 : index
    %c0_9 = arith.constant 0 : index
    %c0_10 = arith.constant 0 : index
    %10 = vector.load %arg6[%c0_8, %c0_9, %c0_10] : memref<2x16x16xf32, #tpu.memory_space<vmem>>, vector<1x16x16xf32>
    %11 = vector.shape_cast %10 : vector<1x16x16xf32> to vector<16x16xf32>
    %12 = vector.shape_cast %9 : vector<16x16xf32> to vector<1x16x16xf32>
    tpu.vector_store %arg6[%c0_8, %c0_9, %c0_10], %12 {strides = array<i32>} : memref<2x16x16xf32, #tpu.memory_space<vmem>>, vector<1x16x16xf32>,
    %c1 = arith.constant 1 : index
    %c0_11 = arith.constant 0 : index
    %c0_12 = arith.constant 0 : index
    %13 = vector.load %arg6[%c1, %c0_11, %c0_12] : memref<2x16x16xf32, #tpu.memory_space<vmem>>, vector<1x16x16xf32>
    %14 = vector.shape_cast %13 : vector<1x16x16xf32> to vector<16x16xf32>
    %c1_13 = arith.constant 1 : index
    %c0_14 = arith.constant 0 : index
    %c0_15 = arith.constant 0 : index
    %15 = vector.load %arg3[%c1_13, %c0_14, %c0_15] : memref<2x16x16xbf16, #tpu.memory_space<vmem>>, vector<1x16x16xbf16>
    %16 = vector.shape_cast %15 : vector<1x16x16xbf16> to vector<16x16xbf16>
    %cst_16 = arith.constant dense<0.000000e+00> : vector<16x16xf32>
    %17 = tpu.matmul %3, %16, %cst_16 {dimension_numbers = #tpu.dot_dimension_numbers<[1], [0], [0], [1], [0, 0, 1, 1], [], []>} : vector<16x16xbf16>, vector<16x16xbf16>, vector<16x16xf32> -> vector<16x16xf32>
    %18 = arith.addf %14, %17 : vector<16x16xf32>
    %c1_17 = arith.constant 1 : index
    %c0_18 = arith.constant 0 : index
    %c0_19 = arith.constant 0 : index
    %19 = vector.load %arg6[%c1_17, %c0_18, %c0_19] : memref<2x16x16xf32, #tpu.memory_space<vmem>>, vector<1x16x16xf32>
    %20 = vector.shape_cast %19 : vector<1x16x16xf32> to vector<16x16xf32>
    %21 = vector.shape_cast %18 : vector<16x16xf32> to vector<1x16x16xf32>
    tpu.vector_store %arg6[%c1_17, %c0_18, %c0_19], %21 {strides = array<i32>} : memref<2x16x16xf32, #tpu.memory_space<vmem>>, vector<1x16x16xf32>,
    %c0_i32_20 = arith.constant 0 : i32
    %22 = arith.cmpi eq, %arg1, %c0_i32_20 : i32
    %23 = arith.extui %22 : i1 to i32
    %c0_i32_21 = arith.constant 0 : i32
    %24 = arith.cmpi ne, %23, %c0_i32_21 : i32
    scf.if %24 {
      %c0_22 = arith.constant 0 : index
      %c0_23 = arith.constant 0 : index
      %c0_24 = arith.constant 0 : index
      %25 = vector.load %arg6[%c0_22, %c0_23, %c0_24] : memref<2x16x16xf32, #tpu.memory_space<vmem>>, vector<2x16x16xf32>
      %26 = vector.extract_strided_slice %25 {offsets = [0, 0, 0], sizes = [1, 16, 16], strides = [1, 1, 1]} : vector<2x16x16xf32> to vector<1x16x16xf32>
      %27 = vector.shape_cast %26 : vector<1x16x16xf32> to vector<16x16xf32>
      %c0_25 = arith.constant 0 : index
      %c0_26 = arith.constant 0 : index
      %28 = vector.load %arg4[%c0_25, %c0_26] : memref<16x16xf32, #tpu.memory_space<vmem>>, vector<16x16xf32>
      tpu.vector_store %arg4[%c0_25, %c0_26], %27 {strides = array<i32>} : memref<16x16xf32, #tpu.memory_space<vmem>>, vector<16x16xf32>,
      %cst_27 = arith.constant 0.000000e+00 : f32
      %29 = vector.broadcast %cst_27 : f32 to vector<2x16x16xf32>
      %30 = arith.maximumf %25, %29 : vector<2x16x16xf32>
      %c0_28 = arith.constant 0 : index
      %c0_29 = arith.constant 0 : index
      %c0_30 = arith.constant 0 : index
      %31 = vector.load %arg5[%c0_28, %c0_29, %c0_30] : memref<2x16x16xf32, #tpu.memory_space<vmem>>, vector<2x16x16xf32>
      tpu.vector_store %arg5[%c0_28, %c0_29, %c0_30], %30 {strides = array<i32>} : memref<2x16x16xf32, #tpu.memory_space<vmem>>, vector<2x16x16xf32>,
    } else {
    }
    return
  }
  func.func @transform_0(%arg0: i32, %arg1: i32) -> (i32, i32) {
    %c0_i32 = arith.constant 0 : i32
    return %arg0, %arg1 : i32, i32
  }
  func.func @transform_1(%arg0: i32, %arg1: i32) -> (i32, i32, i32) {
    %c0_i32 = arith.constant 0 : i32
    %c0_i32_0 = arith.constant 0 : i32
    %c0_i32_1 = arith.constant 0 : i32
    return %c0_i32, %arg1, %c0_i32_0 : i32, i32, i32
  }
  func.func @transform_2(%arg0: i32, %arg1: i32) -> (i32, i32) {
    %c0_i32 = arith.constant 0 : i32
    %c0_i32_0 = arith.constant 0 : i32
    return %arg0, %c0_i32 : i32, i32
  }
  func.func @transform_3(%arg0: i32, %arg1: i32) -> (i32, i32, i32) {
    %c0_i32 = arith.constant 0 : i32
    %c0_i32_0 = arith.constant 0 : i32
    %c0_i32_1 = arith.constant 0 : i32
    return %c0_i32, %arg0, %c0_i32_0 : i32, i32, i32
  }
}

module attributes {stable_mosaic.version = 11 : i64} {
  func.func @_gatv2_attn_kernel(%arg0: i32, %arg1: i32, %arg2: memref<1x1xi32, #tpu.memory_space<smem>>, %arg3: memref<2x16x16xf32, #tpu.memory_space<vmem>>, %arg4: memref<2x16x16xf32, #tpu.memory_space<vmem>>, %arg5: memref<16xf32, #tpu.memory_space<smem>>, %arg6: memref<16x16xbf16, #tpu.memory_space<vmem>>, %arg7: memref<2x16x16xf32, #tpu.memory_space<vmem>>, %arg8: memref<2x16x1xf32, #tpu.memory_space<vmem>>, %arg9: memref<2x16x1xf32, #tpu.memory_space<vmem>>, %arg10: memref<2x16x16xf32, #tpu.memory_space<vmem>>) attributes {dimension_semantics = [#tpu.dimension_semantics<parallel>, #tpu.dimension_semantics<arbitrary>], iteration_bounds = array<i64: 1, 1>, scalar_prefetch = 1 : i64, scratch_operands = 3 : i64, tpu.core_type = #tpu.core_type<tc>, window_params = [{transform_indices = @transform_0, window_bounds = array<i64: 2, 16, 16>}, {transform_indices = @transform_1, window_bounds = array<i64: 2, 16, 16>}, {transform_indices = @transform_2, window_bounds = array<i64: 16>}, {transform_indices = @transform_3, window_bounds = array<i64: 16, 16>}, {transform_indices = @transform_4, window_bounds = array<i64: 2, 16, 16>}]} {
    %c0_i32 = arith.constant 0 : i32
    %0 = arith.cmpi eq, %arg1, %c0_i32 : i32
    %1 = arith.extui %0 : i1 to i32
    %c0_i32_0 = arith.constant 0 : i32
    %2 = arith.cmpi ne, %1, %c0_i32_0 : i32
    scf.if %2 {
      %cst = arith.constant -1.000000e+30 : f32
      %12 = vector.broadcast %cst : f32 to vector<2x16x1xf32>
      %c0 = arith.constant 0 : index
      %c0_5 = arith.constant 0 : index
      %c0_6 = arith.constant 0 : index
      %13 = vector.load %arg8[%c0, %c0_5, %c0_6] : memref<2x16x1xf32, #tpu.memory_space<vmem>>, vector<2x16x1xf32>
      tpu.vector_store %arg8[%c0, %c0_5, %c0_6], %12 {strides = array<i32>} : memref<2x16x1xf32, #tpu.memory_space<vmem>>, vector<2x16x1xf32>,
      %cst_7 = arith.constant 0.000000e+00 : f32
      %14 = vector.broadcast %cst_7 : f32 to vector<2x16x1xf32>
      %c0_8 = arith.constant 0 : index
      %c0_9 = arith.constant 0 : index
      %c0_10 = arith.constant 0 : index
      %15 = vector.load %arg9[%c0_8, %c0_9, %c0_10] : memref<2x16x1xf32, #tpu.memory_space<vmem>>, vector<2x16x1xf32>
      tpu.vector_store %arg9[%c0_8, %c0_9, %c0_10], %14 {strides = array<i32>} : memref<2x16x1xf32, #tpu.memory_space<vmem>>, vector<2x16x1xf32>,
      %cst_11 = arith.constant 0.000000e+00 : f32
      %16 = vector.broadcast %cst_11 : f32 to vector<2x16x16xf32>
      %c0_12 = arith.constant 0 : index
      %c0_13 = arith.constant 0 : index
      %c0_14 = arith.constant 0 : index
      %17 = vector.load %arg10[%c0_12, %c0_13, %c0_14] : memref<2x16x16xf32, #tpu.memory_space<vmem>>, vector<2x16x16xf32>
      tpu.vector_store %arg10[%c0_12, %c0_13, %c0_14], %16 {strides = array<i32>} : memref<2x16x16xf32, #tpu.memory_space<vmem>>, vector<2x16x16xf32>,
    } else {
    }
    %3 = arith.index_cast %arg0 : i32 to index
    %4 = arith.index_cast %arg1 : i32 to index
    %5 = memref.load %arg2[%3, %4] : memref<1x1xi32, #tpu.memory_space<smem>>
    %c0_i32_1 = arith.constant 0 : i32
    %6 = arith.cmpi sgt, %5, %c0_i32_1 : i32
    %7 = arith.extui %6 : i1 to i32
    %c0_i32_2 = arith.constant 0 : i32
    %8 = arith.cmpi ne, %7, %c0_i32_2 : i32
    scf.if %8 {
      %c0 = arith.constant 0 : index
      %c0_5 = arith.constant 0 : index
      %12 = vector.load %arg6[%c0, %c0_5] : memref<16x16xbf16, #tpu.memory_space<vmem>>, vector<16x16xbf16>
      %cst = arith.constant 0.000000e+00 : bf16
      %13 = vector.broadcast %cst : bf16 to vector<16x16xbf16>
      %14 = arith.cmpf ogt, %12, %13 : vector<16x16xbf16>
      %c0_6 = arith.constant 0 : index
      %c0_7 = arith.constant 0 : index
      %c0_8 = arith.constant 0 : index
      %15 = vector.load %arg3[%c0_6, %c0_7, %c0_8] : memref<2x16x16xf32, #tpu.memory_space<vmem>>, vector<1x16x16xf32>
      %16 = vector.shape_cast %15 : vector<1x16x16xf32> to vector<16x16xf32>
      %c0_9 = arith.constant 0 : index
      %c0_10 = arith.constant 0 : index
      %c0_11 = arith.constant 0 : index
      %17 = vector.load %arg4[%c0_9, %c0_10, %c0_11] : memref<2x16x16xf32, #tpu.memory_space<vmem>>, vector<1x16x16xf32>
      %18 = vector.shape_cast %17 : vector<1x16x16xf32> to vector<16x16xf32>
      %cst_12 = arith.constant 0.000000e+00 : f32
      %19 = vector.broadcast %cst_12 : f32 to vector<16x16xf32>
      %20 = vector.extract_strided_slice %16 {offsets = [0, 0], sizes = [16, 1], strides = [1, 1]} : vector<16x16xf32> to vector<16x1xf32>
      %21 = vector.extract_strided_slice %18 {offsets = [0, 0], sizes = [1, 16], strides = [1, 1]} : vector<16x16xf32> to vector<1x16xf32>
      %22 = vector.broadcast %20 : vector<16x1xf32> to vector<16x16xf32>
      %23 = vector.broadcast %21 : vector<1x16xf32> to vector<16x16xf32>
      %24 = arith.addf %22, %23 : vector<16x16xf32>
      %c0_13 = arith.constant 0 : index
      %25 = memref.load %arg5[%c0_13] : memref<16xf32, #tpu.memory_space<smem>>
      %cst_14 = arith.constant 2.000000e-01 : f32
      %26 = vector.broadcast %cst_14 : f32 to vector<16x16xf32>
      %27 = arith.mulf %26, %24 : vector<16x16xf32>
      %28 = arith.maximumf %24, %27 : vector<16x16xf32>
      %29 = vector.broadcast %25 : f32 to vector<16x16xf32>
      %30 = arith.mulf %29, %28 : vector<16x16xf32>
      %31 = arith.addf %19, %30 : vector<16x16xf32>
      %32 = vector.extract_strided_slice %16 {offsets = [0, 1], sizes = [16, 1], strides = [1, 1]} : vector<16x16xf32> to vector<16x1xf32>
      %33 = vector.extract_strided_slice %18 {offsets = [1, 0], sizes = [1, 16], strides = [1, 1]} : vector<16x16xf32> to vector<1x16xf32>
      %34 = vector.broadcast %32 : vector<16x1xf32> to vector<16x16xf32>
      %35 = vector.broadcast %33 : vector<1x16xf32> to vector<16x16xf32>
      %36 = arith.addf %34, %35 : vector<16x16xf32>
      %c1 = arith.constant 1 : index
      %37 = memref.load %arg5[%c1] : memref<16xf32, #tpu.memory_space<smem>>
      %cst_15 = arith.constant 2.000000e-01 : f32
      %38 = vector.broadcast %cst_15 : f32 to vector<16x16xf32>
      %39 = arith.mulf %38, %36 : vector<16x16xf32>
      %40 = arith.maximumf %36, %39 : vector<16x16xf32>
      %41 = vector.broadcast %37 : f32 to vector<16x16xf32>
      %42 = arith.mulf %41, %40 : vector<16x16xf32>
      %43 = arith.addf %31, %42 : vector<16x16xf32>
      %44 = vector.extract_strided_slice %16 {offsets = [0, 2], sizes = [16, 1], strides = [1, 1]} : vector<16x16xf32> to vector<16x1xf32>
      %45 = vector.extract_strided_slice %18 {offsets = [2, 0], sizes = [1, 16], strides = [1, 1]} : vector<16x16xf32> to vector<1x16xf32>
      %46 = vector.broadcast %44 : vector<16x1xf32> to vector<16x16xf32>
      %47 = vector.broadcast %45 : vector<1x16xf32> to vector<16x16xf32>
      %48 = arith.addf %46, %47 : vector<16x16xf32>
      %c2 = arith.constant 2 : index
      %49 = memref.load %arg5[%c2] : memref<16xf32, #tpu.memory_space<smem>>
      %cst_16 = arith.constant 2.000000e-01 : f32
      %50 = vector.broadcast %cst_16 : f32 to vector<16x16xf32>
      %51 = arith.mulf %50, %48 : vector<16x16xf32>
      %52 = arith.maximumf %48, %51 : vector<16x16xf32>
      %53 = vector.broadcast %49 : f32 to vector<16x16xf32>
      %54 = arith.mulf %53, %52 : vector<16x16xf32>
      %55 = arith.addf %43, %54 : vector<16x16xf32>
      %56 = vector.extract_strided_slice %16 {offsets = [0, 3], sizes = [16, 1], strides = [1, 1]} : vector<16x16xf32> to vector<16x1xf32>
      %57 = vector.extract_strided_slice %18 {offsets = [3, 0], sizes = [1, 16], strides = [1, 1]} : vector<16x16xf32> to vector<1x16xf32>
      %58 = vector.broadcast %56 : vector<16x1xf32> to vector<16x16xf32>
      %59 = vector.broadcast %57 : vector<1x16xf32> to vector<16x16xf32>
      %60 = arith.addf %58, %59 : vector<16x16xf32>
      %c3 = arith.constant 3 : index
      %61 = memref.load %arg5[%c3] : memref<16xf32, #tpu.memory_space<smem>>
      %cst_17 = arith.constant 2.000000e-01 : f32
      %62 = vector.broadcast %cst_17 : f32 to vector<16x16xf32>
      %63 = arith.mulf %62, %60 : vector<16x16xf32>
      %64 = arith.maximumf %60, %63 : vector<16x16xf32>
      %65 = vector.broadcast %61 : f32 to vector<16x16xf32>
      %66 = arith.mulf %65, %64 : vector<16x16xf32>
      %67 = arith.addf %55, %66 : vector<16x16xf32>
      %68 = vector.extract_strided_slice %16 {offsets = [0, 4], sizes = [16, 1], strides = [1, 1]} : vector<16x16xf32> to vector<16x1xf32>
      %69 = vector.extract_strided_slice %18 {offsets = [4, 0], sizes = [1, 16], strides = [1, 1]} : vector<16x16xf32> to vector<1x16xf32>
      %70 = vector.broadcast %68 : vector<16x1xf32> to vector<16x16xf32>
      %71 = vector.broadcast %69 : vector<1x16xf32> to vector<16x16xf32>
      %72 = arith.addf %70, %71 : vector<16x16xf32>
      %c4 = arith.constant 4 : index
      %73 = memref.load %arg5[%c4] : memref<16xf32, #tpu.memory_space<smem>>
      %cst_18 = arith.constant 2.000000e-01 : f32
      %74 = vector.broadcast %cst_18 : f32 to vector<16x16xf32>
      %75 = arith.mulf %74, %72 : vector<16x16xf32>
      %76 = arith.maximumf %72, %75 : vector<16x16xf32>
      %77 = vector.broadcast %73 : f32 to vector<16x16xf32>
      %78 = arith.mulf %77, %76 : vector<16x16xf32>
      %79 = arith.addf %67, %78 : vector<16x16xf32>
      %80 = vector.extract_strided_slice %16 {offsets = [0, 5], sizes = [16, 1], strides = [1, 1]} : vector<16x16xf32> to vector<16x1xf32>
      %81 = vector.extract_strided_slice %18 {offsets = [5, 0], sizes = [1, 16], strides = [1, 1]} : vector<16x16xf32> to vector<1x16xf32>
      %82 = vector.broadcast %80 : vector<16x1xf32> to vector<16x16xf32>
      %83 = vector.broadcast %81 : vector<1x16xf32> to vector<16x16xf32>
      %84 = arith.addf %82, %83 : vector<16x16xf32>
      %c5 = arith.constant 5 : index
      %85 = memref.load %arg5[%c5] : memref<16xf32, #tpu.memory_space<smem>>
      %cst_19 = arith.constant 2.000000e-01 : f32
      %86 = vector.broadcast %cst_19 : f32 to vector<16x16xf32>
      %87 = arith.mulf %86, %84 : vector<16x16xf32>
      %88 = arith.maximumf %84, %87 : vector<16x16xf32>
      %89 = vector.broadcast %85 : f32 to vector<16x16xf32>
      %90 = arith.mulf %89, %88 : vector<16x16xf32>
      %91 = arith.addf %79, %90 : vector<16x16xf32>
      %92 = vector.extract_strided_slice %16 {offsets = [0, 6], sizes = [16, 1], strides = [1, 1]} : vector<16x16xf32> to vector<16x1xf32>
      %93 = vector.extract_strided_slice %18 {offsets = [6, 0], sizes = [1, 16], strides = [1, 1]} : vector<16x16xf32> to vector<1x16xf32>
      %94 = vector.broadcast %92 : vector<16x1xf32> to vector<16x16xf32>
      %95 = vector.broadcast %93 : vector<1x16xf32> to vector<16x16xf32>
      %96 = arith.addf %94, %95 : vector<16x16xf32>
      %c6 = arith.constant 6 : index
      %97 = memref.load %arg5[%c6] : memref<16xf32, #tpu.memory_space<smem>>
      %cst_20 = arith.constant 2.000000e-01 : f32
      %98 = vector.broadcast %cst_20 : f32 to vector<16x16xf32>
      %99 = arith.mulf %98, %96 : vector<16x16xf32>
      %100 = arith.maximumf %96, %99 : vector<16x16xf32>
      %101 = vector.broadcast %97 : f32 to vector<16x16xf32>
      %102 = arith.mulf %101, %100 : vector<16x16xf32>
      %103 = arith.addf %91, %102 : vector<16x16xf32>
      %104 = vector.extract_strided_slice %16 {offsets = [0, 7], sizes = [16, 1], strides = [1, 1]} : vector<16x16xf32> to vector<16x1xf32>
      %105 = vector.extract_strided_slice %18 {offsets = [7, 0], sizes = [1, 16], strides = [1, 1]} : vector<16x16xf32> to vector<1x16xf32>
      %106 = vector.broadcast %104 : vector<16x1xf32> to vector<16x16xf32>
      %107 = vector.broadcast %105 : vector<1x16xf32> to vector<16x16xf32>
      %108 = arith.addf %106, %107 : vector<16x16xf32>
      %c7 = arith.constant 7 : index
      %109 = memref.load %arg5[%c7] : memref<16xf32, #tpu.memory_space<smem>>
      %cst_21 = arith.constant 2.000000e-01 : f32
      %110 = vector.broadcast %cst_21 : f32 to vector<16x16xf32>
      %111 = arith.mulf %110, %108 : vector<16x16xf32>
      %112 = arith.maximumf %108, %111 : vector<16x16xf32>
      %113 = vector.broadcast %109 : f32 to vector<16x16xf32>
      %114 = arith.mulf %113, %112 : vector<16x16xf32>
      %115 = arith.addf %103, %114 : vector<16x16xf32>
      %116 = vector.extract_strided_slice %16 {offsets = [0, 8], sizes = [16, 1], strides = [1, 1]} : vector<16x16xf32> to vector<16x1xf32>
      %117 = vector.extract_strided_slice %18 {offsets = [8, 0], sizes = [1, 16], strides = [1, 1]} : vector<16x16xf32> to vector<1x16xf32>
      %118 = vector.broadcast %116 : vector<16x1xf32> to vector<16x16xf32>
      %119 = vector.broadcast %117 : vector<1x16xf32> to vector<16x16xf32>
      %120 = arith.addf %118, %119 : vector<16x16xf32>
      %c8 = arith.constant 8 : index
      %121 = memref.load %arg5[%c8] : memref<16xf32, #tpu.memory_space<smem>>
      %cst_22 = arith.constant 2.000000e-01 : f32
      %122 = vector.broadcast %cst_22 : f32 to vector<16x16xf32>
      %123 = arith.mulf %122, %120 : vector<16x16xf32>
      %124 = arith.maximumf %120, %123 : vector<16x16xf32>
      %125 = vector.broadcast %121 : f32 to vector<16x16xf32>
      %126 = arith.mulf %125, %124 : vector<16x16xf32>
      %127 = arith.addf %115, %126 : vector<16x16xf32>
      %128 = vector.extract_strided_slice %16 {offsets = [0, 9], sizes = [16, 1], strides = [1, 1]} : vector<16x16xf32> to vector<16x1xf32>
      %129 = vector.extract_strided_slice %18 {offsets = [9, 0], sizes = [1, 16], strides = [1, 1]} : vector<16x16xf32> to vector<1x16xf32>
      %130 = vector.broadcast %128 : vector<16x1xf32> to vector<16x16xf32>
      %131 = vector.broadcast %129 : vector<1x16xf32> to vector<16x16xf32>
      %132 = arith.addf %130, %131 : vector<16x16xf32>
      %c9 = arith.constant 9 : index
      %133 = memref.load %arg5[%c9] : memref<16xf32, #tpu.memory_space<smem>>
      %cst_23 = arith.constant 2.000000e-01 : f32
      %134 = vector.broadcast %cst_23 : f32 to vector<16x16xf32>
      %135 = arith.mulf %134, %132 : vector<16x16xf32>
      %136 = arith.maximumf %132, %135 : vector<16x16xf32>
      %137 = vector.broadcast %133 : f32 to vector<16x16xf32>
      %138 = arith.mulf %137, %136 : vector<16x16xf32>
      %139 = arith.addf %127, %138 : vector<16x16xf32>
      %140 = vector.extract_strided_slice %16 {offsets = [0, 10], sizes = [16, 1], strides = [1, 1]} : vector<16x16xf32> to vector<16x1xf32>
      %141 = vector.extract_strided_slice %18 {offsets = [10, 0], sizes = [1, 16], strides = [1, 1]} : vector<16x16xf32> to vector<1x16xf32>
      %142 = vector.broadcast %140 : vector<16x1xf32> to vector<16x16xf32>
      %143 = vector.broadcast %141 : vector<1x16xf32> to vector<16x16xf32>
      %144 = arith.addf %142, %143 : vector<16x16xf32>
      %c10 = arith.constant 10 : index
      %145 = memref.load %arg5[%c10] : memref<16xf32, #tpu.memory_space<smem>>
      %cst_24 = arith.constant 2.000000e-01 : f32
      %146 = vector.broadcast %cst_24 : f32 to vector<16x16xf32>
      %147 = arith.mulf %146, %144 : vector<16x16xf32>
      %148 = arith.maximumf %144, %147 : vector<16x16xf32>
      %149 = vector.broadcast %145 : f32 to vector<16x16xf32>
      %150 = arith.mulf %149, %148 : vector<16x16xf32>
      %151 = arith.addf %139, %150 : vector<16x16xf32>
      %152 = vector.extract_strided_slice %16 {offsets = [0, 11], sizes = [16, 1], strides = [1, 1]} : vector<16x16xf32> to vector<16x1xf32>
      %153 = vector.extract_strided_slice %18 {offsets = [11, 0], sizes = [1, 16], strides = [1, 1]} : vector<16x16xf32> to vector<1x16xf32>
      %154 = vector.broadcast %152 : vector<16x1xf32> to vector<16x16xf32>
      %155 = vector.broadcast %153 : vector<1x16xf32> to vector<16x16xf32>
      %156 = arith.addf %154, %155 : vector<16x16xf32>
      %c11 = arith.constant 11 : index
      %157 = memref.load %arg5[%c11] : memref<16xf32, #tpu.memory_space<smem>>
      %cst_25 = arith.constant 2.000000e-01 : f32
      %158 = vector.broadcast %cst_25 : f32 to vector<16x16xf32>
      %159 = arith.mulf %158, %156 : vector<16x16xf32>
      %160 = arith.maximumf %156, %159 : vector<16x16xf32>
      %161 = vector.broadcast %157 : f32 to vector<16x16xf32>
      %162 = arith.mulf %161, %160 : vector<16x16xf32>
      %163 = arith.addf %151, %162 : vector<16x16xf32>
      %164 = vector.extract_strided_slice %16 {offsets = [0, 12], sizes = [16, 1], strides = [1, 1]} : vector<16x16xf32> to vector<16x1xf32>
      %165 = vector.extract_strided_slice %18 {offsets = [12, 0], sizes = [1, 16], strides = [1, 1]} : vector<16x16xf32> to vector<1x16xf32>
      %166 = vector.broadcast %164 : vector<16x1xf32> to vector<16x16xf32>
      %167 = vector.broadcast %165 : vector<1x16xf32> to vector<16x16xf32>
      %168 = arith.addf %166, %167 : vector<16x16xf32>
      %c12 = arith.constant 12 : index
      %169 = memref.load %arg5[%c12] : memref<16xf32, #tpu.memory_space<smem>>
      %cst_26 = arith.constant 2.000000e-01 : f32
      %170 = vector.broadcast %cst_26 : f32 to vector<16x16xf32>
      %171 = arith.mulf %170, %168 : vector<16x16xf32>
      %172 = arith.maximumf %168, %171 : vector<16x16xf32>
      %173 = vector.broadcast %169 : f32 to vector<16x16xf32>
      %174 = arith.mulf %173, %172 : vector<16x16xf32>
      %175 = arith.addf %163, %174 : vector<16x16xf32>
      %176 = vector.extract_strided_slice %16 {offsets = [0, 13], sizes = [16, 1], strides = [1, 1]} : vector<16x16xf32> to vector<16x1xf32>
      %177 = vector.extract_strided_slice %18 {offsets = [13, 0], sizes = [1, 16], strides = [1, 1]} : vector<16x16xf32> to vector<1x16xf32>
      %178 = vector.broadcast %176 : vector<16x1xf32> to vector<16x16xf32>
      %179 = vector.broadcast %177 : vector<1x16xf32> to vector<16x16xf32>
      %180 = arith.addf %178, %179 : vector<16x16xf32>
      %c13 = arith.constant 13 : index
      %181 = memref.load %arg5[%c13] : memref<16xf32, #tpu.memory_space<smem>>
      %cst_27 = arith.constant 2.000000e-01 : f32
      %182 = vector.broadcast %cst_27 : f32 to vector<16x16xf32>
      %183 = arith.mulf %182, %180 : vector<16x16xf32>
      %184 = arith.maximumf %180, %183 : vector<16x16xf32>
      %185 = vector.broadcast %181 : f32 to vector<16x16xf32>
      %186 = arith.mulf %185, %184 : vector<16x16xf32>
      %187 = arith.addf %175, %186 : vector<16x16xf32>
      %188 = vector.extract_strided_slice %16 {offsets = [0, 14], sizes = [16, 1], strides = [1, 1]} : vector<16x16xf32> to vector<16x1xf32>
      %189 = vector.extract_strided_slice %18 {offsets = [14, 0], sizes = [1, 16], strides = [1, 1]} : vector<16x16xf32> to vector<1x16xf32>
      %190 = vector.broadcast %188 : vector<16x1xf32> to vector<16x16xf32>
      %191 = vector.broadcast %189 : vector<1x16xf32> to vector<16x16xf32>
      %192 = arith.addf %190, %191 : vector<16x16xf32>
      %c14 = arith.constant 14 : index
      %193 = memref.load %arg5[%c14] : memref<16xf32, #tpu.memory_space<smem>>
      %cst_28 = arith.constant 2.000000e-01 : f32
      %194 = vector.broadcast %cst_28 : f32 to vector<16x16xf32>
      %195 = arith.mulf %194, %192 : vector<16x16xf32>
      %196 = arith.maximumf %192, %195 : vector<16x16xf32>
      %197 = vector.broadcast %193 : f32 to vector<16x16xf32>
      %198 = arith.mulf %197, %196 : vector<16x16xf32>
      %199 = arith.addf %187, %198 : vector<16x16xf32>
      %200 = vector.extract_strided_slice %16 {offsets = [0, 15], sizes = [16, 1], strides = [1, 1]} : vector<16x16xf32> to vector<16x1xf32>
      %201 = vector.extract_strided_slice %18 {offsets = [15, 0], sizes = [1, 16], strides = [1, 1]} : vector<16x16xf32> to vector<1x16xf32>
      %202 = vector.broadcast %200 : vector<16x1xf32> to vector<16x16xf32>
      %203 = vector.broadcast %201 : vector<1x16xf32> to vector<16x16xf32>
      %204 = arith.addf %202, %203 : vector<16x16xf32>
      %c15 = arith.constant 15 : index
      %205 = memref.load %arg5[%c15] : memref<16xf32, #tpu.memory_space<smem>>
      %cst_29 = arith.constant 2.000000e-01 : f32
      %206 = vector.broadcast %cst_29 : f32 to vector<16x16xf32>
      %207 = arith.mulf %206, %204 : vector<16x16xf32>
      %208 = arith.maximumf %204, %207 : vector<16x16xf32>
      %209 = vector.broadcast %205 : f32 to vector<16x16xf32>
      %210 = arith.mulf %209, %208 : vector<16x16xf32>
      %211 = arith.addf %199, %210 : vector<16x16xf32>
      %cst_30 = arith.constant -1.000000e+30 : f32
      %212 = vector.broadcast %cst_30 : f32 to vector<16x16xf32>
      %213 = arith.select %14, %211, %212 : vector<16x16xi1>, vector<16x16xf32>
      %c0_31 = arith.constant 0 : index
      %c0_32 = arith.constant 0 : index
      %c0_33 = arith.constant 0 : index
      %214 = vector.load %arg8[%c0_31, %c0_32, %c0_33] : memref<2x16x1xf32, #tpu.memory_space<vmem>>, vector<1x16x1xf32>
      %215 = vector.shape_cast %214 : vector<1x16x1xf32> to vector<16x1xf32>
      %cst_34 = arith.constant dense<0xFF800000> : vector<16xf32>
      %216 = vector.multi_reduction <maximumf>, %213, %cst_34 [1] : vector<16x16xf32> to vector<16xf32>
      %217 = vector.shape_cast %216 : vector<16xf32> to vector<16x1xf32>
      %218 = arith.maximumf %215, %217 : vector<16x1xf32>
      %219 = arith.subf %215, %218 : vector<16x1xf32>
      %220 = math.exp %219 : vector<16x1xf32>
      %221 = vector.broadcast %218 : vector<16x1xf32> to vector<16x16xf32>
      %222 = arith.subf %213, %221 : vector<16x16xf32>
      %223 = math.exp %222 : vector<16x16xf32>
      %cst_35 = arith.constant 0.000000e+00 : f32
      %224 = vector.broadcast %cst_35 : f32 to vector<16x16xf32>
      %225 = arith.select %14, %223, %224 : vector<16x16xi1>, vector<16x16xf32>
      %c0_36 = arith.constant 0 : index
      %c0_37 = arith.constant 0 : index
      %c0_38 = arith.constant 0 : index
      %226 = vector.load %arg9[%c0_36, %c0_37, %c0_38] : memref<2x16x1xf32, #tpu.memory_space<vmem>>, vector<1x16x1xf32>
      %227 = vector.shape_cast %226 : vector<1x16x1xf32> to vector<16x1xf32>
      %228 = arith.mulf %220, %227 : vector<16x1xf32>
      %cst_39 = arith.constant dense<0.000000e+00> : vector<16xf32>
      %229 = vector.multi_reduction <add>, %225, %cst_39 [1] : vector<16x16xf32> to vector<16xf32>
      %230 = vector.shape_cast %229 : vector<16xf32> to vector<16x1xf32>
      %231 = arith.addf %228, %230 : vector<16x1xf32>
      %c0_40 = arith.constant 0 : index
      %c0_41 = arith.constant 0 : index
      %c0_42 = arith.constant 0 : index
      %232 = vector.load %arg9[%c0_40, %c0_41, %c0_42] : memref<2x16x1xf32, #tpu.memory_space<vmem>>, vector<1x16x1xf32>
      %233 = vector.shape_cast %232 : vector<1x16x1xf32> to vector<16x1xf32>
      %234 = vector.shape_cast %231 : vector<16x1xf32> to vector<1x16x1xf32>
      tpu.vector_store %arg9[%c0_40, %c0_41, %c0_42], %234 {strides = array<i32>} : memref<2x16x1xf32, #tpu.memory_space<vmem>>, vector<1x16x1xf32>,
      %c0_43 = arith.constant 0 : index
      %c0_44 = arith.constant 0 : index
      %c0_45 = arith.constant 0 : index
      %235 = vector.load %arg10[%c0_43, %c0_44, %c0_45] : memref<2x16x16xf32, #tpu.memory_space<vmem>>, vector<1x16x16xf32>
      %236 = vector.shape_cast %235 : vector<1x16x16xf32> to vector<16x16xf32>
      %237 = vector.broadcast %220 : vector<16x1xf32> to vector<16x16xf32>
      %238 = arith.mulf %237, %236 : vector<16x16xf32>
      %cst_46 = arith.constant dense<0.000000e+00> : vector<16x16xf32>
      %239 = tpu.matmul %225, %18, %cst_46 {dimension_numbers = #tpu.dot_dimension_numbers<[1], [1], [0], [0], [0, 0, 1, 0], [], []>} : vector<16x16xf32>, vector<16x16xf32>, vector<16x16xf32> -> vector<16x16xf32>
      %240 = arith.addf %238, %239 : vector<16x16xf32>
      %c0_47 = arith.constant 0 : index
      %c0_48 = arith.constant 0 : index
      %c0_49 = arith.constant 0 : index
      %241 = vector.load %arg10[%c0_47, %c0_48, %c0_49] : memref<2x16x16xf32, #tpu.memory_space<vmem>>, vector<1x16x16xf32>
      %242 = vector.shape_cast %241 : vector<1x16x16xf32> to vector<16x16xf32>
      %243 = vector.shape_cast %240 : vector<16x16xf32> to vector<1x16x16xf32>
      tpu.vector_store %arg10[%c0_47, %c0_48, %c0_49], %243 {strides = array<i32>} : memref<2x16x16xf32, #tpu.memory_space<vmem>>, vector<1x16x16xf32>,
      %c0_50 = arith.constant 0 : index
      %c0_51 = arith.constant 0 : index
      %c0_52 = arith.constant 0 : index
      %244 = vector.load %arg8[%c0_50, %c0_51, %c0_52] : memref<2x16x1xf32, #tpu.memory_space<vmem>>, vector<1x16x1xf32>
      %245 = vector.shape_cast %244 : vector<1x16x1xf32> to vector<16x1xf32>
      %246 = vector.shape_cast %218 : vector<16x1xf32> to vector<1x16x1xf32>
      tpu.vector_store %arg8[%c0_50, %c0_51, %c0_52], %246 {strides = array<i32>} : memref<2x16x1xf32, #tpu.memory_space<vmem>>, vector<1x16x1xf32>,
      %c1_53 = arith.constant 1 : index
      %c0_54 = arith.constant 0 : index
      %c0_55 = arith.constant 0 : index
      %247 = vector.load %arg3[%c1_53, %c0_54, %c0_55] : memref<2x16x16xf32, #tpu.memory_space<vmem>>, vector<1x16x16xf32>
      %248 = vector.shape_cast %247 : vector<1x16x16xf32> to vector<16x16xf32>
      %c1_56 = arith.constant 1 : index
      %c0_57 = arith.constant 0 : index
      %c0_58 = arith.constant 0 : index
      %249 = vector.load %arg4[%c1_56, %c0_57, %c0_58] : memref<2x16x16xf32, #tpu.memory_space<vmem>>, vector<1x16x16xf32>
      %250 = vector.shape_cast %249 : vector<1x16x16xf32> to vector<16x16xf32>
      %cst_59 = arith.constant 0.000000e+00 : f32
      %251 = vector.broadcast %cst_59 : f32 to vector<16x16xf32>
      %252 = vector.extract_strided_slice %248 {offsets = [0, 0], sizes = [16, 1], strides = [1, 1]} : vector<16x16xf32> to vector<16x1xf32>
      %253 = vector.extract_strided_slice %250 {offsets = [0, 0], sizes = [1, 16], strides = [1, 1]} : vector<16x16xf32> to vector<1x16xf32>
      %254 = vector.broadcast %252 : vector<16x1xf32> to vector<16x16xf32>
      %255 = vector.broadcast %253 : vector<1x16xf32> to vector<16x16xf32>
      %256 = arith.addf %254, %255 : vector<16x16xf32>
      %c0_60 = arith.constant 0 : index
      %257 = memref.load %arg5[%c0_60] : memref<16xf32, #tpu.memory_space<smem>>
      %cst_61 = arith.constant 2.000000e-01 : f32
      %258 = vector.broadcast %cst_61 : f32 to vector<16x16xf32>
      %259 = arith.mulf %258, %256 : vector<16x16xf32>
      %260 = arith.maximumf %256, %259 : vector<16x16xf32>
      %261 = vector.broadcast %257 : f32 to vector<16x16xf32>
      %262 = arith.mulf %261, %260 : vector<16x16xf32>
      %263 = arith.addf %251, %262 : vector<16x16xf32>
      %264 = vector.extract_strided_slice %248 {offsets = [0, 1], sizes = [16, 1], strides = [1, 1]} : vector<16x16xf32> to vector<16x1xf32>
      %265 = vector.extract_strided_slice %250 {offsets = [1, 0], sizes = [1, 16], strides = [1, 1]} : vector<16x16xf32> to vector<1x16xf32>
      %266 = vector.broadcast %264 : vector<16x1xf32> to vector<16x16xf32>
      %267 = vector.broadcast %265 : vector<1x16xf32> to vector<16x16xf32>
      %268 = arith.addf %266, %267 : vector<16x16xf32>
      %c1_62 = arith.constant 1 : index
      %269 = memref.load %arg5[%c1_62] : memref<16xf32, #tpu.memory_space<smem>>
      %cst_63 = arith.constant 2.000000e-01 : f32
      %270 = vector.broadcast %cst_63 : f32 to vector<16x16xf32>
      %271 = arith.mulf %270, %268 : vector<16x16xf32>
      %272 = arith.maximumf %268, %271 : vector<16x16xf32>
      %273 = vector.broadcast %269 : f32 to vector<16x16xf32>
      %274 = arith.mulf %273, %272 : vector<16x16xf32>
      %275 = arith.addf %263, %274 : vector<16x16xf32>
      %276 = vector.extract_strided_slice %248 {offsets = [0, 2], sizes = [16, 1], strides = [1, 1]} : vector<16x16xf32> to vector<16x1xf32>
      %277 = vector.extract_strided_slice %250 {offsets = [2, 0], sizes = [1, 16], strides = [1, 1]} : vector<16x16xf32> to vector<1x16xf32>
      %278 = vector.broadcast %276 : vector<16x1xf32> to vector<16x16xf32>
      %279 = vector.broadcast %277 : vector<1x16xf32> to vector<16x16xf32>
      %280 = arith.addf %278, %279 : vector<16x16xf32>
      %c2_64 = arith.constant 2 : index
      %281 = memref.load %arg5[%c2_64] : memref<16xf32, #tpu.memory_space<smem>>
      %cst_65 = arith.constant 2.000000e-01 : f32
      %282 = vector.broadcast %cst_65 : f32 to vector<16x16xf32>
      %283 = arith.mulf %282, %280 : vector<16x16xf32>
      %284 = arith.maximumf %280, %283 : vector<16x16xf32>
      %285 = vector.broadcast %281 : f32 to vector<16x16xf32>
      %286 = arith.mulf %285, %284 : vector<16x16xf32>
      %287 = arith.addf %275, %286 : vector<16x16xf32>
      %288 = vector.extract_strided_slice %248 {offsets = [0, 3], sizes = [16, 1], strides = [1, 1]} : vector<16x16xf32> to vector<16x1xf32>
      %289 = vector.extract_strided_slice %250 {offsets = [3, 0], sizes = [1, 16], strides = [1, 1]} : vector<16x16xf32> to vector<1x16xf32>
      %290 = vector.broadcast %288 : vector<16x1xf32> to vector<16x16xf32>
      %291 = vector.broadcast %289 : vector<1x16xf32> to vector<16x16xf32>
      %292 = arith.addf %290, %291 : vector<16x16xf32>
      %c3_66 = arith.constant 3 : index
      %293 = memref.load %arg5[%c3_66] : memref<16xf32, #tpu.memory_space<smem>>
      %cst_67 = arith.constant 2.000000e-01 : f32
      %294 = vector.broadcast %cst_67 : f32 to vector<16x16xf32>
      %295 = arith.mulf %294, %292 : vector<16x16xf32>
      %296 = arith.maximumf %292, %295 : vector<16x16xf32>
      %297 = vector.broadcast %293 : f32 to vector<16x16xf32>
      %298 = arith.mulf %297, %296 : vector<16x16xf32>
      %299 = arith.addf %287, %298 : vector<16x16xf32>
      %300 = vector.extract_strided_slice %248 {offsets = [0, 4], sizes = [16, 1], strides = [1, 1]} : vector<16x16xf32> to vector<16x1xf32>
      %301 = vector.extract_strided_slice %250 {offsets = [4, 0], sizes = [1, 16], strides = [1, 1]} : vector<16x16xf32> to vector<1x16xf32>
      %302 = vector.broadcast %300 : vector<16x1xf32> to vector<16x16xf32>
      %303 = vector.broadcast %301 : vector<1x16xf32> to vector<16x16xf32>
      %304 = arith.addf %302, %303 : vector<16x16xf32>
      %c4_68 = arith.constant 4 : index
      %305 = memref.load %arg5[%c4_68] : memref<16xf32, #tpu.memory_space<smem>>
      %cst_69 = arith.constant 2.000000e-01 : f32
      %306 = vector.broadcast %cst_69 : f32 to vector<16x16xf32>
      %307 = arith.mulf %306, %304 : vector<16x16xf32>
      %308 = arith.maximumf %304, %307 : vector<16x16xf32>
      %309 = vector.broadcast %305 : f32 to vector<16x16xf32>
      %310 = arith.mulf %309, %308 : vector<16x16xf32>
      %311 = arith.addf %299, %310 : vector<16x16xf32>
      %312 = vector.extract_strided_slice %248 {offsets = [0, 5], sizes = [16, 1], strides = [1, 1]} : vector<16x16xf32> to vector<16x1xf32>
      %313 = vector.extract_strided_slice %250 {offsets = [5, 0], sizes = [1, 16], strides = [1, 1]} : vector<16x16xf32> to vector<1x16xf32>
      %314 = vector.broadcast %312 : vector<16x1xf32> to vector<16x16xf32>
      %315 = vector.broadcast %313 : vector<1x16xf32> to vector<16x16xf32>
      %316 = arith.addf %314, %315 : vector<16x16xf32>
      %c5_70 = arith.constant 5 : index
      %317 = memref.load %arg5[%c5_70] : memref<16xf32, #tpu.memory_space<smem>>
      %cst_71 = arith.constant 2.000000e-01 : f32
      %318 = vector.broadcast %cst_71 : f32 to vector<16x16xf32>
      %319 = arith.mulf %318, %316 : vector<16x16xf32>
      %320 = arith.maximumf %316, %319 : vector<16x16xf32>
      %321 = vector.broadcast %317 : f32 to vector<16x16xf32>
      %322 = arith.mulf %321, %320 : vector<16x16xf32>
      %323 = arith.addf %311, %322 : vector<16x16xf32>
      %324 = vector.extract_strided_slice %248 {offsets = [0, 6], sizes = [16, 1], strides = [1, 1]} : vector<16x16xf32> to vector<16x1xf32>
      %325 = vector.extract_strided_slice %250 {offsets = [6, 0], sizes = [1, 16], strides = [1, 1]} : vector<16x16xf32> to vector<1x16xf32>
      %326 = vector.broadcast %324 : vector<16x1xf32> to vector<16x16xf32>
      %327 = vector.broadcast %325 : vector<1x16xf32> to vector<16x16xf32>
      %328 = arith.addf %326, %327 : vector<16x16xf32>
      %c6_72 = arith.constant 6 : index
      %329 = memref.load %arg5[%c6_72] : memref<16xf32, #tpu.memory_space<smem>>
      %cst_73 = arith.constant 2.000000e-01 : f32
      %330 = vector.broadcast %cst_73 : f32 to vector<16x16xf32>
      %331 = arith.mulf %330, %328 : vector<16x16xf32>
      %332 = arith.maximumf %328, %331 : vector<16x16xf32>
      %333 = vector.broadcast %329 : f32 to vector<16x16xf32>
      %334 = arith.mulf %333, %332 : vector<16x16xf32>
      %335 = arith.addf %323, %334 : vector<16x16xf32>
      %336 = vector.extract_strided_slice %248 {offsets = [0, 7], sizes = [16, 1], strides = [1, 1]} : vector<16x16xf32> to vector<16x1xf32>
      %337 = vector.extract_strided_slice %250 {offsets = [7, 0], sizes = [1, 16], strides = [1, 1]} : vector<16x16xf32> to vector<1x16xf32>
      %338 = vector.broadcast %336 : vector<16x1xf32> to vector<16x16xf32>
      %339 = vector.broadcast %337 : vector<1x16xf32> to vector<16x16xf32>
      %340 = arith.addf %338, %339 : vector<16x16xf32>
      %c7_74 = arith.constant 7 : index
      %341 = memref.load %arg5[%c7_74] : memref<16xf32, #tpu.memory_space<smem>>
      %cst_75 = arith.constant 2.000000e-01 : f32
      %342 = vector.broadcast %cst_75 : f32 to vector<16x16xf32>
      %343 = arith.mulf %342, %340 : vector<16x16xf32>
      %344 = arith.maximumf %340, %343 : vector<16x16xf32>
      %345 = vector.broadcast %341 : f32 to vector<16x16xf32>
      %346 = arith.mulf %345, %344 : vector<16x16xf32>
      %347 = arith.addf %335, %346 : vector<16x16xf32>
      %348 = vector.extract_strided_slice %248 {offsets = [0, 8], sizes = [16, 1], strides = [1, 1]} : vector<16x16xf32> to vector<16x1xf32>
      %349 = vector.extract_strided_slice %250 {offsets = [8, 0], sizes = [1, 16], strides = [1, 1]} : vector<16x16xf32> to vector<1x16xf32>
      %350 = vector.broadcast %348 : vector<16x1xf32> to vector<16x16xf32>
      %351 = vector.broadcast %349 : vector<1x16xf32> to vector<16x16xf32>
      %352 = arith.addf %350, %351 : vector<16x16xf32>
      %c8_76 = arith.constant 8 : index
      %353 = memref.load %arg5[%c8_76] : memref<16xf32, #tpu.memory_space<smem>>
      %cst_77 = arith.constant 2.000000e-01 : f32
      %354 = vector.broadcast %cst_77 : f32 to vector<16x16xf32>
      %355 = arith.mulf %354, %352 : vector<16x16xf32>
      %356 = arith.maximumf %352, %355 : vector<16x16xf32>
      %357 = vector.broadcast %353 : f32 to vector<16x16xf32>
      %358 = arith.mulf %357, %356 : vector<16x16xf32>
      %359 = arith.addf %347, %358 : vector<16x16xf32>
      %360 = vector.extract_strided_slice %248 {offsets = [0, 9], sizes = [16, 1], strides = [1, 1]} : vector<16x16xf32> to vector<16x1xf32>
      %361 = vector.extract_strided_slice %250 {offsets = [9, 0], sizes = [1, 16], strides = [1, 1]} : vector<16x16xf32> to vector<1x16xf32>
      %362 = vector.broadcast %360 : vector<16x1xf32> to vector<16x16xf32>
      %363 = vector.broadcast %361 : vector<1x16xf32> to vector<16x16xf32>
      %364 = arith.addf %362, %363 : vector<16x16xf32>
      %c9_78 = arith.constant 9 : index
      %365 = memref.load %arg5[%c9_78] : memref<16xf32, #tpu.memory_space<smem>>
      %cst_79 = arith.constant 2.000000e-01 : f32
      %366 = vector.broadcast %cst_79 : f32 to vector<16x16xf32>
      %367 = arith.mulf %366, %364 : vector<16x16xf32>
      %368 = arith.maximumf %364, %367 : vector<16x16xf32>
      %369 = vector.broadcast %365 : f32 to vector<16x16xf32>
      %370 = arith.mulf %369, %368 : vector<16x16xf32>
      %371 = arith.addf %359, %370 : vector<16x16xf32>
      %372 = vector.extract_strided_slice %248 {offsets = [0, 10], sizes = [16, 1], strides = [1, 1]} : vector<16x16xf32> to vector<16x1xf32>
      %373 = vector.extract_strided_slice %250 {offsets = [10, 0], sizes = [1, 16], strides = [1, 1]} : vector<16x16xf32> to vector<1x16xf32>
      %374 = vector.broadcast %372 : vector<16x1xf32> to vector<16x16xf32>
      %375 = vector.broadcast %373 : vector<1x16xf32> to vector<16x16xf32>
      %376 = arith.addf %374, %375 : vector<16x16xf32>
      %c10_80 = arith.constant 10 : index
      %377 = memref.load %arg5[%c10_80] : memref<16xf32, #tpu.memory_space<smem>>
      %cst_81 = arith.constant 2.000000e-01 : f32
      %378 = vector.broadcast %cst_81 : f32 to vector<16x16xf32>
      %379 = arith.mulf %378, %376 : vector<16x16xf32>
      %380 = arith.maximumf %376, %379 : vector<16x16xf32>
      %381 = vector.broadcast %377 : f32 to vector<16x16xf32>
      %382 = arith.mulf %381, %380 : vector<16x16xf32>
      %383 = arith.addf %371, %382 : vector<16x16xf32>
      %384 = vector.extract_strided_slice %248 {offsets = [0, 11], sizes = [16, 1], strides = [1, 1]} : vector<16x16xf32> to vector<16x1xf32>
      %385 = vector.extract_strided_slice %250 {offsets = [11, 0], sizes = [1, 16], strides = [1, 1]} : vector<16x16xf32> to vector<1x16xf32>
      %386 = vector.broadcast %384 : vector<16x1xf32> to vector<16x16xf32>
      %387 = vector.broadcast %385 : vector<1x16xf32> to vector<16x16xf32>
      %388 = arith.addf %386, %387 : vector<16x16xf32>
      %c11_82 = arith.constant 11 : index
      %389 = memref.load %arg5[%c11_82] : memref<16xf32, #tpu.memory_space<smem>>
      %cst_83 = arith.constant 2.000000e-01 : f32
      %390 = vector.broadcast %cst_83 : f32 to vector<16x16xf32>
      %391 = arith.mulf %390, %388 : vector<16x16xf32>
      %392 = arith.maximumf %388, %391 : vector<16x16xf32>
      %393 = vector.broadcast %389 : f32 to vector<16x16xf32>
      %394 = arith.mulf %393, %392 : vector<16x16xf32>
      %395 = arith.addf %383, %394 : vector<16x16xf32>
      %396 = vector.extract_strided_slice %248 {offsets = [0, 12], sizes = [16, 1], strides = [1, 1]} : vector<16x16xf32> to vector<16x1xf32>
      %397 = vector.extract_strided_slice %250 {offsets = [12, 0], sizes = [1, 16], strides = [1, 1]} : vector<16x16xf32> to vector<1x16xf32>
      %398 = vector.broadcast %396 : vector<16x1xf32> to vector<16x16xf32>
      %399 = vector.broadcast %397 : vector<1x16xf32> to vector<16x16xf32>
      %400 = arith.addf %398, %399 : vector<16x16xf32>
      %c12_84 = arith.constant 12 : index
      %401 = memref.load %arg5[%c12_84] : memref<16xf32, #tpu.memory_space<smem>>
      %cst_85 = arith.constant 2.000000e-01 : f32
      %402 = vector.broadcast %cst_85 : f32 to vector<16x16xf32>
      %403 = arith.mulf %402, %400 : vector<16x16xf32>
      %404 = arith.maximumf %400, %403 : vector<16x16xf32>
      %405 = vector.broadcast %401 : f32 to vector<16x16xf32>
      %406 = arith.mulf %405, %404 : vector<16x16xf32>
      %407 = arith.addf %395, %406 : vector<16x16xf32>
      %408 = vector.extract_strided_slice %248 {offsets = [0, 13], sizes = [16, 1], strides = [1, 1]} : vector<16x16xf32> to vector<16x1xf32>
      %409 = vector.extract_strided_slice %250 {offsets = [13, 0], sizes = [1, 16], strides = [1, 1]} : vector<16x16xf32> to vector<1x16xf32>
      %410 = vector.broadcast %408 : vector<16x1xf32> to vector<16x16xf32>
      %411 = vector.broadcast %409 : vector<1x16xf32> to vector<16x16xf32>
      %412 = arith.addf %410, %411 : vector<16x16xf32>
      %c13_86 = arith.constant 13 : index
      %413 = memref.load %arg5[%c13_86] : memref<16xf32, #tpu.memory_space<smem>>
      %cst_87 = arith.constant 2.000000e-01 : f32
      %414 = vector.broadcast %cst_87 : f32 to vector<16x16xf32>
      %415 = arith.mulf %414, %412 : vector<16x16xf32>
      %416 = arith.maximumf %412, %415 : vector<16x16xf32>
      %417 = vector.broadcast %413 : f32 to vector<16x16xf32>
      %418 = arith.mulf %417, %416 : vector<16x16xf32>
      %419 = arith.addf %407, %418 : vector<16x16xf32>
      %420 = vector.extract_strided_slice %248 {offsets = [0, 14], sizes = [16, 1], strides = [1, 1]} : vector<16x16xf32> to vector<16x1xf32>
      %421 = vector.extract_strided_slice %250 {offsets = [14, 0], sizes = [1, 16], strides = [1, 1]} : vector<16x16xf32> to vector<1x16xf32>
      %422 = vector.broadcast %420 : vector<16x1xf32> to vector<16x16xf32>
      %423 = vector.broadcast %421 : vector<1x16xf32> to vector<16x16xf32>
      %424 = arith.addf %422, %423 : vector<16x16xf32>
      %c14_88 = arith.constant 14 : index
      %425 = memref.load %arg5[%c14_88] : memref<16xf32, #tpu.memory_space<smem>>
      %cst_89 = arith.constant 2.000000e-01 : f32
      %426 = vector.broadcast %cst_89 : f32 to vector<16x16xf32>
      %427 = arith.mulf %426, %424 : vector<16x16xf32>
      %428 = arith.maximumf %424, %427 : vector<16x16xf32>
      %429 = vector.broadcast %425 : f32 to vector<16x16xf32>
      %430 = arith.mulf %429, %428 : vector<16x16xf32>
      %431 = arith.addf %419, %430 : vector<16x16xf32>
      %432 = vector.extract_strided_slice %248 {offsets = [0, 15], sizes = [16, 1], strides = [1, 1]} : vector<16x16xf32> to vector<16x1xf32>
      %433 = vector.extract_strided_slice %250 {offsets = [15, 0], sizes = [1, 16], strides = [1, 1]} : vector<16x16xf32> to vector<1x16xf32>
      %434 = vector.broadcast %432 : vector<16x1xf32> to vector<16x16xf32>
      %435 = vector.broadcast %433 : vector<1x16xf32> to vector<16x16xf32>
      %436 = arith.addf %434, %435 : vector<16x16xf32>
      %c15_90 = arith.constant 15 : index
      %437 = memref.load %arg5[%c15_90] : memref<16xf32, #tpu.memory_space<smem>>
      %cst_91 = arith.constant 2.000000e-01 : f32
      %438 = vector.broadcast %cst_91 : f32 to vector<16x16xf32>
      %439 = arith.mulf %438, %436 : vector<16x16xf32>
      %440 = arith.maximumf %436, %439 : vector<16x16xf32>
      %441 = vector.broadcast %437 : f32 to vector<16x16xf32>
      %442 = arith.mulf %441, %440 : vector<16x16xf32>
      %443 = arith.addf %431, %442 : vector<16x16xf32>
      %cst_92 = arith.constant -1.000000e+30 : f32
      %444 = vector.broadcast %cst_92 : f32 to vector<16x16xf32>
      %445 = arith.select %14, %443, %444 : vector<16x16xi1>, vector<16x16xf32>
      %c1_93 = arith.constant 1 : index
      %c0_94 = arith.constant 0 : index
      %c0_95 = arith.constant 0 : index
      %446 = vector.load %arg8[%c1_93, %c0_94, %c0_95] : memref<2x16x1xf32, #tpu.memory_space<vmem>>, vector<1x16x1xf32>
      %447 = vector.shape_cast %446 : vector<1x16x1xf32> to vector<16x1xf32>
      %cst_96 = arith.constant dense<0xFF800000> : vector<16xf32>
      %448 = vector.multi_reduction <maximumf>, %445, %cst_96 [1] : vector<16x16xf32> to vector<16xf32>
      %449 = vector.shape_cast %448 : vector<16xf32> to vector<16x1xf32>
      %450 = arith.maximumf %447, %449 : vector<16x1xf32>
      %451 = arith.subf %447, %450 : vector<16x1xf32>
      %452 = math.exp %451 : vector<16x1xf32>
      %453 = vector.broadcast %450 : vector<16x1xf32> to vector<16x16xf32>
      %454 = arith.subf %445, %453 : vector<16x16xf32>
      %455 = math.exp %454 : vector<16x16xf32>
      %cst_97 = arith.constant 0.000000e+00 : f32
      %456 = vector.broadcast %cst_97 : f32 to vector<16x16xf32>
      %457 = arith.select %14, %455, %456 : vector<16x16xi1>, vector<16x16xf32>
      %c1_98 = arith.constant 1 : index
      %c0_99 = arith.constant 0 : index
      %c0_100 = arith.constant 0 : index
      %458 = vector.load %arg9[%c1_98, %c0_99, %c0_100] : memref<2x16x1xf32, #tpu.memory_space<vmem>>, vector<1x16x1xf32>
      %459 = vector.shape_cast %458 : vector<1x16x1xf32> to vector<16x1xf32>
      %460 = arith.mulf %452, %459 : vector<16x1xf32>
      %cst_101 = arith.constant dense<0.000000e+00> : vector<16xf32>
      %461 = vector.multi_reduction <add>, %457, %cst_101 [1] : vector<16x16xf32> to vector<16xf32>
      %462 = vector.shape_cast %461 : vector<16xf32> to vector<16x1xf32>
      %463 = arith.addf %460, %462 : vector<16x1xf32>
      %c1_102 = arith.constant 1 : index
      %c0_103 = arith.constant 0 : index
      %c0_104 = arith.constant 0 : index
      %464 = vector.load %arg9[%c1_102, %c0_103, %c0_104] : memref<2x16x1xf32, #tpu.memory_space<vmem>>, vector<1x16x1xf32>
      %465 = vector.shape_cast %464 : vector<1x16x1xf32> to vector<16x1xf32>
      %466 = vector.shape_cast %463 : vector<16x1xf32> to vector<1x16x1xf32>
      tpu.vector_store %arg9[%c1_102, %c0_103, %c0_104], %466 {strides = array<i32>} : memref<2x16x1xf32, #tpu.memory_space<vmem>>, vector<1x16x1xf32>,
      %c1_105 = arith.constant 1 : index
      %c0_106 = arith.constant 0 : index
      %c0_107 = arith.constant 0 : index
      %467 = vector.load %arg10[%c1_105, %c0_106, %c0_107] : memref<2x16x16xf32, #tpu.memory_space<vmem>>, vector<1x16x16xf32>
      %468 = vector.shape_cast %467 : vector<1x16x16xf32> to vector<16x16xf32>
      %469 = vector.broadcast %452 : vector<16x1xf32> to vector<16x16xf32>
      %470 = arith.mulf %469, %468 : vector<16x16xf32>
      %cst_108 = arith.constant dense<0.000000e+00> : vector<16x16xf32>
      %471 = tpu.matmul %457, %250, %cst_108 {dimension_numbers = #tpu.dot_dimension_numbers<[1], [1], [0], [0], [0, 0, 1, 0], [], []>} : vector<16x16xf32>, vector<16x16xf32>, vector<16x16xf32> -> vector<16x16xf32>
      %472 = arith.addf %470, %471 : vector<16x16xf32>
      %c1_109 = arith.constant 1 : index
      %c0_110 = arith.constant 0 : index
      %c0_111 = arith.constant 0 : index
      %473 = vector.load %arg10[%c1_109, %c0_110, %c0_111] : memref<2x16x16xf32, #tpu.memory_space<vmem>>, vector<1x16x16xf32>
      %474 = vector.shape_cast %473 : vector<1x16x16xf32> to vector<16x16xf32>
      %475 = vector.shape_cast %472 : vector<16x16xf32> to vector<1x16x16xf32>
      tpu.vector_store %arg10[%c1_109, %c0_110, %c0_111], %475 {strides = array<i32>} : memref<2x16x16xf32, #tpu.memory_space<vmem>>, vector<1x16x16xf32>,
      %c1_112 = arith.constant 1 : index
      %c0_113 = arith.constant 0 : index
      %c0_114 = arith.constant 0 : index
      %476 = vector.load %arg8[%c1_112, %c0_113, %c0_114] : memref<2x16x1xf32, #tpu.memory_space<vmem>>, vector<1x16x1xf32>
      %477 = vector.shape_cast %476 : vector<1x16x1xf32> to vector<16x1xf32>
      %478 = vector.shape_cast %450 : vector<16x1xf32> to vector<1x16x1xf32>
      tpu.vector_store %arg8[%c1_112, %c0_113, %c0_114], %478 {strides = array<i32>} : memref<2x16x1xf32, #tpu.memory_space<vmem>>, vector<1x16x1xf32>,
    } else {
    }
    %c0_i32_3 = arith.constant 0 : i32
    %9 = arith.cmpi eq, %arg1, %c0_i32_3 : i32
    %10 = arith.extui %9 : i1 to i32
    %c0_i32_4 = arith.constant 0 : i32
    %11 = arith.cmpi ne, %10, %c0_i32_4 : i32
    scf.if %11 {
      %c0 = arith.constant 0 : index
      %c0_5 = arith.constant 0 : index
      %c0_6 = arith.constant 0 : index
      %12 = vector.load %arg9[%c0, %c0_5, %c0_6] : memref<2x16x1xf32, #tpu.memory_space<vmem>>, vector<2x16x1xf32>
      %cst = arith.constant 9.99999996E-13 : f32
      %13 = vector.broadcast %cst : f32 to vector<2x16x1xf32>
      %14 = arith.maximumf %12, %13 : vector<2x16x1xf32>
      %15 = tpu.reciprocal %14 {approx = true} : vector<2x16x1xf32> -> vector<2x16x1xf32>
      %c0_7 = arith.constant 0 : index
      %c0_8 = arith.constant 0 : index
      %c0_9 = arith.constant 0 : index
      %16 = vector.load %arg10[%c0_7, %c0_8, %c0_9] : memref<2x16x16xf32, #tpu.memory_space<vmem>>, vector<2x16x16xf32>
      %17 = vector.broadcast %15 : vector<2x16x1xf32> to vector<2x16x16xf32>
      %18 = arith.mulf %16, %17 : vector<2x16x16xf32>
      %c0_10 = arith.constant 0 : index
      %c0_11 = arith.constant 0 : index
      %c0_12 = arith.constant 0 : index
      %19 = vector.load %arg7[%c0_10, %c0_11, %c0_12] : memref<2x16x16xf32, #tpu.memory_space<vmem>>, vector<2x16x16xf32>
      tpu.vector_store %arg7[%c0_10, %c0_11, %c0_12], %18 {strides = array<i32>} : memref<2x16x16xf32, #tpu.memory_space<vmem>>, vector<2x16x16xf32>,
    } else {
    }
    return
  }
  func.func @transform_0(%arg0: i32, %arg1: i32, %arg2: memref<1x1xi32, #tpu.memory_space<smem>>) -> (i32, i32, i32) {
    %c0_i32 = arith.constant 0 : i32
    %c0_i32_0 = arith.constant 0 : i32
    %c0_i32_1 = arith.constant 0 : i32
    return %c0_i32, %arg0, %c0_i32_0 : i32, i32, i32
  }
  func.func @transform_1(%arg0: i32, %arg1: i32, %arg2: memref<1x1xi32, #tpu.memory_space<smem>>) -> (i32, i32, i32) {
    %c0_i32 = arith.constant 0 : i32
    %c0_i32_0 = arith.constant 0 : i32
    %c0_i32_1 = arith.constant 0 : i32
    return %c0_i32, %c0_i32_0, %arg1 : i32, i32, i32
  }
  func.func @transform_2(%arg0: i32, %arg1: i32, %arg2: memref<1x1xi32, #tpu.memory_space<smem>>) -> i32 {
    %c0_i32 = arith.constant 0 : i32
    %c0_i32_0 = arith.constant 0 : i32
    return %c0_i32 : i32
  }
  func.func @transform_3(%arg0: i32, %arg1: i32, %arg2: memref<1x1xi32, #tpu.memory_space<smem>>) -> (i32, i32) {
    %c0_i32 = arith.constant 0 : i32
    return %arg0, %arg1 : i32, i32
  }
  func.func @transform_4(%arg0: i32, %arg1: i32, %arg2: memref<1x1xi32, #tpu.memory_space<smem>>) -> (i32, i32, i32) {
    %c0_i32 = arith.constant 0 : i32
    %c0_i32_0 = arith.constant 0 : i32
    %c0_i32_1 = arith.constant 0 : i32
    return %c0_i32, %arg0, %c0_i32_0 : i32, i32, i32
  }
}

module attributes {stable_mosaic.version = 11 : i64} {
  func.func @_adj_mm_kernel(%arg0: i32, %arg1: i32, %arg2: memref<16x16xbf16, #tpu.memory_space<vmem>>, %arg3: memref<1x16x32xbf16, #tpu.memory_space<vmem>>, %arg4: memref<1x16x32xf32, #tpu.memory_space<vmem>>, %arg5: memref<1x16x32xf32, #tpu.memory_space<vmem>>) attributes {dimension_semantics = [#tpu.dimension_semantics<parallel>, #tpu.dimension_semantics<arbitrary>], iteration_bounds = array<i64: 1, 1>, scalar_prefetch = 0 : i64, scratch_operands = 1 : i64, tpu.core_type = #tpu.core_type<tc>, window_params = [{transform_indices = @transform_0, window_bounds = array<i64: 16, 16>}, {transform_indices = @transform_1, window_bounds = array<i64: 1, 16, 32>}, {transform_indices = @transform_2, window_bounds = array<i64: 1, 16, 32>}]} {
    %c0_i32 = arith.constant 0 : i32
    %0 = arith.cmpi eq, %arg1, %c0_i32 : i32
    %1 = arith.extui %0 : i1 to i32
    %c0_i32_0 = arith.constant 0 : i32
    %2 = arith.cmpi ne, %1, %c0_i32_0 : i32
    scf.if %2 {
      %cst_13 = arith.constant 0.000000e+00 : f32
      %16 = vector.broadcast %cst_13 : f32 to vector<1x16x32xf32>
      %c0_14 = arith.constant 0 : index
      %c0_15 = arith.constant 0 : index
      %c0_16 = arith.constant 0 : index
      %17 = vector.load %arg5[%c0_14, %c0_15, %c0_16] : memref<1x16x32xf32, #tpu.memory_space<vmem>>, vector<1x16x32xf32>
      tpu.vector_store %arg5[%c0_14, %c0_15, %c0_16], %16 {strides = array<i32>} : memref<1x16x32xf32, #tpu.memory_space<vmem>>, vector<1x16x32xf32>,
    } else {
    }
    %c0 = arith.constant 0 : index
    %c0_1 = arith.constant 0 : index
    %3 = vector.load %arg2[%c0, %c0_1] : memref<16x16xbf16, #tpu.memory_space<vmem>>, vector<16x16xbf16>
    %c0_2 = arith.constant 0 : index
    %c0_3 = arith.constant 0 : index
    %c0_4 = arith.constant 0 : index
    %4 = vector.load %arg5[%c0_2, %c0_3, %c0_4] : memref<1x16x32xf32, #tpu.memory_space<vmem>>, vector<1x16x32xf32>
    %5 = vector.shape_cast %4 : vector<1x16x32xf32> to vector<16x32xf32>
    %c0_5 = arith.constant 0 : index
    %c0_6 = arith.constant 0 : index
    %c0_7 = arith.constant 0 : index
    %6 = vector.load %arg3[%c0_5, %c0_6, %c0_7] : memref<1x16x32xbf16, #tpu.memory_space<vmem>>, vector<1x16x32xbf16>
    %7 = vector.shape_cast %6 : vector<1x16x32xbf16> to vector<16x32xbf16>
    %cst = arith.constant dense<0.000000e+00> : vector<16x32xf32>
    %8 = tpu.matmul %3, %7, %cst {dimension_numbers = #tpu.dot_dimension_numbers<[1], [0], [0], [1], [0, 0, 1, 1], [], []>} : vector<16x16xbf16>, vector<16x32xbf16>, vector<16x32xf32> -> vector<16x32xf32>
    %9 = arith.addf %5, %8 : vector<16x32xf32>
    %c0_8 = arith.constant 0 : index
    %c0_9 = arith.constant 0 : index
    %c0_10 = arith.constant 0 : index
    %10 = vector.load %arg5[%c0_8, %c0_9, %c0_10] : memref<1x16x32xf32, #tpu.memory_space<vmem>>, vector<1x16x32xf32>
    %11 = vector.shape_cast %10 : vector<1x16x32xf32> to vector<16x32xf32>
    %12 = vector.shape_cast %9 : vector<16x32xf32> to vector<1x16x32xf32>
    tpu.vector_store %arg5[%c0_8, %c0_9, %c0_10], %12 {strides = array<i32>} : memref<1x16x32xf32, #tpu.memory_space<vmem>>, vector<1x16x32xf32>,
    %c0_i32_11 = arith.constant 0 : i32
    %13 = arith.cmpi eq, %arg1, %c0_i32_11 : i32
    %14 = arith.extui %13 : i1 to i32
    %c0_i32_12 = arith.constant 0 : i32
    %15 = arith.cmpi ne, %14, %c0_i32_12 : i32
    scf.if %15 {
      %c0_13 = arith.constant 0 : index
      %c0_14 = arith.constant 0 : index
      %c0_15 = arith.constant 0 : index
      %16 = vector.load %arg5[%c0_13, %c0_14, %c0_15] : memref<1x16x32xf32, #tpu.memory_space<vmem>>, vector<1x16x32xf32>
      %c0_16 = arith.constant 0 : index
      %c0_17 = arith.constant 0 : index
      %c0_18 = arith.constant 0 : index
      %17 = vector.load %arg4[%c0_16, %c0_17, %c0_18] : memref<1x16x32xf32, #tpu.memory_space<vmem>>, vector<1x16x32xf32>
      tpu.vector_store %arg4[%c0_16, %c0_17, %c0_18], %16 {strides = array<i32>} : memref<1x16x32xf32, #tpu.memory_space<vmem>>, vector<1x16x32xf32>,
    } else {
    }
    return
  }
  func.func @transform_0(%arg0: i32, %arg1: i32) -> (i32, i32) {
    %c0_i32 = arith.constant 0 : i32
    return %arg0, %arg1 : i32, i32
  }
  func.func @transform_1(%arg0: i32, %arg1: i32) -> (i32, i32, i32) {
    %c0_i32 = arith.constant 0 : i32
    %c0_i32_0 = arith.constant 0 : i32
    %c0_i32_1 = arith.constant 0 : i32
    return %c0_i32, %arg1, %c0_i32_0 : i32, i32, i32
  }
  func.func @transform_2(%arg0: i32, %arg1: i32) -> (i32, i32, i32) {
    %c0_i32 = arith.constant 0 : i32
    %c0_i32_0 = arith.constant 0 : i32
    %c0_i32_1 = arith.constant 0 : i32
    return %c0_i32, %arg0, %c0_i32_0 : i32, i32, i32
  }
}

module attributes {stable_mosaic.version = 11 : i64} {
  func.func @_readout_disc_kernel(%arg0: i32, %arg1: i32, %arg2: memref<16x16xbf16, #tpu.memory_space<vmem>>, %arg3: memref<2x16x16xbf16, #tpu.memory_space<vmem>>, %arg4: memref<2x16x16xf32, #tpu.memory_space<vmem>>, %arg5: memref<16x16xf32, #tpu.memory_space<vmem>>, %arg6: memref<1xf32, #tpu.memory_space<smem>>, %arg7: memref<4x16xf32, #tpu.memory_space<vmem>>, %arg8: memref<16x16xf32, #tpu.memory_space<vmem>>, %arg9: memref<16x16xf32, #tpu.memory_space<vmem>>, %arg10: memref<16x1xf32, #tpu.memory_space<vmem>>) attributes {dimension_semantics = [#tpu.dimension_semantics<parallel>, #tpu.dimension_semantics<arbitrary>], iteration_bounds = array<i64: 1, 1>, scalar_prefetch = 0 : i64, scratch_operands = 3 : i64, tpu.core_type = #tpu.core_type<tc>, window_params = [{transform_indices = @transform_0, window_bounds = array<i64: 16, 16>}, {transform_indices = @transform_1, window_bounds = array<i64: 2, 16, 16>}, {transform_indices = @transform_2, window_bounds = array<i64: 2, 16, 16>}, {pipeline_mode = #tpu.pipeline_mode<synchronous>, transform_indices = @transform_3, window_bounds = array<i64: 16, 16>}, {transform_indices = @transform_4, window_bounds = array<i64: 1>}, {transform_indices = @transform_5, window_bounds = array<i64: 4, 16>}]} {
    %c0_i32 = arith.constant 0 : i32
    %0 = arith.cmpi eq, %arg1, %c0_i32 : i32
    %1 = arith.extui %0 : i1 to i32
    %c0_i32_0 = arith.constant 0 : i32
    %2 = arith.cmpi ne, %1, %c0_i32_0 : i32
    scf.if %2 {
      %cst_23 = arith.constant 0.000000e+00 : f32
      %25 = vector.broadcast %cst_23 : f32 to vector<16x16xf32>
      %c0_24 = arith.constant 0 : index
      %c0_25 = arith.constant 0 : index
      %26 = vector.load %arg8[%c0_24, %c0_25] : memref<16x16xf32, #tpu.memory_space<vmem>>, vector<16x16xf32>
      tpu.vector_store %arg8[%c0_24, %c0_25], %25 {strides = array<i32>} : memref<16x16xf32, #tpu.memory_space<vmem>>, vector<16x16xf32>,
      %cst_26 = arith.constant 0.000000e+00 : f32
      %27 = vector.broadcast %cst_26 : f32 to vector<16x16xf32>
      %c0_27 = arith.constant 0 : index
      %c0_28 = arith.constant 0 : index
      %28 = vector.load %arg9[%c0_27, %c0_28] : memref<16x16xf32, #tpu.memory_space<vmem>>, vector<16x16xf32>
      tpu.vector_store %arg9[%c0_27, %c0_28], %27 {strides = array<i32>} : memref<16x16xf32, #tpu.memory_space<vmem>>, vector<16x16xf32>,
      %cst_29 = arith.constant 0.000000e+00 : f32
      %29 = vector.broadcast %cst_29 : f32 to vector<16x1xf32>
      %c0_30 = arith.constant 0 : index
      %c0_31 = arith.constant 0 : index
      %30 = vector.load %arg10[%c0_30, %c0_31] : memref<16x1xf32, #tpu.memory_space<vmem>>, vector<16x1xf32>
      tpu.vector_store %arg10[%c0_30, %c0_31], %29 {strides = array<i32>} : memref<16x1xf32, #tpu.memory_space<vmem>>, vector<16x1xf32>,
    } else {
    }
    %c0 = arith.constant 0 : index
    %c0_1 = arith.constant 0 : index
    %3 = vector.load %arg2[%c0, %c0_1] : memref<16x16xbf16, #tpu.memory_space<vmem>>, vector<16x16xbf16>
    %c0_2 = arith.constant 0 : index
    %c0_3 = arith.constant 0 : index
    %4 = vector.load %arg8[%c0_2, %c0_3] : memref<16x16xf32, #tpu.memory_space<vmem>>, vector<16x16xf32>
    %c0_4 = arith.constant 0 : index
    %c0_5 = arith.constant 0 : index
    %c0_6 = arith.constant 0 : index
    %5 = vector.load %arg3[%c0_4, %c0_5, %c0_6] : memref<2x16x16xbf16, #tpu.memory_space<vmem>>, vector<1x16x16xbf16>
    %6 = vector.shape_cast %5 : vector<1x16x16xbf16> to vector<16x16xbf16>
    %cst = arith.constant dense<0.000000e+00> : vector<16x16xf32>
    %7 = tpu.matmul %3, %6, %cst {dimension_numbers = #tpu.dot_dimension_numbers<[1], [0], [0], [1], [0, 0, 1, 1], [], []>} : vector<16x16xbf16>, vector<16x16xbf16>, vector<16x16xf32> -> vector<16x16xf32>
    %8 = arith.addf %4, %7 : vector<16x16xf32>
    %c0_7 = arith.constant 0 : index
    %c0_8 = arith.constant 0 : index
    %9 = vector.load %arg8[%c0_7, %c0_8] : memref<16x16xf32, #tpu.memory_space<vmem>>, vector<16x16xf32>
    tpu.vector_store %arg8[%c0_7, %c0_8], %8 {strides = array<i32>} : memref<16x16xf32, #tpu.memory_space<vmem>>, vector<16x16xf32>,
    %c0_9 = arith.constant 0 : index
    %c0_10 = arith.constant 0 : index
    %10 = vector.load %arg9[%c0_9, %c0_10] : memref<16x16xf32, #tpu.memory_space<vmem>>, vector<16x16xf32>
    %c1 = arith.constant 1 : index
    %c0_11 = arith.constant 0 : index
    %c0_12 = arith.constant 0 : index
    %11 = vector.load %arg3[%c1, %c0_11, %c0_12] : memref<2x16x16xbf16, #tpu.memory_space<vmem>>, vector<1x16x16xbf16>
    %12 = vector.shape_cast %11 : vector<1x16x16xbf16> to vector<16x16xbf16>
    %cst_13 = arith.constant dense<0.000000e+00> : vector<16x16xf32>
    %13 = tpu.matmul %3, %12, %cst_13 {dimension_numbers = #tpu.dot_dimension_numbers<[1], [0], [0], [1], [0, 0, 1, 1], [], []>} : vector<16x16xbf16>, vector<16x16xbf16>, vector<16x16xf32> -> vector<16x16xf32>
    %14 = arith.addf %10, %13 : vector<16x16xf32>
    %c0_14 = arith.constant 0 : index
    %c0_15 = arith.constant 0 : index
    %15 = vector.load %arg9[%c0_14, %c0_15] : memref<16x16xf32, #tpu.memory_space<vmem>>, vector<16x16xf32>
    tpu.vector_store %arg9[%c0_14, %c0_15], %14 {strides = array<i32>} : memref<16x16xf32, #tpu.memory_space<vmem>>, vector<16x16xf32>,
    %c0_16 = arith.constant 0 : index
    %c0_17 = arith.constant 0 : index
    %16 = vector.load %arg10[%c0_16, %c0_17] : memref<16x1xf32, #tpu.memory_space<vmem>>, vector<16x1xf32>
    %17 = arith.extf %3 : vector<16x16xbf16> to vector<16x16xf32>
    %cst_18 = arith.constant dense<0.000000e+00> : vector<16xf32>
    %18 = vector.multi_reduction <add>, %17, %cst_18 [1] : vector<16x16xf32> to vector<16xf32>
    %19 = vector.shape_cast %18 : vector<16xf32> to vector<16x1xf32>
    %20 = arith.addf %16, %19 : vector<16x1xf32>
    %c0_19 = arith.constant 0 : index
    %c0_20 = arith.constant 0 : index
    %21 = vector.load %arg10[%c0_19, %c0_20] : memref<16x1xf32, #tpu.memory_space<vmem>>, vector<16x1xf32>
    tpu.vector_store %arg10[%c0_19, %c0_20], %20 {strides = array<i32>} : memref<16x1xf32, #tpu.memory_space<vmem>>, vector<16x1xf32>,
    %c0_i32_21 = arith.constant 0 : i32
    %22 = arith.cmpi eq, %arg1, %c0_i32_21 : i32
    %23 = arith.extui %22 : i1 to i32
    %c0_i32_22 = arith.constant 0 : i32
    %24 = arith.cmpi ne, %23, %c0_i32_22 : i32
    scf.if %24 {
      %c0_23 = arith.constant 0 : index
      %c0_24 = arith.constant 0 : index
      %25 = vector.load %arg10[%c0_23, %c0_24] : memref<16x1xf32, #tpu.memory_space<vmem>>, vector<16x1xf32>
      %cst_25 = arith.constant 9.99999996E-13 : f32
      %26 = vector.broadcast %cst_25 : f32 to vector<16x1xf32>
      %27 = arith.maximumf %25, %26 : vector<16x1xf32>
      %28 = tpu.reciprocal %27 {approx = true} : vector<16x1xf32> -> vector<16x1xf32>
      %c0_26 = arith.constant 0 : index
      %29 = memref.load %arg6[%c0_26] : memref<1xf32, #tpu.memory_space<smem>>
      %c0_27 = arith.constant 0 : index
      %c0_28 = arith.constant 0 : index
      %30 = vector.load %arg8[%c0_27, %c0_28] : memref<16x16xf32, #tpu.memory_space<vmem>>, vector<16x16xf32>
      %31 = vector.broadcast %28 : vector<16x1xf32> to vector<16x16xf32>
      %32 = arith.mulf %30, %31 : vector<16x16xf32>
      %33 = arith.mulf %32, %32 : vector<16x16xf32>
      %cst_29 = arith.constant dense<0.000000e+00> : vector<16xf32>
      %34 = vector.multi_reduction <add>, %33, %cst_29 [1] : vector<16x16xf32> to vector<16xf32>
      %35 = vector.shape_cast %34 : vector<16xf32> to vector<16x1xf32>
      %cst_30 = arith.constant 1.000000e-24 : f32
      %36 = vector.broadcast %cst_30 : f32 to vector<16x1xf32>
      %37 = arith.maximumf %35, %36 : vector<16x1xf32>
      %38 = math.rsqrt %37 : vector<16x1xf32>
      %39 = vector.broadcast %38 : vector<16x1xf32> to vector<16x16xf32>
      %40 = arith.mulf %32, %39 : vector<16x16xf32>
      %cst_31 = arith.constant 0.000000e+00 : f32
      %41 = vector.broadcast %cst_31 : f32 to vector<16x16xf32>
      %42 = arith.subf %41, %40 : vector<16x16xf32>
      %43 = math.exp %42 : vector<16x16xf32>
      %cst_32 = arith.constant 1.000000e+00 : f32
      %44 = vector.broadcast %cst_32 : f32 to vector<16x16xf32>
      %45 = arith.addf %44, %43 : vector<16x16xf32>
      %cst_33 = arith.constant 1.000000e+00 : f32
      %46 = vector.broadcast %cst_33 : f32 to vector<16x16xf32>
      %47 = arith.divf %46, %45 : vector<16x16xf32>
      %c0_34 = arith.constant 0 : index
      %c0_35 = arith.constant 0 : index
      %48 = vector.load %arg9[%c0_34, %c0_35] : memref<16x16xf32, #tpu.memory_space<vmem>>, vector<16x16xf32>
      %49 = vector.broadcast %28 : vector<16x1xf32> to vector<16x16xf32>
      %50 = arith.mulf %48, %49 : vector<16x16xf32>
      %51 = arith.mulf %50, %50 : vector<16x16xf32>
      %cst_36 = arith.constant dense<0.000000e+00> : vector<16xf32>
      %52 = vector.multi_reduction <add>, %51, %cst_36 [1] : vector<16x16xf32> to vector<16xf32>
      %53 = vector.shape_cast %52 : vector<16xf32> to vector<16x1xf32>
      %cst_37 = arith.constant 1.000000e-24 : f32
      %54 = vector.broadcast %cst_37 : f32 to vector<16x1xf32>
      %55 = arith.maximumf %53, %54 : vector<16x1xf32>
      %56 = math.rsqrt %55 : vector<16x1xf32>
      %57 = vector.broadcast %56 : vector<16x1xf32> to vector<16x16xf32>
      %58 = arith.mulf %50, %57 : vector<16x16xf32>
      %cst_38 = arith.constant 0.000000e+00 : f32
      %59 = vector.broadcast %cst_38 : f32 to vector<16x16xf32>
      %60 = arith.subf %59, %58 : vector<16x16xf32>
      %61 = math.exp %60 : vector<16x16xf32>
      %cst_39 = arith.constant 1.000000e+00 : f32
      %62 = vector.broadcast %cst_39 : f32 to vector<16x16xf32>
      %63 = arith.addf %62, %61 : vector<16x16xf32>
      %cst_40 = arith.constant 1.000000e+00 : f32
      %64 = vector.broadcast %cst_40 : f32 to vector<16x16xf32>
      %65 = arith.divf %64, %63 : vector<16x16xf32>
      %c0_41 = arith.constant 0 : index
      %c0_42 = arith.constant 0 : index
      %66 = vector.load %arg5[%c0_41, %c0_42] : memref<16x16xf32, #tpu.memory_space<vmem>>, vector<16x16xf32>
      %cst_43 = arith.constant dense<0.000000e+00> : vector<16x16xf32>
      %67 = tpu.matmul %47, %66, %cst_43 {dimension_numbers = #tpu.dot_dimension_numbers<[1], [0], [0], [1], [0, 0, 1, 1], [], []>} : vector<16x16xf32>, vector<16x16xf32>, vector<16x16xf32> -> vector<16x16xf32>
      %c0_44 = arith.constant 0 : index
      %c0_45 = arith.constant 0 : index
      %68 = vector.load %arg5[%c0_44, %c0_45] : memref<16x16xf32, #tpu.memory_space<vmem>>, vector<16x16xf32>
      %cst_46 = arith.constant dense<0.000000e+00> : vector<16x16xf32>
      %69 = tpu.matmul %65, %68, %cst_46 {dimension_numbers = #tpu.dot_dimension_numbers<[1], [0], [0], [1], [0, 0, 1, 1], [], []>} : vector<16x16xf32>, vector<16x16xf32>, vector<16x16xf32> -> vector<16x16xf32>
      %c0_47 = arith.constant 0 : index
      %c0_48 = arith.constant 0 : index
      %c0_49 = arith.constant 0 : index
      %70 = vector.load %arg4[%c0_47, %c0_48, %c0_49] : memref<2x16x16xf32, #tpu.memory_space<vmem>>, vector<1x16x16xf32>
      %71 = vector.shape_cast %70 : vector<1x16x16xf32> to vector<16x16xf32>
      %c1_50 = arith.constant 1 : index
      %c0_51 = arith.constant 0 : index
      %c0_52 = arith.constant 0 : index
      %72 = vector.load %arg4[%c1_50, %c0_51, %c0_52] : memref<2x16x16xf32, #tpu.memory_space<vmem>>, vector<1x16x16xf32>
      %73 = vector.shape_cast %72 : vector<1x16x16xf32> to vector<16x16xf32>
      %74 = vector.shape_cast %71 : vector<16x16xf32> to vector<1x16x16xf32>
      %75 = vector.shape_cast %73 : vector<16x16xf32> to vector<1x16x16xf32>
      %76 = vector.shape_cast %73 : vector<16x16xf32> to vector<1x16x16xf32>
      %77 = vector.shape_cast %71 : vector<16x16xf32> to vector<1x16x16xf32>
      %78 = tpu.concatenate %74, %75, %76, %77 in 0 : vector<1x16x16xf32>, vector<1x16x16xf32>, vector<1x16x16xf32>, vector<1x16x16xf32> -> vector<4x16x16xf32>
      %79 = vector.shape_cast %67 : vector<16x16xf32> to vector<1x16x16xf32>
      %80 = vector.shape_cast %67 : vector<16x16xf32> to vector<1x16x16xf32>
      %81 = vector.shape_cast %69 : vector<16x16xf32> to vector<1x16x16xf32>
      %82 = vector.shape_cast %69 : vector<16x16xf32> to vector<1x16x16xf32>
      %83 = tpu.concatenate %79, %80, %81, %82 in 0 : vector<1x16x16xf32>, vector<1x16x16xf32>, vector<1x16x16xf32>, vector<1x16x16xf32> -> vector<4x16x16xf32>
      %84 = arith.mulf %78, %83 : vector<4x16x16xf32>
      %cst_53 = arith.constant dense<0.000000e+00> : vector<4x16xf32>
      %85 = vector.multi_reduction <add>, %84, %cst_53 [2] : vector<4x16x16xf32> to vector<4x16xf32>
      %86 = vector.broadcast %29 : f32 to vector<4x16xf32>
      %87 = arith.addf %85, %86 : vector<4x16xf32>
      %c0_54 = arith.constant 0 : index
      %c0_55 = arith.constant 0 : index
      %88 = vector.load %arg7[%c0_54, %c0_55] : memref<4x16xf32, #tpu.memory_space<vmem>>, vector<4x16xf32>
      tpu.vector_store %arg7[%c0_54, %c0_55], %87 {strides = array<i32>} : memref<4x16xf32, #tpu.memory_space<vmem>>, vector<4x16xf32>,
    } else {
    }
    return
  }
  func.func @transform_0(%arg0: i32, %arg1: i32) -> (i32, i32) {
    %c0_i32 = arith.constant 0 : i32
    return %arg0, %arg1 : i32, i32
  }
  func.func @transform_1(%arg0: i32, %arg1: i32) -> (i32, i32, i32) {
    %c0_i32 = arith.constant 0 : i32
    %c0_i32_0 = arith.constant 0 : i32
    %c0_i32_1 = arith.constant 0 : i32
    return %c0_i32, %arg1, %c0_i32_0 : i32, i32, i32
  }
  func.func @transform_2(%arg0: i32, %arg1: i32) -> (i32, i32, i32) {
    %c0_i32 = arith.constant 0 : i32
    %c0_i32_0 = arith.constant 0 : i32
    %c0_i32_1 = arith.constant 0 : i32
    return %c0_i32, %arg0, %c0_i32_0 : i32, i32, i32
  }
  func.func @transform_3(%arg0: i32, %arg1: i32) -> (i32, i32) {
    %c0_i32 = arith.constant 0 : i32
    %c0_i32_0 = arith.constant 0 : i32
    %c0_i32_1 = arith.constant 0 : i32
    return %c0_i32, %c0_i32_0 : i32, i32
  }
  func.func @transform_4(%arg0: i32, %arg1: i32) -> i32 {
    %c0_i32 = arith.constant 0 : i32
    %c0_i32_0 = arith.constant 0 : i32
    return %c0_i32 : i32
  }
  func.func @transform_5(%arg0: i32, %arg1: i32) -> (i32, i32) {
    %c0_i32 = arith.constant 0 : i32
    %c0_i32_0 = arith.constant 0 : i32
    return %c0_i32, %arg0 : i32, i32
  }
}

</mosaic_0001>

<llo_original>
// kernel: encoder_forward.6
$region0: #{encoder_forward.6}
  #allocation0 [shape = 'u32[]', space=smem, size = 0x4, offset = 0x4, fixed_abs, tag = 'smem constant byte address 0x4 - core index']
  #allocation1 [shape = 'u32[72,128]{1,0:T(1,128)}', space=vmem, size = 0x9000, scoped, tag = 'internal scratch']
  #allocation2 [shape = 'f32[2,16,16]{2,1,0:T(8,128)}', space=vmem, size = 0x4000, scoped, tag = 'scratch operand']
  %s0 = inlined_call_operand.vmem [shape: bf16[16,16], index: 0, kind: input, shape index: {}]
  %s1 = inlined_call_operand.vmem [shape: bf16[2,16,16], index: 1, kind: input, shape index: {}]
  %s2 = inlined_call_operand.vmem [shape: f32[16,16], index: 2, kind: output, shape index: {0}]
  %s3 = inlined_call_operand.vmem [shape: f32[2,16,16], index: 3, kind: output, shape index: {1}]
  %4 = xla_tuple %s2, %s3
  %s5 = sld [smem:[#allocation0]]
  $region34: #{encoder_forward.6} parent=0
    _
  %s7 = ssub.s32 1, %s5
  %s8 = scalar_select 0, %s7, %s5
  // Predicated region
  $region2: #{encoder_forward.6} parent=0 // pred_check
    _
  $region3: #{encoder_forward.6} parent=0 // pred_check_branch
    %10 = sbr.rel (0) target = $region5
  $region4: #{encoder_forward.6} parent=0 // pred_region
    _
  $region5: #{encoder_forward.6} parent=0 // pred_fallthru
    _
  // Predicated region
  $region6: #{encoder_forward.6} parent=0 // pred_check
    _
  $region7: #{encoder_forward.6} parent=0 // pred_check_branch
    %12 = sbr.rel (0) target = $region9
  $region8: #{encoder_forward.6} parent=0 // pred_region
    _
  $region9: #{encoder_forward.6} parent=0 // pred_fallthru
    _
  %p14 = scmp.eq.s32.totalorder 0, 0
  // Predicated region
  $region10: #{encoder_forward.6} parent=0 // pred_check
    %p15 = pneg %p14
  $region11: #{encoder_forward.6} parent=0 // pred_check_branch
    %17 = sbr.rel (%p15) target = $region13
  $region12: #{encoder_forward.6} parent=0 // pred_region
    %vm18 = vcmask 130048
    %19 = vst.msk [vmem:[#allocation2] sm:$0xff] %vm18, 0.0
    %20 = vst.msk [vmem:[#allocation2 + $0x8] sm:$0xff] %vm18, 0.0
    %21 = vst.msk [vmem:[#allocation2 + $0x10] sm:$0xff] %vm18, 0.0
    %22 = vst.msk [vmem:[#allocation2 + $0x18] sm:$0xff] %vm18, 0.0
  $region13: #{encoder_forward.6} parent=0 // pred_fallthru
    _
  %v23 = vld [vmem:[%s0] sm:$0xf]
  %v24 = vld [vmem:[%s0 + $0x4] sm:$0xf]
  %v25 = vld [vmem:[#allocation2] sm:$0xff]
  %v26 = vld [vmem:[#allocation2 + $0x8] sm:$0xff]
  %v27 = vld [vmem:[%s1] sm:$0xf]
  %v28 = vld [vmem:[%s1 + $0x4] sm:$0xf]
  %v31 = vunpack.c.l.b16 %v23
  %v32 = vunpack.c.l.b16 %v24
  %v33 = vpack.c.b16 %v32, %v31
  %v36 = vunpack.c.l.b16 %v27
  %v37 = vunpack.c.l.b16 %v28
  %v38 = vpack.c.b16 %v37, %v36
  %vm40 = vcmask 130048
  %v42 = vsel %vm40, %v33, 0
  %44 = vmatpush.bf16.msra.mxu0 0
  %45 = vmatpush.bf16.msra.mxu0 0
  %46 = vmatpush.bf16.msra.mxu0 0
  %47 = vmatpush.bf16.msra.mxu0 0
  %48 = vmatpush.bf16.msra.mxu0 0
  %49 = vmatpush.bf16.msra.mxu0 0
  %50 = vmatpush.bf16.msra.mxu0 0
  %51 = vmatpush.bf16.msra.mxu0 %v38
  %52 = vmatmul.bf16.gmra.mxu0 %v42
  %v53 = vpop.f32.mrf.mxu0
  %v54 = vadd.f32 0.0, %v53
  %v55 = vpop.f32.mrf.mxu0
  %v56 = vadd.f32 0.0, %v55
  %57 = vdwg.mxu0
  %v58 = vadd.f32 %v25, %v54
  %v59 = vadd.f32 %v26, %v56
  %60 = vst.msk [vmem:[#allocation2] sm:$0xff] %vm40, %v58
  %61 = vst.msk [vmem:[#allocation2 + $0x8] sm:$0xff] %vm40, %v59
  %s62 = scalar_lea.vmem [#allocation2], 16
  %v63 = vld [vmem:[%s62] sm:$0xff]
  %v64 = vld [vmem:[%s62 + $0x8] sm:$0xff]
  %s65 = scalar_lea.vmem %s1, 8
  %v66 = vld [vmem:[%s65] sm:$0xf]
  %v67 = vld [vmem:[%s65 + $0x4] sm:$0xf]
  %v70 = vunpack.c.l.b16 %v66
  %v71 = vunpack.c.l.b16 %v67
  %v72 = vpack.c.b16 %v71, %v70
  %74 = vmatpush.bf16.msra.mxu0 0
  %75 = vmatpush.bf16.msra.mxu0 0
  %76 = vmatpush.bf16.msra.mxu0 0
  %77 = vmatpush.bf16.msra.mxu0 0
  %78 = vmatpush.bf16.msra.mxu0 0
  %79 = vmatpush.bf16.msra.mxu0 0
  %80 = vmatpush.bf16.msra.mxu0 0
  %81 = vmatpush.bf16.msra.mxu0 %v72
  %82 = vmatmul.bf16.gmra.mxu0 %v42
  %v83 = vpop.f32.mrf.mxu0
  %v84 = vadd.f32 0.0, %v83
  %v85 = vpop.f32.mrf.mxu0
  %v86 = vadd.f32 0.0, %v85
  %87 = vdwg.mxu0
  %v88 = vadd.f32 %v63, %v84
  %v89 = vadd.f32 %v64, %v86
  %90 = vst.msk [vmem:[%s62] sm:$0xff] %vm40, %v88
  %91 = vst.msk [vmem:[%s62 + $0x8] sm:$0xff] %vm40, %v89
  // Predicated region
  $region14: #{encoder_forward.6} parent=0 // pred_check
    %p92 = pneg %p14
  $region15: #{encoder_forward.6} parent=0 // pred_check_branch
    %94 = sbr.rel (%p92) target = $region17
  $region16: #{encoder_forward.6} parent=0 // pred_region
    %v95 = vld [vmem:[#allocation2] sm:$0xff]
    %v96 = vld [vmem:[#allocation2 + $0x8] sm:$0xff]
    %v97 = vld [vmem:[#allocation2 + $0x10] sm:$0xff]
    %v98 = vld [vmem:[#allocation2 + $0x18] sm:$0xff]
    %99 = vst.msk [vmem:[%s2] sm:$0xff] %vm40, %v95
    %100 = vst.msk [vmem:[%s2 + $0x8] sm:$0xff] %vm40, %v96
    %v101 = vmax.f32 %v95, 0.0
    %v102 = vmax.f32 %v96, 0.0
    %v103 = vmax.f32 %v97, 0.0
    %v104 = vmax.f32 %v98, 0.0
    %105 = vst.msk [vmem:[%s3] sm:$0xff] %vm40, %v101
    %106 = vst.msk [vmem:[%s3 + $0x8] sm:$0xff] %vm40, %v102
    %107 = vst.msk [vmem:[%s3 + $0x10] sm:$0xff] %vm40, %v103
    %108 = vst.msk [vmem:[%s3 + $0x18] sm:$0xff] %vm40, %v104
  $region17: #{encoder_forward.6} parent=0 // pred_fallthru
    _
  // Predicated region
  $region18: #{encoder_forward.6} parent=0 // pred_check
    _
  $region19: #{encoder_forward.6} parent=0 // pred_check_branch
    %110 = sbr.rel (0) target = $region21
  $region20: #{encoder_forward.6} parent=0 // pred_region
    _
  $region21: #{encoder_forward.6} parent=0 // pred_fallthru
    _
  // Predicated region
  $region22: #{encoder_forward.6} parent=0 // pred_check
    _
  $region23: #{encoder_forward.6} parent=0 // pred_check_branch
    %112 = sbr.rel (0) target = $region25
  $region24: #{encoder_forward.6} parent=0 // pred_region
    _
  $region25: #{encoder_forward.6} parent=0 // pred_fallthru
    _
  // Predicated region
  $region26: #{encoder_forward.6} parent=0 // pred_check
    _
  $region27: #{encoder_forward.6} parent=0 // pred_check_branch
    %114 = sbr.rel (0) target = $region29
  $region28: #{encoder_forward.6} parent=0 // pred_region
    _
  $region29: #{encoder_forward.6} parent=0 // pred_fallthru
    _
  // Predicated region
  $region30: #{encoder_forward.6} parent=0 // pred_check
    _
  $region31: #{encoder_forward.6} parent=0 // pred_check_branch
    %116 = sbr.rel (0) target = $region33
  $region32: #{encoder_forward.6} parent=0 // pred_region
    _
  $region33: #{encoder_forward.6} parent=0 // pred_fallthru
    _

// kernel: encoder_forward.8
$region0: #{encoder_forward.8}
  #allocation0 [shape = 'u32[]', space=smem, size = 0x4, offset = 0x4, fixed_abs, tag = 'smem constant byte address 0x4 - core index']
  #allocation1 [shape = 'u32[72,128]{1,0:T(1,128)}', space=vmem, size = 0x9000, scoped, tag = 'internal scratch']
  #allocation2 [shape = 'f32[1,16,32]{2,1,0:T(8,128)}', space=vmem, size = 0x2000, scoped, tag = 'scratch operand']
  %s0 = inlined_call_operand.vmem [shape: bf16[16,16], index: 0, kind: input, shape index: {}]
  %s1 = inlined_call_operand.vmem [shape: bf16[1,16,32], index: 1, kind: input, shape index: {}]
  %s2 = inlined_call_operand.hbm [shape: f32[1,16,32], index: 2, kind: output, shape index: {}]
  %s3 = sld [smem:[#allocation0]]
  $region26: #{encoder_forward.8} parent=0
    _
  %s5 = ssub.s32 1, %s3
  %s6 = scalar_select 0, %s5, %s3
  $region1: #{encoder_forward.8} parent=0
    #allocation3 [shape = 'u8[8192]{0}', space=vmem, size = 0x2000, scoped, tag = 'output window, operand 0, single buffered']
    #allocation4 [shape = 's32[1]{0}', space=sflag, size = 0x4, scoped, tag = 'scoped memory for encoder_forward.8']
    %7 = vsyncpa [#allocation4], 0
    // Predicated region
    $region2: #{encoder_forward.8} parent=1 // pred_check
      _
    $region3: #{encoder_forward.8} parent=1 // pred_check_branch
      %9 = sbr.rel (0) target = $region5
    $region4: #{encoder_forward.8} parent=1 // pred_region
      _
    $region5: #{encoder_forward.8} parent=1 // pred_fallthru
      _
    // Predicated region
    $region6: #{encoder_forward.8} parent=1 // pred_check
      _
    $region7: #{encoder_forward.8} parent=1 // pred_check_branch
      %11 = sbr.rel (0) target = $region9
    $region8: #{encoder_forward.8} parent=1 // pred_region
      _
    $region9: #{encoder_forward.8} parent=1 // pred_fallthru
      _
    %p13 = scmp.eq.s32.totalorder 0, 0
    // Predicated region
    $region10: #{encoder_forward.8} parent=1 // pred_check
      %p14 = pneg %p13
    $region11: #{encoder_forward.8} parent=1 // pred_check_branch
      %16 = sbr.rel (%p14) target = $region13
    $region12: #{encoder_forward.8} parent=1 // pred_region
      %vm17 = vcmask 261120
      %18 = vst.msk [vmem:[#allocation2] sm:$0xff] %vm17, 0.0
      %19 = vst.msk [vmem:[#allocation2 + $0x8] sm:$0xff] %vm17, 0.0
    $region13: #{encoder_forward.8} parent=1 // pred_fallthru
      _
    %v20 = vld [vmem:[%s0] sm:$0xf]
    %v21 = vld [vmem:[%s0 + $0x4] sm:$0xf]
    %v22 = vld [vmem:[#allocation2] sm:$0xff]
    %v23 = vld [vmem:[#allocation2 + $0x8] sm:$0xff]
    %v24 = vld [vmem:[%s1] sm:$0xf]
    %v25 = vld [vmem:[%s1 + $0x4] sm:$0xf]
    %v28 = vunpack.c.l.b16 %v20
    %v29 = vunpack.c.l.b16 %v21
    %v30 = vpack.c.b16 %v29, %v28
    %v33 = vunpack.c.l.b16 %v24
    %v34 = vunpack.c.l.b16 %v25
    %v35 = vpack.c.b16 %v34, %v33
    %vm37 = vcmask 130048
    %v39 = vsel %vm37, %v30, 0
    %41 = vmatpush.bf16.msra.mxu0 0
    %42 = vmatpush.bf16.msra.mxu0 0
    %43 = vmatpush.bf16.msra.mxu0 0
    %44 = vmatpush.bf16.msra.mxu0 0
    %45 = vmatpush.bf16.msra.mxu0 0
    %46 = vmatpush.bf16.msra.mxu0 0
    %47 = vmatpush.bf16.msra.mxu0 0
    %48 = vmatpush.bf16.msra.mxu0 %v35
    %49 = vmatmul.bf16.gmra.mxu0 %v39
    %v50 = vpop.f32.mrf.mxu0
    %v51 = vadd.f32 0.0, %v50
    %v52 = vpop.f32.mrf.mxu0
    %v53 = vadd.f32 0.0, %v52
    %54 = vdwg.mxu0
    %v55 = vadd.f32 %v22, %v51
    %v56 = vadd.f32 %v23, %v53
    %vm57 = vcmask 261120
    %58 = vst.msk [vmem:[#allocation2] sm:$0xff] %vm57, %v55
    %59 = vst.msk [vmem:[#allocation2 + $0x8] sm:$0xff] %vm57, %v56
    // Predicated region
    $region14: #{encoder_forward.8} parent=1 // pred_check
      %p60 = pneg %p13
    $region15: #{encoder_forward.8} parent=1 // pred_check_branch
      %62 = sbr.rel (%p60) target = $region17
    $region16: #{encoder_forward.8} parent=1 // pred_region
      %v63 = vld [vmem:[#allocation2] sm:$0xff]
      %v64 = vld [vmem:[#allocation2 + $0x8] sm:$0xff]
      %65 = vst.msk [vmem:[#allocation3] sm:$0xff] %vm57, %v63
      %66 = vst.msk [vmem:[#allocation3 + $0x8] sm:$0xff] %vm57, %v64
    $region17: #{encoder_forward.8} parent=1 // pred_fallthru
      _
    // Predicated region
    $region18: #{encoder_forward.8} parent=1 // pred_check
      _
    $region19: #{encoder_forward.8} parent=1 // pred_check_branch
      %68 = sbr.rel (0) target = $region21
    $region20: #{encoder_forward.8} parent=1 // pred_region
      %70 = vsyncadd [#allocation4], 0
      %s71 = sshll.u32 [#allocation3], 4
      %s72 = int_to_ptr.vmem [resolvable:$true] %s71
      %s73 = sshll.u32 %s2, 4
      %s74 = int_to_ptr.hbm [resolvable:$true] %s73
      %79 = dma.vmem_to_hbm [thread:$0]  %s72, 256, %s74, [#allocation4], 128, 128, 8
    $region21: #{encoder_forward.8} parent=1 // pred_fallthru
      _
    // Predicated region
    $region22: #{encoder_forward.8} parent=1 // pred_check
      _
    $region23: #{encoder_forward.8} parent=1 // pred_check_branch
      %81 = sbr.rel (0) target = $region25
    $region24: #{encoder_forward.8} parent=1 // pred_region
      %83 = dma.done [#allocation4], 256
    $region25: #{encoder_forward.8} parent=1 // pred_fallthru
      _
    %84 = vsyncpa [#allocation4], 1

// kernel: encoder_forward.7
$region0: #{encoder_forward.7}
  #allocation0 [shape = 'u32[]', space=smem, size = 0x4, offset = 0x4, fixed_abs, tag = 'smem constant byte address 0x4 - core index']
  #allocation1 [shape = 'u32[72,128]{1,0:T(1,128)}', space=vmem, size = 0x9000, scoped, tag = 'internal scratch']
  #allocation2 [shape = 'f32[1,16,1]{2,1,0:T(8,128)}', space=vmem, size = 0x2000, scoped, tag = 'scratch operand']
  #allocation3 [shape = 'f32[1,16,1]{2,1,0:T(8,128)}', space=vmem, size = 0x2000, scoped, tag = 'scratch operand']
  #allocation4 [shape = 'f32[1,16,32]{2,1,0:T(8,128)}', space=vmem, size = 0x2000, scoped, tag = 'scratch operand']
  #allocation5 [shape = 's32[1]{0}', space=sflag, size = 0x4, scoped, tag = 'scoped memory for encoder_forward.7']
  #allocation6 [shape = 's32[1,1]{1,0:T(1,128)S(6)}', space=smem, size = 0x200, scoped, tag = 'prefetched SMEM operand 0']
  %s0 = inlined_call_operand.<no memory space> [shape: s32[1,1], index: 0, kind: input, shape index: {}]
  %s1 = inlined_call_operand.vmem [shape: f32[1,16,32], index: 1, kind: input, shape index: {}]
  %s2 = inlined_call_operand.vmem [shape: f32[1,32,16], index: 2, kind: input, shape index: {}]
  %s3 = inlined_call_operand.vmem [shape: f32[32], index: 3, kind: input, shape index: {}]
  %s4 = inlined_call_operand.vmem [shape: bf16[16,16], index: 4, kind: input, shape index: {}]
  %s5 = inlined_call_operand.vmem [shape: f32[1,16,32], index: 5, kind: output, shape index: {}]
  %s6 = sld [smem:[#allocation0]]
  $region42: #{encoder_forward.7} parent=0
    _
  %s8 = ssub.s32 1, %s6
  %s9 = scalar_select 0, %s8, %s6
  %10 = sst [smem:[#allocation6]] %s0
  $region1: #{encoder_forward.7} parent=0
    #allocation7 [shape = 'u8[512]{0}', space=smem, size = 0x200, scoped, tag = 'input window, operand 3, single buffered']
    #allocation8 [shape = 's32[1]{0}', space=sflag, size = 0x4, scoped, tag = 'scoped memory for encoder_forward.7']
    %11 = vsyncpa [#allocation8], 0
    // Predicated region
    $region2: #{encoder_forward.7} parent=1 // pred_check
      _
    $region3: #{encoder_forward.7} parent=1 // pred_check_branch
      %13 = sbr.rel (0) target = $region5
    $region4: #{encoder_forward.7} parent=1 // pred_region
      _
    $region5: #{encoder_forward.7} parent=1 // pred_fallthru
      _
    // Predicated region
    $region6: #{encoder_forward.7} parent=1 // pred_check
      _
    $region7: #{encoder_forward.7} parent=1 // pred_check_branch
      %15 = sbr.rel (0) target = $region9
    $region8: #{encoder_forward.7} parent=1 // pred_region
      _
    $region9: #{encoder_forward.7} parent=1 // pred_fallthru
      _
    // Predicated region
    $region10: #{encoder_forward.7} parent=1 // pred_check
      _
    $region11: #{encoder_forward.7} parent=1 // pred_check_branch
      %17 = sbr.rel (0) target = $region13
    $region12: #{encoder_forward.7} parent=1 // pred_region
      %19 = vsyncadd [#allocation8], 0
      %s21 = sshll.u32 %s3, 4
      %s22 = int_to_ptr.vmem [resolvable:$true] %s21
      %24 = dma.vmem_to_smem %s22, 16, [#allocation7], [#allocation8]
    $region13: #{encoder_forward.7} parent=1 // pred_fallthru
      _
    // Predicated region
    $region14: #{encoder_forward.7} parent=1 // pred_check
      _
    $region15: #{encoder_forward.7} parent=1 // pred_check_branch
      %26 = sbr.rel (0) target = $region17
    $region16: #{encoder_forward.7} parent=1 // pred_region
      _
    $region17: #{encoder_forward.7} parent=1 // pred_fallthru
      _
    // Predicated region
    $region18: #{encoder_forward.7} parent=1 // pred_check
      _
    $region19: #{encoder_forward.7} parent=1 // pred_check_branch
      %28 = sbr.rel (0) target = $region21
    $region20: #{encoder_forward.7} parent=1 // pred_region
      %30 = dma.done [#allocation8], 16
    $region21: #{encoder_forward.7} parent=1 // pred_fallthru
      _
    %31 = sfence
    %p32 = scmp.eq.s32.totalorder 0, 0
    // Predicated region
    $region22: #{encoder_forward.7} parent=1 // pred_check
      %p33 = pneg %p32
    $region23: #{encoder_forward.7} parent=1 // pred_check_branch
      %35 = sbr.rel (%p33) target = $region25
    $region24: #{encoder_forward.7} parent=1 // pred_region
      %vm36 = vcmask 7168
      %37 = vst.msk [vmem:[#allocation2] sm:$0xff] %vm36, -1e+30
      %38 = vst.msk [vmem:[#allocation2 + $0x8] sm:$0xff] %vm36, -1e+30
      %39 = vst.msk [vmem:[#allocation3] sm:$0xff] %vm36, 0.0
      %40 = vst.msk [vmem:[#allocation3 + $0x8] sm:$0xff] %vm36, 0.0
      %vm41 = vcmask 261120
      %42 = vst.msk [vmem:[#allocation4] sm:$0xff] %vm41, 0.0
      %43 = vst.msk [vmem:[#allocation4 + $0x8] sm:$0xff] %vm41, 0.0
    $region25: #{encoder_forward.7} parent=1 // pred_fallthru
      _
    %s44 = sadd.s32 0, 0
    %s45 = smul.u32 %s44, 128
    %s46 = sadd.s32 %s45, 0
    %s47 = sld [smem:[#allocation6 + %s46]]
    %p48 = scmp.gt.s32.totalorder %s47, 0
    // Predicated region
    $region26: #{encoder_forward.7} parent=1 // pred_check
      %p49 = pneg %p48
    $region27: #{encoder_forward.7} parent=1 // pred_check_branch
      %51 = sbr.rel (%p49) target = $region29
    $region28: #{encoder_forward.7} parent=1 // pred_region
      %v52 = vld [vmem:[%s4] sm:$0xf]
      %v53 = vld [vmem:[%s4 + $0x4] sm:$0xf]
      %v54 = vunpack.c.l.bf16 %v52
      %v55 = vunpack.c.l.bf16 %v53
      %vm56 = vcmp.gt.f32.partialorder %v54, 0.0
      %vm57 = vcmp.gt.f32.partialorder %v55, 0.0
      %v58 = vld [vmem:[%s1] sm:$0xff]
      %v59 = vld [vmem:[%s1 + $0x8] sm:$0xff]
      %v60 = vld [vmem:[%s2] sm:$0xff]
      %v61 = vld [vmem:[%s2 + $0x8] sm:$0xff]
      %v62 = vld [vmem:[%s2 + $0x10] sm:$0xff]
      %v63 = vld [vmem:[%s2 + $0x18] sm:$0xff]
      %65 = vset.pattern.permute.xlu0 0
      %66 = vperm.xlu0 %65, %v58
      %v67 = vpop.permute.xlu0 %66
      %70 = vset.pattern.permute.xlu0 0
      %71 = vperm.xlu0 %70, %v59
      %v72 = vpop.permute.xlu0 %71
      %v74 = vperm.slane %v60, 0
      %v75 = vadd.f32 %v67, %v74
      %v76 = vadd.f32 %v72, %v74
      %s77 = sld [smem:[#allocation7]]
      %v78 = vmul.f32 %v75, 0.2
      %v79 = vmul.f32 %v76, 0.2
      %v80 = vmax.f32 %v75, %v78
      %v81 = vmax.f32 %v76, %v79
      %v82 = vstv %s77
      %v83 = vmul.f32 %v82, %v80
      %v84 = vmul.f32 %v82, %v81
      %v85 = vadd.f32 %v83, 0.0
      %v86 = vadd.f32 %v84, 0.0
      %87 = vset.pattern.permute.xlu0 1
      %88 = vperm.xlu0 %87, %v58
      %v89 = vpop.permute.xlu0 %88
      %91 = vset.pattern.permute.xlu0 1
      %92 = vperm.xlu0 %91, %v59
      %v93 = vpop.permute.xlu0 %92
      %v95 = vperm.slane %v60, 1
      %v96 = vadd.f32 %v89, %v95
      %v97 = vadd.f32 %v93, %v95
      %s98 = sld [smem:[#allocation7 + $0x1]]
      %v99 = vmul.f32 %v96, 0.2
      %v100 = vmul.f32 %v97, 0.2
      %v101 = vmax.f32 %v96, %v99
      %v102 = vmax.f32 %v97, %v100
      %v103 = vstv %s98
      %v104 = vmul.f32 %v103, %v101
      %v105 = vmul.f32 %v103, %v102
      %v106 = vadd.f32 %v85, %v104
      %v107 = vadd.f32 %v86, %v105
      %108 = vset.pattern.permute.xlu0 2
      %109 = vperm.xlu0 %108, %v58
      %v110 = vpop.permute.xlu0 %109
      %112 = vset.pattern.permute.xlu0 2
      %113 = vperm.xlu0 %112, %v59
      %v114 = vpop.permute.xlu0 %113
      %v116 = vperm.slane %v60, 2
      %v117 = vadd.f32 %v110, %v116
      %v118 = vadd.f32 %v114, %v116
      %s119 = sld [smem:[#allocation7 + $0x2]]
      %v120 = vmul.f32 %v117, 0.2
      %v121 = vmul.f32 %v118, 0.2
      %v122 = vmax.f32 %v117, %v120
      %v123 = vmax.f32 %v118, %v121
      %v124 = vstv %s119
      %v125 = vmul.f32 %v124, %v122
      %v126 = vmul.f32 %v124, %v123
      %v127 = vadd.f32 %v106, %v125
      %v128 = vadd.f32 %v107, %v126
      %129 = vset.pattern.permute.xlu0 3
      %130 = vperm.xlu0 %129, %v58
      %v131 = vpop.permute.xlu0 %130
      %133 = vset.pattern.permute.xlu0 3
      %134 = vperm.xlu0 %133, %v59
      %v135 = vpop.permute.xlu0 %134
      %v137 = vperm.slane %v60, 3
      %v138 = vadd.f32 %v131, %v137
      %v139 = vadd.f32 %v135, %v137
      %s140 = sld [smem:[#allocation7 + $0x3]]
      %v141 = vmul.f32 %v138, 0.2
      %v142 = vmul.f32 %v139, 0.2
      %v143 = vmax.f32 %v138, %v141
      %v144 = vmax.f32 %v139, %v142
      %v145 = vstv %s140
      %v146 = vmul.f32 %v145, %v143
      %v147 = vmul.f32 %v145, %v144
      %v148 = vadd.f32 %v127, %v146
      %v149 = vadd.f32 %v128, %v147
      %150 = vset.pattern.permute.xlu0 4
      %151 = vperm.xlu0 %150, %v58
      %v152 = vpop.permute.xlu0 %151
      %154 = vset.pattern.permute.xlu0 4
      %155 = vperm.xlu0 %154, %v59
      %v156 = vpop.permute.xlu0 %155
      %v158 = vperm.slane %v60, 4
      %v159 = vadd.f32 %v152, %v158
      %v160 = vadd.f32 %v156, %v158
      %s161 = sld [smem:[#allocation7 + $0x4]]
      %v162 = vmul.f32 %v159, 0.2
      %v163 = vmul.f32 %v160, 0.2
      %v164 = vmax.f32 %v159, %v162
      %v165 = vmax.f32 %v160, %v163
      %v166 = vstv %s161
      %v167 = vmul.f32 %v166, %v164
      %v168 = vmul.f32 %v166, %v165
      %v169 = vadd.f32 %v148, %v167
      %v170 = vadd.f32 %v149, %v168
      %171 = vset.pattern.permute.xlu0 5
      %172 = vperm.xlu0 %171, %v58
      %v173 = vpop.permute.xlu0 %172
      %175 = vset.pattern.permute.xlu0 5
      %176 = vperm.xlu0 %175, %v59
      %v177 = vpop.permute.xlu0 %176
      %v179 = vperm.slane %v60, 5
      %v180 = vadd.f32 %v173, %v179
      %v181 = vadd.f32 %v177, %v179
      %s182 = sld [smem:[#allocation7 + $0x5]]
      %v183 = vmul.f32 %v180, 0.2
      %v184 = vmul.f32 %v181, 0.2
      %v185 = vmax.f32 %v180, %v183
      %v186 = vmax.f32 %v181, %v184
      %v187 = vstv %s182
      %v188 = vmul.f32 %v187, %v185
      %v189 = vmul.f32 %v187, %v186
      %v190 = vadd.f32 %v169, %v188
      %v191 = vadd.f32 %v170, %v189
      %192 = vset.pattern.permute.xlu0 6
      %193 = vperm.xlu0 %192, %v58
      %v194 = vpop.permute.xlu0 %193
      %196 = vset.pattern.permute.xlu0 6
      %197 = vperm.xlu0 %196, %v59
      %v198 = vpop.permute.xlu0 %197
      %v200 = vperm.slane %v60, 6
      %v201 = vadd.f32 %v194, %v200
      %v202 = vadd.f32 %v198, %v200
      %s203 = sld [smem:[#allocation7 + $0x6]]
      %v204 = vmul.f32 %v201, 0.2
      %v205 = vmul.f32 %v202, 0.2
      %v206 = vmax.f32 %v201, %v204
      %v207 = vmax.f32 %v202, %v205
      %v208 = vstv %s203
      %v209 = vmul.f32 %v208, %v206
      %v210 = vmul.f32 %v208, %v207
      %v211 = vadd.f32 %v190, %v209
      %v212 = vadd.f32 %v191, %v210
      %213 = vset.pattern.permute.xlu0 7
      %214 = vperm.xlu0 %213, %v58
      %v215 = vpop.permute.xlu0 %214
      %217 = vset.pattern.permute.xlu0 7
      %218 = vperm.xlu0 %217, %v59
      %v219 = vpop.permute.xlu0 %218
      %v221 = vperm.slane %v60, 7
      %v222 = vadd.f32 %v215, %v221
      %v223 = vadd.f32 %v219, %v221
      %s224 = sld [smem:[#allocation7 + $0x7]]
      %v225 = vmul.f32 %v222, 0.2
      %v226 = vmul.f32 %v223, 0.2
      %v227 = vmax.f32 %v222, %v225
      %v228 = vmax.f32 %v223, %v226
      %v229 = vstv %s224
      %v230 = vmul.f32 %v229, %v227
      %v231 = vmul.f32 %v229, %v228
      %v232 = vadd.f32 %v211, %v230
      %v233 = vadd.f32 %v212, %v231
      %234 = vset.pattern.permute.xlu0 8
      %235 = vperm.xlu0 %234, %v58
      %v236 = vpop.permute.xlu0 %235
      %238 = vset.pattern.permute.xlu0 8
      %239 = vperm.xlu0 %238, %v59
      %v240 = vpop.permute.xlu0 %239
      %v242 = vperm.slane %v61, 0
      %v243 = vadd.f32 %v236, %v242
      %v244 = vadd.f32 %v240, %v242
      %s245 = sld [smem:[#allocation7 + $0x8]]
      %v246 = vmul.f32 %v243, 0.2
      %v247 = vmul.f32 %v244, 0.2
      %v248 = vmax.f32 %v243, %v246
      %v249 = vmax.f32 %v244, %v247
      %v250 = vstv %s245
      %v251 = vmul.f32 %v250, %v248
      %v252 = vmul.f32 %v250, %v249
      %v253 = vadd.f32 %v232, %v251
      %v254 = vadd.f32 %v233, %v252
      %255 = vset.pattern.permute.xlu0 9
      %256 = vperm.xlu0 %255, %v58
      %v257 = vpop.permute.xlu0 %256
      %259 = vset.pattern.permute.xlu0 9
      %260 = vperm.xlu0 %259, %v59
      %v261 = vpop.permute.xlu0 %260
      %v263 = vperm.slane %v61, 1
      %v264 = vadd.f32 %v257, %v263
      %v265 = vadd.f32 %v261, %v263
      %s266 = sld [smem:[#allocation7 + $0x9]]
      %v267 = vmul.f32 %v264, 0.2
      %v268 = vmul.f32 %v265, 0.2
      %v269 = vmax.f32 %v264, %v267
      %v270 = vmax.f32 %v265, %v268
      %v271 = vstv %s266
      %v272 = vmul.f32 %v271, %v269
      %v273 = vmul.f32 %v271, %v270
      %v274 = vadd.f32 %v253, %v272
      %v275 = vadd.f32 %v254, %v273
      %276 = vset.pattern.permute.xlu0 10
      %277 = vperm.xlu0 %276, %v58
      %v278 = vpop.permute.xlu0 %277
      %280 = vset.pattern.permute.xlu0 10
      %281 = vperm.xlu0 %280, %v59
      %v282 = vpop.permute.xlu0 %281
      %v284 = vperm.slane %v61, 2
      %v285 = vadd.f32 %v278, %v284
      %v286 = vadd.f32 %v282, %v284
      %s287 = sld [smem:[#allocation7 + $0xa]]
      %v288 = vmul.f32 %v285, 0.2
      %v289 = vmul.f32 %v286, 0.2
      %v290 = vmax.f32 %v285, %v288
      %v291 = vmax.f32 %v286, %v289
      %v292 = vstv %s287
      %v293 = vmul.f32 %v292, %v290
      %v294 = vmul.f32 %v292, %v291
      %v295 = vadd.f32 %v274, %v293
      %v296 = vadd.f32 %v275, %v294
      %297 = vset.pattern.permute.xlu0 11
      %298 = vperm.xlu0 %297, %v58
      %v299 = vpop.permute.xlu0 %298
      %301 = vset.pattern.permute.xlu0 11
      %302 = vperm.xlu0 %301, %v59
      %v303 = vpop.permute.xlu0 %302
      %v305 = vperm.slane %v61, 3
      %v306 = vadd.f32 %v299, %v305
      %v307 = vadd.f32 %v303, %v305
      %s308 = sld [smem:[#allocation7 + $0xb]]
      %v309 = vmul.f32 %v306, 0.2
      %v310 = vmul.f32 %v307, 0.2
      %v311 = vmax.f32 %v306, %v309
      %v312 = vmax.f32 %v307, %v310
      %v313 = vstv %s308
      %v314 = vmul.f32 %v313, %v311
      %v315 = vmul.f32 %v313, %v312
      %v316 = vadd.f32 %v295, %v314
      %v317 = vadd.f32 %v296, %v315
      %318 = vset.pattern.permute.xlu0 12
      %319 = vperm.xlu0 %318, %v58
      %v320 = vpop.permute.xlu0 %319
      %322 = vset.pattern.permute.xlu0 12
      %323 = vperm.xlu0 %322, %v59
      %v324 = vpop.permute.xlu0 %323
      %v326 = vperm.slane %v61, 4
      %v327 = vadd.f32 %v320, %v326
      %v328 = vadd.f32 %v324, %v326
      %s329 = sld [smem:[#allocation7 + $0xc]]
      %v330 = vmul.f32 %v327, 0.2
      %v331 = vmul.f32 %v328, 0.2
      %v332 = vmax.f32 %v327, %v330
      %v333 = vmax.f32 %v328, %v331
      %v334 = vstv %s329
      %v335 = vmul.f32 %v334, %v332
      %v336 = vmul.f32 %v334, %v333
      %v337 = vadd.f32 %v316, %v335
      %v338 = vadd.f32 %v317, %v336
      %339 = vset.pattern.permute.xlu0 13
      %340 = vperm.xlu0 %339, %v58
      %v341 = vpop.permute.xlu0 %340
      %343 = vset.pattern.permute.xlu0 13
      %344 = vperm.xlu0 %343, %v59
      %v345 = vpop.permute.xlu0 %344
      %v347 = vperm.slane %v61, 5
      %v348 = vadd.f32 %v341, %v347
      %v349 = vadd.f32 %v345, %v347
      %s350 = sld [smem:[#allocation7 + $0xd]]
      %v351 = vmul.f32 %v348, 0.2
      %v352 = vmul.f32 %v349, 0.2
      %v353 = vmax.f32 %v348, %v351
      %v354 = vmax.f32 %v349, %v352
      %v355 = vstv %s350
      %v356 = vmul.f32 %v355, %v353
      %v357 = vmul.f32 %v355, %v354
      %v358 = vadd.f32 %v337, %v356
      %v359 = vadd.f32 %v338, %v357
      %360 = vset.pattern.permute.xlu0 14
      %361 = vperm.xlu0 %360, %v58
      %v362 = vpop.permute.xlu0 %361
      %364 = vset.pattern.permute.xlu0 14
      %365 = vperm.xlu0 %364, %v59
      %v366 = vpop.permute.xlu0 %365
      %v368 = vperm.slane %v61, 6
      %v369 = vadd.f32 %v362, %v368
      %v370 = vadd.f32 %v366, %v368
      %s371 = sld [smem:[#allocation7 + $0xe]]
      %v372 = vmul.f32 %v369, 0.2
      %v373 = vmul.f32 %v370, 0.2
      %v374 = vmax.f32 %v369, %v372
      %v375 = vmax.f32 %v370, %v373
      %v376 = vstv %s371
      %v377 = vmul.f32 %v376, %v374
      %v378 = vmul.f32 %v376, %v375
      %v379 = vadd.f32 %v358, %v377
      %v380 = vadd.f32 %v359, %v378
      %381 = vset.pattern.permute.xlu0 15
      %382 = vperm.xlu0 %381, %v58
      %v383 = vpop.permute.xlu0 %382
      %385 = vset.pattern.permute.xlu0 15
      %386 = vperm.xlu0 %385, %v59
      %v387 = vpop.permute.xlu0 %386
      %v389 = vperm.slane %v61, 7
      %v390 = vadd.f32 %v383, %v389
      %v391 = vadd.f32 %v387, %v389
      %s392 = sld [smem:[#allocation7 + $0xf]]
      %v393 = vmul.f32 %v390, 0.2
      %v394 = vmul.f32 %v391, 0.2
      %v395 = vmax.f32 %v390, %v393
      %v396 = vmax.f32 %v391, %v394
      %v397 = vstv %s392
      %v398 = vmul.f32 %v397, %v395
      %v399 = vmul.f32 %v397, %v396
      %v400 = vadd.f32 %v379, %v398
      %v401 = vadd.f32 %v380, %v399
      %402 = vset.pattern.permute.xlu0 16
      %403 = vperm.xlu0 %402, %v58
      %v404 = vpop.permute.xlu0 %403
      %406 = vset.pattern.permute.xlu0 16
      %407 = vperm.xlu0 %406, %v59
      %v408 = vpop.permute.xlu0 %407
      %v410 = vperm.slane %v62, 0
      %v411 = vadd.f32 %v404, %v410
      %v412 = vadd.f32 %v408, %v410
      %s413 = sld [smem:[#allocation7 + $0x10]]
      %v414 = vmul.f32 %v411, 0.2
      %v415 = vmul.f32 %v412, 0.2
      %v416 = vmax.f32 %v411, %v414
      %v417 = vmax.f32 %v412, %v415
      %v418 = vstv %s413
      %v419 = vmul.f32 %v418, %v416
      %v420 = vmul.f32 %v418, %v417
      %v421 = vadd.f32 %v400, %v419
      %v422 = vadd.f32 %v401, %v420
      %423 = vset.pattern.permute.xlu0 17
      %424 = vperm.xlu0 %423, %v58
      %v425 = vpop.permute.xlu0 %424
      %427 = vset.pattern.permute.xlu0 17
      %428 = vperm.xlu0 %427, %v59
      %v429 = vpop.permute.xlu0 %428
      %v431 = vperm.slane %v62, 1
      %v432 = vadd.f32 %v425, %v431
      %v433 = vadd.f32 %v429, %v431
      %s434 = sld [smem:[#allocation7 + $0x11]]
      %v435 = vmul.f32 %v432, 0.2
      %v436 = vmul.f32 %v433, 0.2
      %v437 = vmax.f32 %v432, %v435
      %v438 = vmax.f32 %v433, %v436
      %v439 = vstv %s434
      %v440 = vmul.f32 %v439, %v437
      %v441 = vmul.f32 %v439, %v438
      %v442 = vadd.f32 %v421, %v440
      %v443 = vadd.f32 %v422, %v441
      %444 = vset.pattern.permute.xlu0 18
      %445 = vperm.xlu0 %444, %v58
      %v446 = vpop.permute.xlu0 %445
      %448 = vset.pattern.permute.xlu0 18
      %449 = vperm.xlu0 %448, %v59
      %v450 = vpop.permute.xlu0 %449
      %v452 = vperm.slane %v62, 2
      %v453 = vadd.f32 %v446, %v452
      %v454 = vadd.f32 %v450, %v452
      %s455 = sld [smem:[#allocation7 + $0x12]]
      %v456 = vmul.f32 %v453, 0.2
      %v457 = vmul.f32 %v454, 0.2
      %v458 = vmax.f32 %v453, %v456
      %v459 = vmax.f32 %v454, %v457
      %v460 = vstv %s455
      %v461 = vmul.f32 %v460, %v458
      %v462 = vmul.f32 %v460, %v459
      %v463 = vadd.f32 %v442, %v461
      %v464 = vadd.f32 %v443, %v462
      %465 = vset.pattern.permute.xlu0 19
      %466 = vperm.xlu0 %465, %v58
      %v467 = vpop.permute.xlu0 %466
      %469 = vset.pattern.permute.xlu0 19
      %470 = vperm.xlu0 %469, %v59
      %v471 = vpop.permute.xlu0 %470
      %v473 = vperm.slane %v62, 3
      %v474 = vadd.f32 %v467, %v473
      %v475 = vadd.f32 %v471, %v473
      %s476 = sld [smem:[#allocation7 + $0x13]]
      %v477 = vmul.f32 %v474, 0.2
      %v478 = vmul.f32 %v475, 0.2
      %v479 = vmax.f32 %v474, %v477
      %v480 = vmax.f32 %v475, %v478
      %v481 = vstv %s476
      %v482 = vmul.f32 %v481, %v479
      %v483 = vmul.f32 %v481, %v480
      %v484 = vadd.f32 %v463, %v482
      %v485 = vadd.f32 %v464, %v483
      %486 = vset.pattern.permute.xlu0 20
      %487 = vperm.xlu0 %486, %v58
      %v488 = vpop.permute.xlu0 %487
      %490 = vset.pattern.permute.xlu0 20
      %491 = vperm.xlu0 %490, %v59
      %v492 = vpop.permute.xlu0 %491
      %v494 = vperm.slane %v62, 4
      %v495 = vadd.f32 %v488, %v494
      %v496 = vadd.f32 %v492, %v494
      %s497 = sld [smem:[#allocation7 + $0x14]]
      %v498 = vmul.f32 %v495, 0.2
      %v499 = vmul.f32 %v496, 0.2
      %v500 = vmax.f32 %v495, %v498
      %v501 = vmax.f32 %v496, %v499
      %v502 = vstv %s497
      %v503 = vmul.f32 %v502, %v500
      %v504 = vmul.f32 %v502, %v501
      %v505 = vadd.f32 %v484, %v503
      %v506 = vadd.f32 %v485, %v504
      %507 = vset.pattern.permute.xlu0 21
      %508 = vperm.xlu0 %507, %v58
      %v509 = vpop.permute.xlu0 %508
      %511 = vset.pattern.permute.xlu0 21
      %512 = vperm.xlu0 %511, %v59
      %v513 = vpop.permute.xlu0 %512
      %v515 = vperm.slane %v62, 5
      %v516 = vadd.f32 %v509, %v515
      %v517 = vadd.f32 %v513, %v515
      %s518 = sld [smem:[#allocation7 + $0x15]]
      %v519 = vmul.f32 %v516, 0.2
      %v520 = vmul.f32 %v517, 0.2
      %v521 = vmax.f32 %v516, %v519
      %v522 = vmax.f32 %v517, %v520
      %v523 = vstv %s518
      %v524 = vmul.f32 %v523, %v521
      %v525 = vmul.f32 %v523, %v522
      %v526 = vadd.f32 %v505, %v524
      %v527 = vadd.f32 %v506, %v525
      %528 = vset.pattern.permute.xlu0 22
      %529 = vperm.xlu0 %528, %v58
      %v530 = vpop.permute.xlu0 %529
      %532 = vset.pattern.permute.xlu0 22
      %533 = vperm.xlu0 %532, %v59
      %v534 = vpop.permute.xlu0 %533
      %v536 = vperm.slane %v62, 6
      %v537 = vadd.f32 %v530, %v536
      %v538 = vadd.f32 %v534, %v536
      %s539 = sld [smem:[#allocation7 + $0x16]]
      %v540 = vmul.f32 %v537, 0.2
      %v541 = vmul.f32 %v538, 0.2
      %v542 = vmax.f32 %v537, %v540
      %v543 = vmax.f32 %v538, %v541
      %v544 = vstv %s539
      %v545 = vmul.f32 %v544, %v542
      %v546 = vmul.f32 %v544, %v543
      %v547 = vadd.f32 %v526, %v545
      %v548 = vadd.f32 %v527, %v546
      %549 = vset.pattern.permute.xlu0 23
      %550 = vperm.xlu0 %549, %v58
      %v551 = vpop.permute.xlu0 %550
      %553 = vset.pattern.permute.xlu0 23
      %554 = vperm.xlu0 %553, %v59
      %v555 = vpop.permute.xlu0 %554
      %v557 = vperm.slane %v62, 7
      %v558 = vadd.f32 %v551, %v557
      %v559 = vadd.f32 %v555, %v557
      %s560 = sld [smem:[#allocation7 + $0x17]]
      %v561 = vmul.f32 %v558, 0.2
      %v562 = vmul.f32 %v559, 0.2
      %v563 = vmax.f32 %v558, %v561
      %v564 = vmax.f32 %v559, %v562
      %v565 = vstv %s560
      %v566 = vmul.f32 %v565, %v563
      %v567 = vmul.f32 %v565, %v564
      %v568 = vadd.f32 %v547, %v566
      %v569 = vadd.f32 %v548, %v567
      %570 = vset.pattern.permute.xlu0 24
      %571 = vperm.xlu0 %570, %v58
      %v572 = vpop.permute.xlu0 %571
      %574 = vset.pattern.permute.xlu0 24
      %575 = vperm.xlu0 %574, %v59
      %v576 = vpop.permute.xlu0 %575
      %v578 = vperm.slane %v63, 0
      %v579 = vadd.f32 %v572, %v578
      %v580 = vadd.f32 %v576, %v578
      %s581 = sld [smem:[#allocation7 + $0x18]]
      %v582 = vmul.f32 %v579, 0.2
      %v583 = vmul.f32 %v580, 0.2
      %v584 = vmax.f32 %v579, %v582
      %v585 = vmax.f32 %v580, %v583
      %v586 = vstv %s581
      %v587 = vmul.f32 %v586, %v584
      %v588 = vmul.f32 %v586, %v585
      %v589 = vadd.f32 %v568, %v587
      %v590 = vadd.f32 %v569, %v588
      %591 = vset.pattern.permute.xlu0 25
      %592 = vperm.xlu0 %591, %v58
      %v593 = vpop.permute.xlu0 %592
      %595 = vset.pattern.permute.xlu0 25
      %596 = vperm.xlu0 %595, %v59
      %v597 = vpop.permute.xlu0 %596
      %v599 = vperm.slane %v63, 1
      %v600 = vadd.f32 %v593, %v599
      %v601 = vadd.f32 %v597, %v599
      %s602 = sld [smem:[#allocation7 + $0x19]]
      %v603 = vmul.f32 %v600, 0.2
      %v604 = vmul.f32 %v601, 0.2
      %v605 = vmax.f32 %v600, %v603
      %v606 = vmax.f32 %v601, %v604
      %v607 = vstv %s602
      %v608 = vmul.f32 %v607, %v605
      %v609 = vmul.f32 %v607, %v606
      %v610 = vadd.f32 %v589, %v608
      %v611 = vadd.f32 %v590, %v609
      %612 = vset.pattern.permute.xlu0 26
      %613 = vperm.xlu0 %612, %v58
      %v614 = vpop.permute.xlu0 %613
      %616 = vset.pattern.permute.xlu0 26
      %617 = vperm.xlu0 %616, %v59
      %v618 = vpop.permute.xlu0 %617
      %v620 = vperm.slane %v63, 2
      %v621 = vadd.f32 %v614, %v620
      %v622 = vadd.f32 %v618, %v620
      %s623 = sld [smem:[#allocation7 + $0x1a]]
      %v624 = vmul.f32 %v621, 0.2
      %v625 = vmul.f32 %v622, 0.2
      %v626 = vmax.f32 %v621, %v624
      %v627 = vmax.f32 %v622, %v625
      %v628 = vstv %s623
      %v629 = vmul.f32 %v628, %v626
      %v630 = vmul.f32 %v628, %v627
      %v631 = vadd.f32 %v610, %v629
      %v632 = vadd.f32 %v611, %v630
      %633 = vset.pattern.permute.xlu0 27
      %634 = vperm.xlu0 %633, %v58
      %v635 = vpop.permute.xlu0 %634
      %637 = vset.pattern.permute.xlu0 27
      %638 = vperm.xlu0 %637, %v59
      %v639 = vpop.permute.xlu0 %638
      %v641 = vperm.slane %v63, 3
      %v642 = vadd.f32 %v635, %v641
      %v643 = vadd.f32 %v639, %v641
      %s644 = sld [smem:[#allocation7 + $0x1b]]
      %v645 = vmul.f32 %v642, 0.2
      %v646 = vmul.f32 %v643, 0.2
      %v647 = vmax.f32 %v642, %v645
      %v648 = vmax.f32 %v643, %v646
      %v649 = vstv %s644
      %v650 = vmul.f32 %v649, %v647
      %v651 = vmul.f32 %v649, %v648
      %v652 = vadd.f32 %v631, %v650
      %v653 = vadd.f32 %v632, %v651
      %654 = vset.pattern.permute.xlu0 28
      %655 = vperm.xlu0 %654, %v58
      %v656 = vpop.permute.xlu0 %655
      %658 = vset.pattern.permute.xlu0 28
      %659 = vperm.xlu0 %658, %v59
      %v660 = vpop.permute.xlu0 %659
      %v662 = vperm.slane %v63, 4
      %v663 = vadd.f32 %v656, %v662
      %v664 = vadd.f32 %v660, %v662
      %s665 = sld [smem:[#allocation7 + $0x1c]]
      %v666 = vmul.f32 %v663, 0.2
      %v667 = vmul.f32 %v664, 0.2
      %v668 = vmax.f32 %v663, %v666
      %v669 = vmax.f32 %v664, %v667
      %v670 = vstv %s665
      %v671 = vmul.f32 %v670, %v668
      %v672 = vmul.f32 %v670, %v669
      %v673 = vadd.f32 %v652, %v671
      %v674 = vadd.f32 %v653, %v672
      %675 = vset.pattern.permute.xlu0 29
      %676 = vperm.xlu0 %675, %v58
      %v677 = vpop.permute.xlu0 %676
      %679 = vset.pattern.permute.xlu0 29
      %680 = vperm.xlu0 %679, %v59
      %v681 = vpop.permute.xlu0 %680
      %v683 = vperm.slane %v63, 5
      %v684 = vadd.f32 %v677, %v683
      %v685 = vadd.f32 %v681, %v683
      %s686 = sld [smem:[#allocation7 + $0x1d]]
      %v687 = vmul.f32 %v684, 0.2
      %v688 = vmul.f32 %v685, 0.2
      %v689 = vmax.f32 %v684, %v687
      %v690 = vmax.f32 %v685, %v688
      %v691 = vstv %s686
      %v692 = vmul.f32 %v691, %v689
      %v693 = vmul.f32 %v691, %v690
      %v694 = vadd.f32 %v673, %v692
      %v695 = vadd.f32 %v674, %v693
      %696 = vset.pattern.permute.xlu0 30
      %697 = vperm.xlu0 %696, %v58
      %v698 = vpop.permute.xlu0 %697
      %700 = vset.pattern.permute.xlu0 30
      %701 = vperm.xlu0 %700, %v59
      %v702 = vpop.permute.xlu0 %701
      %v704 = vperm.slane %v63, 6
      %v705 = vadd.f32 %v698, %v704
      %v706 = vadd.f32 %v702, %v704
      %s707 = sld [smem:[#allocation7 + $0x1e]]
      %v708 = vmul.f32 %v705, 0.2
      %v709 = vmul.f32 %v706, 0.2
      %v710 = vmax.f32 %v705, %v708
      %v711 = vmax.f32 %v706, %v709
      %v712 = vstv %s707
      %v713 = vmul.f32 %v712, %v710
      %v714 = vmul.f32 %v712, %v711
      %v715 = vadd.f32 %v694, %v713
      %v716 = vadd.f32 %v695, %v714
      %717 = vset.pattern.permute.xlu0 31
      %718 = vperm.xlu0 %717, %v58
      %v719 = vpop.permute.xlu0 %718
      %721 = vset.pattern.permute.xlu0 31
      %722 = vperm.xlu0 %721, %v59
      %v723 = vpop.permute.xlu0 %722
      %v725 = vperm.slane %v63, 7
      %v726 = vadd.f32 %v719, %v725
      %v727 = vadd.f32 %v723, %v725
      %s728 = sld [smem:[#allocation7 + $0x1f]]
      %v729 = vmul.f32 %v726, 0.2
      %v730 = vmul.f32 %v727, 0.2
      %v731 = vmax.f32 %v726, %v729
      %v732 = vmax.f32 %v727, %v730
      %v733 = vstv %s728
      %v734 = vmul.f32 %v733, %v731
      %v735 = vmul.f32 %v733, %v732
      %v736 = vadd.f32 %v715, %v734
      %v737 = vadd.f32 %v716, %v735
      %v738 = vsel %vm56, %v736, -1e+30
      %v739 = vsel %vm57, %v737, -1e+30
      %v740 = vld [vmem:[#allocation2] sm:$0xff]
      %v741 = vld [vmem:[#allocation2 + $0x8] sm:$0xff]
      %vm742 = vcmask 130048
      %v743 = vsel %vm742, %v738, -inf
      %744 = vmax.xlane.f32.xlu0 %v743
      %v745 = vpop.xlane.xlu0 %744
      %v746 = vsel %vm742, %v739, -inf
      %747 = vmax.xlane.f32.xlu0 %v746
      %v748 = vpop.xlane.xlu0 %747
      %v749 = vmax.f32 %v740, %v745
      %v750 = vmax.f32 %v741, %v748
      %v751 = vsub.f32 %v740, %v749
      %v752 = vsub.f32 %v741, %v750
      %v753 = vmul.f32 %v751, 1.442695
      %v754 = vpow.pop %v753
      %v755 = vmul.f32 %v752, 1.442695
      %v756 = vpow.pop %v755
      %758 = vset.pattern.permute.xlu0 0
      %759 = vperm.xlu0 %758, %v749
      %v760 = vpop.permute.xlu0 %759
      %763 = vset.pattern.permute.xlu0 0
      %764 = vperm.xlu0 %763, %v750
      %v765 = vpop.permute.xlu0 %764
      %v767 = vsub.f32 %v738, %v760
      %v768 = vsub.f32 %v739, %v765
      %v769 = vmul.f32 %v767, 1.442695
      %v770 = vpow.pop %v769
      %v771 = vmul.f32 %v768, 1.442695
      %v772 = vpow.pop %v771
      %v773 = vsel %vm56, %v770, 0.0
      %v774 = vsel %vm57, %v772, 0.0
      %v775 = vld [vmem:[#allocation3] sm:$0xff]
      %v776 = vld [vmem:[#allocation3 + $0x8] sm:$0xff]
      %v777 = vmul.f32 %v754, %v775
      %v778 = vmul.f32 %v756, %v776
      %v779 = vsel %vm742, %v773, 0.0
      %780 = vadd.xlane.f32.xlu0 %v779
      %v781 = vpop.xlane.xlu0 %780
      %v782 = vsel %vm742, %v774, 0.0
      %783 = vadd.xlane.f32.xlu0 %v782
      %v784 = vpop.xlane.xlu0 %783
      %v785 = vadd.f32 %v777, %v781
      %v786 = vadd.f32 %v778, %v784
      %vm787 = vcmask 7168
      %788 = vst.msk [vmem:[#allocation3] sm:$0xff] %vm787, %v785
      %789 = vst.msk [vmem:[#allocation3 + $0x8] sm:$0xff] %vm787, %v786
      %v790 = vld [vmem:[#allocation4] sm:$0xff]
      %v791 = vld [vmem:[#allocation4 + $0x8] sm:$0xff]
      %793 = vset.pattern.permute.xlu0 0
      %794 = vperm.xlu0 %793, %v754
      %v795 = vpop.permute.xlu0 %794
      %798 = vset.pattern.permute.xlu0 0
      %799 = vperm.xlu0 %798, %v756
      %v800 = vpop.permute.xlu0 %799
      %v802 = vmul.f32 %v795, %v790
      %v803 = vmul.f32 %v800, %v791
      %v805 = vsel %vm742, %v773, 0
      %v808 = vsel %vm742, %v774, 0
      %v811 = vsel %vm742, %v60, 0
      %v814 = vsel %vm742, %v61, 0
      %v817 = vsel %vm742, %v62, 0
      %v820 = vsel %vm742, %v63, 0
      %822 = vmatpush.xpose.msra.mxu0 0.0
      %823 = vmatpush.xpose.msra.mxu0 0.0
      %824 = vmatpush.xpose.msra.mxu0 0.0
      %825 = vmatpush.xpose.msra.mxu0 0.0
      %826 = vmatpush.xpose.msra.mxu0 0.0
      %827 = vmatpush.xpose.msra.mxu0 0.0
      %828 = vmatpush.xpose.msra.mxu0 0.0
      %829 = vmatpush.xpose.msra.mxu0 0.0
      %830 = vmatpush.xpose.msra.mxu0 0.0
      %831 = vmatpush.xpose.msra.mxu0 0.0
      %832 = vmatpush.xpose.msra.mxu0 0.0
      %833 = vmatpush.xpose.msra.mxu0 0.0
      %834 = vmatpush.xpose.msra.mxu0 %v820
      %835 = vmatpush.xpose.msra.mxu0 %v817
      %836 = vmatpush.xpose.msra.mxu0 %v814
      %837 = vmatpush.xpose.msra.mxu0 %v811
      %838 = vmatmul.f32.gmra.mxu0 %v805
      %v839 = vpop.f32.mrf.mxu0
      %v840 = vadd.f32 0.0, %v839
      %841 = vmatmul.f32.gmra.mxu0 %v808
      %v842 = vpop.f32.mrf.mxu0
      %v843 = vadd.f32 0.0, %v842
      %844 = vdwg.mxu0
      %v845 = vadd.f32 %v802, %v840
      %v846 = vadd.f32 %v803, %v843
      %vm847 = vcmask 261120
      %848 = vst.msk [vmem:[#allocation4] sm:$0xff] %vm847, %v845
      %849 = vst.msk [vmem:[#allocation4 + $0x8] sm:$0xff] %vm847, %v846
      %850 = vst.msk [vmem:[#allocation2] sm:$0xff] %vm787, %v749
      %851 = vst.msk [vmem:[#allocation2 + $0x8] sm:$0xff] %vm787, %v750
    $region29: #{encoder_forward.7} parent=1 // pred_fallthru
      _
    // Predicated region
    $region30: #{encoder_forward.7} parent=1 // pred_check
      %p852 = pneg %p32
    $region31: #{encoder_forward.7} parent=1 // pred_check_branch
      %854 = sbr.rel (%p852) target = $region33
    $region32: #{encoder_forward.7} parent=1 // pred_region
      %v855 = vld [vmem:[#allocation3] sm:$0xff]
      %v856 = vld [vmem:[#allocation3 + $0x8] sm:$0xff]
      %v857 = vmax.f32 %v855, 1e-12
      %v858 = vmax.f32 %v856, 1e-12
      %v859 = vrcp.pop %v857
      %v860 = vrcp.pop %v858
      %v861 = vld [vmem:[#allocation4] sm:$0xff]
      %v862 = vld [vmem:[#allocation4 + $0x8] sm:$0xff]
      %864 = vset.pattern.permute.xlu0 0
      %865 = vperm.xlu0 %864, %v859
      %v866 = vpop.permute.xlu0 %865
      %869 = vset.pattern.permute.xlu0 0
      %870 = vperm.xlu0 %869, %v860
      %v871 = vpop.permute.xlu0 %870
      %v873 = vmul.f32 %v861, %v866
      %v874 = vmul.f32 %v862, %v871
      %vm875 = vcmask 261120
      %876 = vst.msk [vmem:[%s5] sm:$0xff] %vm875, %v873
      %877 = vst.msk [vmem:[%s5 + $0x8] sm:$0xff] %vm875, %v874
    $region33: #{encoder_forward.7} parent=1 // pred_fallthru
      _
    // Predicated region
    $region34: #{encoder_forward.7} parent=1 // pred_check
      _
    $region35: #{encoder_forward.7} parent=1 // pred_check_branch
      %879 = sbr.rel (0) target = $region37
    $region36: #{encoder_forward.7} parent=1 // pred_region
      _
    $region37: #{encoder_forward.7} parent=1 // pred_fallthru
      _
    // Predicated region
    $region38: #{encoder_forward.7} parent=1 // pred_check
      _
    $region39: #{encoder_forward.7} parent=1 // pred_check_branch
      %881 = sbr.rel (0) target = $region41
    $region40: #{encoder_forward.7} parent=1 // pred_region
      _
    $region41: #{encoder_forward.7} parent=1 // pred_fallthru
      _
    %882 = vsyncpa [#allocation8], 1

// kernel: encoder_forward.5
$region0: #{encoder_forward.5}
  #allocation0 [shape = 'u32[]', space=smem, size = 0x4, offset = 0x4, fixed_abs, tag = 'smem constant byte address 0x4 - core index']
  #allocation1 [shape = 'u32[72,128]{1,0:T(1,128)}', space=vmem, size = 0x9000, scoped, tag = 'internal scratch']
  #allocation2 [shape = 'f32[2,16,1]{2,1,0:T(8,128)}', space=vmem, size = 0x4000, scoped, tag = 'scratch operand']
  #allocation3 [shape = 'f32[2,16,1]{2,1,0:T(8,128)}', space=vmem, size = 0x4000, scoped, tag = 'scratch operand']
  #allocation4 [shape = 'f32[2,16,16]{2,1,0:T(8,128)}', space=vmem, size = 0x4000, scoped, tag = 'scratch operand']
  #allocation5 [shape = 's32[1]{0}', space=sflag, size = 0x4, scoped, tag = 'scoped memory for encoder_forward.5']
  #allocation6 [shape = 's32[1,1]{1,0:T(1,128)S(6)}', space=smem, size = 0x200, scoped, tag = 'prefetched SMEM operand 0']
  %s0 = inlined_call_operand.<no memory space> [shape: s32[1,1], index: 0, kind: input, shape index: {}]
  %s1 = inlined_call_operand.vmem [shape: f32[2,16,16], index: 1, kind: input, shape index: {}]
  %s2 = inlined_call_operand.vmem [shape: f32[2,16,16], index: 2, kind: input, shape index: {}]
  %s3 = inlined_call_operand.vmem [shape: f32[16], index: 3, kind: input, shape index: {}]
  %s4 = inlined_call_operand.vmem [shape: bf16[16,16], index: 4, kind: input, shape index: {}]
  %s5 = inlined_call_operand.vmem [shape: f32[2,16,16], index: 5, kind: output, shape index: {}]
  %s6 = sld [smem:[#allocation0]]
  $region42: #{encoder_forward.5} parent=0
    _
  %s8 = ssub.s32 1, %s6
  %s9 = scalar_select 0, %s8, %s6
  %10 = sst [smem:[#allocation6]] %s0
  $region1: #{encoder_forward.5} parent=0
    #allocation7 [shape = 'u8[512]{0}', space=smem, size = 0x200, scoped, tag = 'input window, operand 3, single buffered']
    #allocation8 [shape = 's32[1]{0}', space=sflag, size = 0x4, scoped, tag = 'scoped memory for encoder_forward.5']
    %11 = vsyncpa [#allocation8], 0
    // Predicated region
    $region2: #{encoder_forward.5} parent=1 // pred_check
      _
    $region3: #{encoder_forward.5} parent=1 // pred_check_branch
      %13 = sbr.rel (0) target = $region5
    $region4: #{encoder_forward.5} parent=1 // pred_region
      _
    $region5: #{encoder_forward.5} parent=1 // pred_fallthru
      _
    // Predicated region
    $region6: #{encoder_forward.5} parent=1 // pred_check
      _
    $region7: #{encoder_forward.5} parent=1 // pred_check_branch
      %15 = sbr.rel (0) target = $region9
    $region8: #{encoder_forward.5} parent=1 // pred_region
      _
    $region9: #{encoder_forward.5} parent=1 // pred_fallthru
      _
    // Predicated region
    $region10: #{encoder_forward.5} parent=1 // pred_check
      _
    $region11: #{encoder_forward.5} parent=1 // pred_check_branch
      %17 = sbr.rel (0) target = $region13
    $region12: #{encoder_forward.5} parent=1 // pred_region
      %19 = vsyncadd [#allocation8], 0
      %s21 = sshll.u32 %s3, 4
      %s22 = int_to_ptr.vmem [resolvable:$true] %s21
      %24 = dma.vmem_to_smem %s22, 16, [#allocation7], [#allocation8]
    $region13: #{encoder_forward.5} parent=1 // pred_fallthru
      _
    // Predicated region
    $region14: #{encoder_forward.5} parent=1 // pred_check
      _
    $region15: #{encoder_forward.5} parent=1 // pred_check_branch
      %26 = sbr.rel (0) target = $region17
    $region16: #{encoder_forward.5} parent=1 // pred_region
      _
    $region17: #{encoder_forward.5} parent=1 // pred_fallthru
      _
    // Predicated region
    $region18: #{encoder_forward.5} parent=1 // pred_check
      _
    $region19: #{encoder_forward.5} parent=1 // pred_check_branch
      %28 = sbr.rel (0) target = $region21
    $region20: #{encoder_forward.5} parent=1 // pred_region
      %30 = dma.done [#allocation8], 16
    $region21: #{encoder_forward.5} parent=1 // pred_fallthru
      _
    %31 = sfence
    %p32 = scmp.eq.s32.totalorder 0, 0
    // Predicated region
    $region22: #{encoder_forward.5} parent=1 // pred_check
      %p33 = pneg %p32
    $region23: #{encoder_forward.5} parent=1 // pred_check_branch
      %35 = sbr.rel (%p33) target = $region25
    $region24: #{encoder_forward.5} parent=1 // pred_region
      %vm36 = vcmask 7168
      %37 = vst.msk [vmem:[#allocation2] sm:$0xff] %vm36, -1e+30
      %38 = vst.msk [vmem:[#allocation2 + $0x8] sm:$0xff] %vm36, -1e+30
      %39 = vst.msk [vmem:[#allocation2 + $0x10] sm:$0xff] %vm36, -1e+30
      %40 = vst.msk [vmem:[#allocation2 + $0x18] sm:$0xff] %vm36, -1e+30
      %41 = vst.msk [vmem:[#allocation3] sm:$0xff] %vm36, 0.0
      %42 = vst.msk [vmem:[#allocation3 + $0x8] sm:$0xff] %vm36, 0.0
      %43 = vst.msk [vmem:[#allocation3 + $0x10] sm:$0xff] %vm36, 0.0
      %44 = vst.msk [vmem:[#allocation3 + $0x18] sm:$0xff] %vm36, 0.0
      %vm45 = vcmask 130048
      %46 = vst.msk [vmem:[#allocation4] sm:$0xff] %vm45, 0.0
      %47 = vst.msk [vmem:[#allocation4 + $0x8] sm:$0xff] %vm45, 0.0
      %48 = vst.msk [vmem:[#allocation4 + $0x10] sm:$0xff] %vm45, 0.0
      %49 = vst.msk [vmem:[#allocation4 + $0x18] sm:$0xff] %vm45, 0.0
    $region25: #{encoder_forward.5} parent=1 // pred_fallthru
      _
    %s50 = sadd.s32 0, 0
    %s51 = smul.u32 %s50, 128
    %s52 = sadd.s32 %s51, 0
    %s53 = sld [smem:[#allocation6 + %s52]]
    %p54 = scmp.gt.s32.totalorder %s53, 0
    // Predicated region
    $region26: #{encoder_forward.5} parent=1 // pred_check
      %p55 = pneg %p54
    $region27: #{encoder_forward.5} parent=1 // pred_check_branch
      %57 = sbr.rel (%p55) target = $region29
    $region28: #{encoder_forward.5} parent=1 // pred_region
      %v58 = vld [vmem:[%s4] sm:$0xf]
      %v59 = vld [vmem:[%s4 + $0x4] sm:$0xf]
      %v60 = vunpack.c.l.bf16 %v58
      %v61 = vunpack.c.l.bf16 %v59
      %vm62 = vcmp.gt.f32.partialorder %v60, 0.0
      %vm63 = vcmp.gt.f32.partialorder %v61, 0.0
      %v64 = vld [vmem:[%s1] sm:$0xff]
      %v65 = vld [vmem:[%s1 + $0x8] sm:$0xff]
      %v66 = vld [vmem:[%s2] sm:$0xff]
      %v67 = vld [vmem:[%s2 + $0x8] sm:$0xff]
      %69 = vset.pattern.permute.xlu0 0
      %70 = vperm.xlu0 %69, %v64
      %v71 = vpop.permute.xlu0 %70
      %74 = vset.pattern.permute.xlu0 0
      %75 = vperm.xlu0 %74, %v65
      %v76 = vpop.permute.xlu0 %75
      %v78 = vperm.slane %v66, 0
      %v79 = vadd.f32 %v71, %v78
      %v80 = vadd.f32 %v76, %v78
      %s81 = sld [smem:[#allocation7]]
      %v82 = vmul.f32 %v79, 0.2
      %v83 = vmul.f32 %v80, 0.2
      %v84 = vmax.f32 %v79, %v82
      %v85 = vmax.f32 %v80, %v83
      %v86 = vstv %s81
      %v87 = vmul.f32 %v86, %v84
      %v88 = vmul.f32 %v86, %v85
      %v89 = vadd.f32 %v87, 0.0
      %v90 = vadd.f32 %v88, 0.0
      %91 = vset.pattern.permute.xlu0 1
      %92 = vperm.xlu0 %91, %v64
      %v93 = vpop.permute.xlu0 %92
      %95 = vset.pattern.permute.xlu0 1
      %96 = vperm.xlu0 %95, %v65
      %v97 = vpop.permute.xlu0 %96
      %v99 = vperm.slane %v66, 1
      %v100 = vadd.f32 %v93, %v99
      %v101 = vadd.f32 %v97, %v99
      %s102 = sld [smem:[#allocation7 + $0x1]]
      %v103 = vmul.f32 %v100, 0.2
      %v104 = vmul.f32 %v101, 0.2
      %v105 = vmax.f32 %v100, %v103
      %v106 = vmax.f32 %v101, %v104
      %v107 = vstv %s102
      %v108 = vmul.f32 %v107, %v105
      %v109 = vmul.f32 %v107, %v106
      %v110 = vadd.f32 %v89, %v108
      %v111 = vadd.f32 %v90, %v109
      %112 = vset.pattern.permute.xlu0 2
      %113 = vperm.xlu0 %112, %v64
      %v114 = vpop.permute.xlu0 %113
      %116 = vset.pattern.permute.xlu0 2
      %117 = vperm.xlu0 %116, %v65
      %v118 = vpop.permute.xlu0 %117
      %v120 = vperm.slane %v66, 2
      %v121 = vadd.f32 %v114, %v120
      %v122 = vadd.f32 %v118, %v120
      %s123 = sld [smem:[#allocation7 + $0x2]]
      %v124 = vmul.f32 %v121, 0.2
      %v125 = vmul.f32 %v122, 0.2
      %v126 = vmax.f32 %v121, %v124
      %v127 = vmax.f32 %v122, %v125
      %v128 = vstv %s123
      %v129 = vmul.f32 %v128, %v126
      %v130 = vmul.f32 %v128, %v127
      %v131 = vadd.f32 %v110, %v129
      %v132 = vadd.f32 %v111, %v130
      %133 = vset.pattern.permute.xlu0 3
      %134 = vperm.xlu0 %133, %v64
      %v135 = vpop.permute.xlu0 %134
      %137 = vset.pattern.permute.xlu0 3
      %138 = vperm.xlu0 %137, %v65
      %v139 = vpop.permute.xlu0 %138
      %v141 = vperm.slane %v66, 3
      %v142 = vadd.f32 %v135, %v141
      %v143 = vadd.f32 %v139, %v141
      %s144 = sld [smem:[#allocation7 + $0x3]]
      %v145 = vmul.f32 %v142, 0.2
      %v146 = vmul.f32 %v143, 0.2
      %v147 = vmax.f32 %v142, %v145
      %v148 = vmax.f32 %v143, %v146
      %v149 = vstv %s144
      %v150 = vmul.f32 %v149, %v147
      %v151 = vmul.f32 %v149, %v148
      %v152 = vadd.f32 %v131, %v150
      %v153 = vadd.f32 %v132, %v151
      %154 = vset.pattern.permute.xlu0 4
      %155 = vperm.xlu0 %154, %v64
      %v156 = vpop.permute.xlu0 %155
      %158 = vset.pattern.permute.xlu0 4
      %159 = vperm.xlu0 %158, %v65
      %v160 = vpop.permute.xlu0 %159
      %v162 = vperm.slane %v66, 4
      %v163 = vadd.f32 %v156, %v162
      %v164 = vadd.f32 %v160, %v162
      %s165 = sld [smem:[#allocation7 + $0x4]]
      %v166 = vmul.f32 %v163, 0.2
      %v167 = vmul.f32 %v164, 0.2
      %v168 = vmax.f32 %v163, %v166
      %v169 = vmax.f32 %v164, %v167
      %v170 = vstv %s165
      %v171 = vmul.f32 %v170, %v168
      %v172 = vmul.f32 %v170, %v169
      %v173 = vadd.f32 %v152, %v171
      %v174 = vadd.f32 %v153, %v172
      %175 = vset.pattern.permute.xlu0 5
      %176 = vperm.xlu0 %175, %v64
      %v177 = vpop.permute.xlu0 %176
      %179 = vset.pattern.permute.xlu0 5
      %180 = vperm.xlu0 %179, %v65
      %v181 = vpop.permute.xlu0 %180
      %v183 = vperm.slane %v66, 5
      %v184 = vadd.f32 %v177, %v183
      %v185 = vadd.f32 %v181, %v183
      %s186 = sld [smem:[#allocation7 + $0x5]]
      %v187 = vmul.f32 %v184, 0.2
      %v188 = vmul.f32 %v185, 0.2
      %v189 = vmax.f32 %v184, %v187
      %v190 = vmax.f32 %v185, %v188
      %v191 = vstv %s186
      %v192 = vmul.f32 %v191, %v189
      %v193 = vmul.f32 %v191, %v190
      %v194 = vadd.f32 %v173, %v192
      %v195 = vadd.f32 %v174, %v193
      %196 = vset.pattern.permute.xlu0 6
      %197 = vperm.xlu0 %196, %v64
      %v198 = vpop.permute.xlu0 %197
      %200 = vset.pattern.permute.xlu0 6
      %201 = vperm.xlu0 %200, %v65
      %v202 = vpop.permute.xlu0 %201
      %v204 = vperm.slane %v66, 6
      %v205 = vadd.f32 %v198, %v204
      %v206 = vadd.f32 %v202, %v204
      %s207 = sld [smem:[#allocation7 + $0x6]]
      %v208 = vmul.f32 %v205, 0.2
      %v209 = vmul.f32 %v206, 0.2
      %v210 = vmax.f32 %v205, %v208
      %v211 = vmax.f32 %v206, %v209
      %v212 = vstv %s207
      %v213 = vmul.f32 %v212, %v210
      %v214 = vmul.f32 %v212, %v211
      %v215 = vadd.f32 %v194, %v213
      %v216 = vadd.f32 %v195, %v214
      %217 = vset.pattern.permute.xlu0 7
      %218 = vperm.xlu0 %217, %v64
      %v219 = vpop.permute.xlu0 %218
      %221 = vset.pattern.permute.xlu0 7
      %222 = vperm.xlu0 %221, %v65
      %v223 = vpop.permute.xlu0 %222
      %v225 = vperm.slane %v66, 7
      %v226 = vadd.f32 %v219, %v225
      %v227 = vadd.f32 %v223, %v225
      %s228 = sld [smem:[#allocation7 + $0x7]]
      %v229 = vmul.f32 %v226, 0.2
      %v230 = vmul.f32 %v227, 0.2
      %v231 = vmax.f32 %v226, %v229
      %v232 = vmax.f32 %v227, %v230
      %v233 = vstv %s228
      %v234 = vmul.f32 %v233, %v231
      %v235 = vmul.f32 %v233, %v232
      %v236 = vadd.f32 %v215, %v234
      %v237 = vadd.f32 %v216, %v235
      %238 = vset.pattern.permute.xlu0 8
      %239 = vperm.xlu0 %238, %v64
      %v240 = vpop.permute.xlu0 %239
      %242 = vset.pattern.permute.xlu0 8
      %243 = vperm.xlu0 %242, %v65
      %v244 = vpop.permute.xlu0 %243
      %v246 = vperm.slane %v67, 0
      %v247 = vadd.f32 %v240, %v246
      %v248 = vadd.f32 %v244, %v246
      %s249 = sld [smem:[#allocation7 + $0x8]]
      %v250 = vmul.f32 %v247, 0.2
      %v251 = vmul.f32 %v248, 0.2
      %v252 = vmax.f32 %v247, %v250
      %v253 = vmax.f32 %v248, %v251
      %v254 = vstv %s249
      %v255 = vmul.f32 %v254, %v252
      %v256 = vmul.f32 %v254, %v253
      %v257 = vadd.f32 %v236, %v255
      %v258 = vadd.f32 %v237, %v256
      %259 = vset.pattern.permute.xlu0 9
      %260 = vperm.xlu0 %259, %v64
      %v261 = vpop.permute.xlu0 %260
      %263 = vset.pattern.permute.xlu0 9
      %264 = vperm.xlu0 %263, %v65
      %v265 = vpop.permute.xlu0 %264
      %v267 = vperm.slane %v67, 1
      %v268 = vadd.f32 %v261, %v267
      %v269 = vadd.f32 %v265, %v267
      %s270 = sld [smem:[#allocation7 + $0x9]]
      %v271 = vmul.f32 %v268, 0.2
      %v272 = vmul.f32 %v269, 0.2
      %v273 = vmax.f32 %v268, %v271
      %v274 = vmax.f32 %v269, %v272
      %v275 = vstv %s270
      %v276 = vmul.f32 %v275, %v273
      %v277 = vmul.f32 %v275, %v274
      %v278 = vadd.f32 %v257, %v276
      %v279 = vadd.f32 %v258, %v277
      %280 = vset.pattern.permute.xlu0 10
      %281 = vperm.xlu0 %280, %v64
      %v282 = vpop.permute.xlu0 %281
      %284 = vset.pattern.permute.xlu0 10
      %285 = vperm.xlu0 %284, %v65
      %v286 = vpop.permute.xlu0 %285
      %v288 = vperm.slane %v67, 2
      %v289 = vadd.f32 %v282, %v288
      %v290 = vadd.f32 %v286, %v288
      %s291 = sld [smem:[#allocation7 + $0xa]]
      %v292 = vmul.f32 %v289, 0.2
      %v293 = vmul.f32 %v290, 0.2
      %v294 = vmax.f32 %v289, %v292
      %v295 = vmax.f32 %v290, %v293
      %v296 = vstv %s291
      %v297 = vmul.f32 %v296, %v294
      %v298 = vmul.f32 %v296, %v295
      %v299 = vadd.f32 %v278, %v297
      %v300 = vadd.f32 %v279, %v298
      %301 = vset.pattern.permute.xlu0 11
      %302 = vperm.xlu0 %301, %v64
      %v303 = vpop.permute.xlu0 %302
      %305 = vset.pattern.permute.xlu0 11
      %306 = vperm.xlu0 %305, %v65
      %v307 = vpop.permute.xlu0 %306
      %v309 = vperm.slane %v67, 3
      %v310 = vadd.f32 %v303, %v309
      %v311 = vadd.f32 %v307, %v309
      %s312 = sld [smem:[#allocation7 + $0xb]]
      %v313 = vmul.f32 %v310, 0.2
      %v314 = vmul.f32 %v311, 0.2
      %v315 = vmax.f32 %v310, %v313
      %v316 = vmax.f32 %v311, %v314
      %v317 = vstv %s312
      %v318 = vmul.f32 %v317, %v315
      %v319 = vmul.f32 %v317, %v316
      %v320 = vadd.f32 %v299, %v318
      %v321 = vadd.f32 %v300, %v319
      %322 = vset.pattern.permute.xlu0 12
      %323 = vperm.xlu0 %322, %v64
      %v324 = vpop.permute.xlu0 %323
      %326 = vset.pattern.permute.xlu0 12
      %327 = vperm.xlu0 %326, %v65
      %v328 = vpop.permute.xlu0 %327
      %v330 = vperm.slane %v67, 4
      %v331 = vadd.f32 %v324, %v330
      %v332 = vadd.f32 %v328, %v330
      %s333 = sld [smem:[#allocation7 + $0xc]]
      %v334 = vmul.f32 %v331, 0.2
      %v335 = vmul.f32 %v332, 0.2
      %v336 = vmax.f32 %v331, %v334
      %v337 = vmax.f32 %v332, %v335
      %v338 = vstv %s333
      %v339 = vmul.f32 %v338, %v336
      %v340 = vmul.f32 %v338, %v337
      %v341 = vadd.f32 %v320, %v339
      %v342 = vadd.f32 %v321, %v340
      %343 = vset.pattern.permute.xlu0 13
      %344 = vperm.xlu0 %343, %v64
      %v345 = vpop.permute.xlu0 %344
      %347 = vset.pattern.permute.xlu0 13
      %348 = vperm.xlu0 %347, %v65
      %v349 = vpop.permute.xlu0 %348
      %v351 = vperm.slane %v67, 5
      %v352 = vadd.f32 %v345, %v351
      %v353 = vadd.f32 %v349, %v351
      %s354 = sld [smem:[#allocation7 + $0xd]]
      %v355 = vmul.f32 %v352, 0.2
      %v356 = vmul.f32 %v353, 0.2
      %v357 = vmax.f32 %v352, %v355
      %v358 = vmax.f32 %v353, %v356
      %v359 = vstv %s354
      %v360 = vmul.f32 %v359, %v357
      %v361 = vmul.f32 %v359, %v358
      %v362 = vadd.f32 %v341, %v360
      %v363 = vadd.f32 %v342, %v361
      %364 = vset.pattern.permute.xlu0 14
      %365 = vperm.xlu0 %364, %v64
      %v366 = vpop.permute.xlu0 %365
      %368 = vset.pattern.permute.xlu0 14
      %369 = vperm.xlu0 %368, %v65
      %v370 = vpop.permute.xlu0 %369
      %v372 = vperm.slane %v67, 6
      %v373 = vadd.f32 %v366, %v372
      %v374 = vadd.f32 %v370, %v372
      %s375 = sld [smem:[#allocation7 + $0xe]]
      %v376 = vmul.f32 %v373, 0.2
      %v377 = vmul.f32 %v374, 0.2
      %v378 = vmax.f32 %v373, %v376
      %v379 = vmax.f32 %v374, %v377
      %v380 = vstv %s375
      %v381 = vmul.f32 %v380, %v378
      %v382 = vmul.f32 %v380, %v379
      %v383 = vadd.f32 %v362, %v381
      %v384 = vadd.f32 %v363, %v382
      %385 = vset.pattern.permute.xlu0 15
      %386 = vperm.xlu0 %385, %v64
      %v387 = vpop.permute.xlu0 %386
      %389 = vset.pattern.permute.xlu0 15
      %390 = vperm.xlu0 %389, %v65
      %v391 = vpop.permute.xlu0 %390
      %v393 = vperm.slane %v67, 7
      %v394 = vadd.f32 %v387, %v393
      %v395 = vadd.f32 %v391, %v393
      %s396 = sld [smem:[#allocation7 + $0xf]]
      %v397 = vmul.f32 %v394, 0.2
      %v398 = vmul.f32 %v395, 0.2
      %v399 = vmax.f32 %v394, %v397
      %v400 = vmax.f32 %v395, %v398
      %v401 = vstv %s396
      %v402 = vmul.f32 %v401, %v399
      %v403 = vmul.f32 %v401, %v400
      %v404 = vadd.f32 %v383, %v402
      %v405 = vadd.f32 %v384, %v403
      %v406 = vsel %vm62, %v404, -1e+30
      %v407 = vsel %vm63, %v405, -1e+30
      %v408 = vld [vmem:[#allocation2] sm:$0xff]
      %v409 = vld [vmem:[#allocation2 + $0x8] sm:$0xff]
      %vm410 = vcmask 130048
      %v411 = vsel %vm410, %v406, -inf
      %412 = vmax.xlane.f32.xlu0 %v411
      %v413 = vpop.xlane.xlu0 %412
      %v414 = vsel %vm410, %v407, -inf
      %415 = vmax.xlane.f32.xlu0 %v414
      %v416 = vpop.xlane.xlu0 %415
      %v417 = vmax.f32 %v408, %v413
      %v418 = vmax.f32 %v409, %v416
      %v419 = vsub.f32 %v408, %v417
      %v420 = vsub.f32 %v409, %v418
      %v421 = vmul.f32 %v419, 1.442695
      %v422 = vpow.pop %v421
      %v423 = vmul.f32 %v420, 1.442695
      %v424 = vpow.pop %v423
      %426 = vset.pattern.permute.xlu0 0
      %427 = vperm.xlu0 %426, %v417
      %v428 = vpop.permute.xlu0 %427
      %431 = vset.pattern.permute.xlu0 0
      %432 = vperm.xlu0 %431, %v418
      %v433 = vpop.permute.xlu0 %432
      %v435 = vsub.f32 %v406, %v428
      %v436 = vsub.f32 %v407, %v433
      %v437 = vmul.f32 %v435, 1.442695
      %v438 = vpow.pop %v437
      %v439 = vmul.f32 %v436, 1.442695
      %v440 = vpow.pop %v439
      %v441 = vsel %vm62, %v438, 0.0
      %v442 = vsel %vm63, %v440, 0.0
      %v443 = vld [vmem:[#allocation3] sm:$0xff]
      %v444 = vld [vmem:[#allocation3 + $0x8] sm:$0xff]
      %v445 = vmul.f32 %v422, %v443
      %v446 = vmul.f32 %v424, %v444
      %v447 = vsel %vm410, %v441, 0.0
      %448 = vadd.xlane.f32.xlu0 %v447
      %v449 = vpop.xlane.xlu0 %448
      %v450 = vsel %vm410, %v442, 0.0
      %451 = vadd.xlane.f32.xlu0 %v450
      %v452 = vpop.xlane.xlu0 %451
      %v453 = vadd.f32 %v445, %v449
      %v454 = vadd.f32 %v446, %v452
      %vm455 = vcmask 7168
      %456 = vst.msk [vmem:[#allocation3] sm:$0xff] %vm455, %v453
      %457 = vst.msk [vmem:[#allocation3 + $0x8] sm:$0xff] %vm455, %v454
      %v458 = vld [vmem:[#allocation4] sm:$0xff]
      %v459 = vld [vmem:[#allocation4 + $0x8] sm:$0xff]
      %461 = vset.pattern.permute.xlu0 0
      %462 = vperm.xlu0 %461, %v422
      %v463 = vpop.permute.xlu0 %462
      %466 = vset.pattern.permute.xlu0 0
      %467 = vperm.xlu0 %466, %v424
      %v468 = vpop.permute.xlu0 %467
      %v470 = vmul.f32 %v463, %v458
      %v471 = vmul.f32 %v468, %v459
      %v473 = vsel %vm410, %v441, 0
      %v476 = vsel %vm410, %v442, 0
      %v479 = vsel %vm410, %v66, 0
      %v482 = vsel %vm410, %v67, 0
      %484 = vmatpush.xpose.msra.mxu0 0.0
      %485 = vmatpush.xpose.msra.mxu0 0.0
      %486 = vmatpush.xpose.msra.mxu0 0.0
      %487 = vmatpush.xpose.msra.mxu0 0.0
      %488 = vmatpush.xpose.msra.mxu0 0.0
      %489 = vmatpush.xpose.msra.mxu0 0.0
      %490 = vmatpush.xpose.msra.mxu0 0.0
      %491 = vmatpush.xpose.msra.mxu0 0.0
      %492 = vmatpush.xpose.msra.mxu0 0.0
      %493 = vmatpush.xpose.msra.mxu0 0.0
      %494 = vmatpush.xpose.msra.mxu0 0.0
      %495 = vmatpush.xpose.msra.mxu0 0.0
      %496 = vmatpush.xpose.msra.mxu0 0.0
      %497 = vmatpush.xpose.msra.mxu0 0.0
      %498 = vmatpush.xpose.msra.mxu0 %v482
      %499 = vmatpush.xpose.msra.mxu0 %v479
      %500 = vmatmul.f32.gmra.mxu0 %v473
      %v501 = vpop.f32.mrf.mxu0
      %v502 = vadd.f32 0.0, %v501
      %503 = vmatmul.f32.gmra.mxu0 %v476
      %v504 = vpop.f32.mrf.mxu0
      %v505 = vadd.f32 0.0, %v504
      %506 = vdwg.mxu0
      %v507 = vadd.f32 %v470, %v502
      %v508 = vadd.f32 %v471, %v505
      %509 = vst.msk [vmem:[#allocation4] sm:$0xff] %vm410, %v507
      %510 = vst.msk [vmem:[#allocation4 + $0x8] sm:$0xff] %vm410, %v508
      %511 = vst.msk [vmem:[#allocation2] sm:$0xff] %vm455, %v417
      %512 = vst.msk [vmem:[#allocation2 + $0x8] sm:$0xff] %vm455, %v418
      %s513 = scalar_lea.vmem %s1, 16
      %v514 = vld [vmem:[%s513] sm:$0xff]
      %v515 = vld [vmem:[%s513 + $0x8] sm:$0xff]
      %s516 = scalar_lea.vmem %s2, 16
      %v517 = vld [vmem:[%s516] sm:$0xff]
      %v518 = vld [vmem:[%s516 + $0x8] sm:$0xff]
      %520 = vset.pattern.permute.xlu0 0
      %521 = vperm.xlu0 %520, %v514
      %v522 = vpop.permute.xlu0 %521
      %525 = vset.pattern.permute.xlu0 0
      %526 = vperm.xlu0 %525, %v515
      %v527 = vpop.permute.xlu0 %526
      %v529 = vperm.slane %v517, 0
      %v530 = vadd.f32 %v522, %v529
      %v531 = vadd.f32 %v527, %v529
      %s532 = sld [smem:[#allocation7]]
      %v533 = vmul.f32 %v530, 0.2
      %v534 = vmul.f32 %v531, 0.2
      %v535 = vmax.f32 %v530, %v533
      %v536 = vmax.f32 %v531, %v534
      %v537 = vstv %s532
      %v538 = vmul.f32 %v537, %v535
      %v539 = vmul.f32 %v537, %v536
      %v540 = vadd.f32 %v538, 0.0
      %v541 = vadd.f32 %v539, 0.0
      %542 = vset.pattern.permute.xlu0 1
      %543 = vperm.xlu0 %542, %v514
      %v544 = vpop.permute.xlu0 %543
      %546 = vset.pattern.permute.xlu0 1
      %547 = vperm.xlu0 %546, %v515
      %v548 = vpop.permute.xlu0 %547
      %v550 = vperm.slane %v517, 1
      %v551 = vadd.f32 %v544, %v550
      %v552 = vadd.f32 %v548, %v550
      %s553 = sld [smem:[#allocation7 + $0x1]]
      %v554 = vmul.f32 %v551, 0.2
      %v555 = vmul.f32 %v552, 0.2
      %v556 = vmax.f32 %v551, %v554
      %v557 = vmax.f32 %v552, %v555
      %v558 = vstv %s553
      %v559 = vmul.f32 %v558, %v556
      %v560 = vmul.f32 %v558, %v557
      %v561 = vadd.f32 %v540, %v559
      %v562 = vadd.f32 %v541, %v560
      %563 = vset.pattern.permute.xlu0 2
      %564 = vperm.xlu0 %563, %v514
      %v565 = vpop.permute.xlu0 %564
      %567 = vset.pattern.permute.xlu0 2
      %568 = vperm.xlu0 %567, %v515
      %v569 = vpop.permute.xlu0 %568
      %v571 = vperm.slane %v517, 2
      %v572 = vadd.f32 %v565, %v571
      %v573 = vadd.f32 %v569, %v571
      %s574 = sld [smem:[#allocation7 + $0x2]]
      %v575 = vmul.f32 %v572, 0.2
      %v576 = vmul.f32 %v573, 0.2
      %v577 = vmax.f32 %v572, %v575
      %v578 = vmax.f32 %v573, %v576
      %v579 = vstv %s574
      %v580 = vmul.f32 %v579, %v577
      %v581 = vmul.f32 %v579, %v578
      %v582 = vadd.f32 %v561, %v580
      %v583 = vadd.f32 %v562, %v581
      %584 = vset.pattern.permute.xlu0 3
      %585 = vperm.xlu0 %584, %v514
      %v586 = vpop.permute.xlu0 %585
      %588 = vset.pattern.permute.xlu0 3
      %589 = vperm.xlu0 %588, %v515
      %v590 = vpop.permute.xlu0 %589
      %v592 = vperm.slane %v517, 3
      %v593 = vadd.f32 %v586, %v592
      %v594 = vadd.f32 %v590, %v592
      %s595 = sld [smem:[#allocation7 + $0x3]]
      %v596 = vmul.f32 %v593, 0.2
      %v597 = vmul.f32 %v594, 0.2
      %v598 = vmax.f32 %v593, %v596
      %v599 = vmax.f32 %v594, %v597
      %v600 = vstv %s595
      %v601 = vmul.f32 %v600, %v598
      %v602 = vmul.f32 %v600, %v599
      %v603 = vadd.f32 %v582, %v601
      %v604 = vadd.f32 %v583, %v602
      %605 = vset.pattern.permute.xlu0 4
      %606 = vperm.xlu0 %605, %v514
      %v607 = vpop.permute.xlu0 %606
      %609 = vset.pattern.permute.xlu0 4
      %610 = vperm.xlu0 %609, %v515
      %v611 = vpop.permute.xlu0 %610
      %v613 = vperm.slane %v517, 4
      %v614 = vadd.f32 %v607, %v613
      %v615 = vadd.f32 %v611, %v613
      %s616 = sld [smem:[#allocation7 + $0x4]]
      %v617 = vmul.f32 %v614, 0.2
      %v618 = vmul.f32 %v615, 0.2
      %v619 = vmax.f32 %v614, %v617
      %v620 = vmax.f32 %v615, %v618
      %v621 = vstv %s616
      %v622 = vmul.f32 %v621, %v619
      %v623 = vmul.f32 %v621, %v620
      %v624 = vadd.f32 %v603, %v622
      %v625 = vadd.f32 %v604, %v623
      %626 = vset.pattern.permute.xlu0 5
      %627 = vperm.xlu0 %626, %v514
      %v628 = vpop.permute.xlu0 %627
      %630 = vset.pattern.permute.xlu0 5
      %631 = vperm.xlu0 %630, %v515
      %v632 = vpop.permute.xlu0 %631
      %v634 = vperm.slane %v517, 5
      %v635 = vadd.f32 %v628, %v634
      %v636 = vadd.f32 %v632, %v634
      %s637 = sld [smem:[#allocation7 + $0x5]]
      %v638 = vmul.f32 %v635, 0.2
      %v639 = vmul.f32 %v636, 0.2
      %v640 = vmax.f32 %v635, %v638
      %v641 = vmax.f32 %v636, %v639
      %v642 = vstv %s637
      %v643 = vmul.f32 %v642, %v640
      %v644 = vmul.f32 %v642, %v641
      %v645 = vadd.f32 %v624, %v643
      %v646 = vadd.f32 %v625, %v644
      %647 = vset.pattern.permute.xlu0 6
      %648 = vperm.xlu0 %647, %v514
      %v649 = vpop.permute.xlu0 %648
      %651 = vset.pattern.permute.xlu0 6
      %652 = vperm.xlu0 %651, %v515
      %v653 = vpop.permute.xlu0 %652
      %v655 = vperm.slane %v517, 6
      %v656 = vadd.f32 %v649, %v655
      %v657 = vadd.f32 %v653, %v655
      %s658 = sld [smem:[#allocation7 + $0x6]]
      %v659 = vmul.f32 %v656, 0.2
      %v660 = vmul.f32 %v657, 0.2
      %v661 = vmax.f32 %v656, %v659
      %v662 = vmax.f32 %v657, %v660
      %v663 = vstv %s658
      %v664 = vmul.f32 %v663, %v661
      %v665 = vmul.f32 %v663, %v662
      %v666 = vadd.f32 %v645, %v664
      %v667 = vadd.f32 %v646, %v665
      %668 = vset.pattern.permute.xlu0 7
      %669 = vperm.xlu0 %668, %v514
      %v670 = vpop.permute.xlu0 %669
      %672 = vset.pattern.permute.xlu0 7
      %673 = vperm.xlu0 %672, %v515
      %v674 = vpop.permute.xlu0 %673
      %v676 = vperm.slane %v517, 7
      %v677 = vadd.f32 %v670, %v676
      %v678 = vadd.f32 %v674, %v676
      %s679 = sld [smem:[#allocation7 + $0x7]]
      %v680 = vmul.f32 %v677, 0.2
      %v681 = vmul.f32 %v678, 0.2
      %v682 = vmax.f32 %v677, %v680
      %v683 = vmax.f32 %v678, %v681
      %v684 = vstv %s679
      %v685 = vmul.f32 %v684, %v682
      %v686 = vmul.f32 %v684, %v683
      %v687 = vadd.f32 %v666, %v685
      %v688 = vadd.f32 %v667, %v686
      %689 = vset.pattern.permute.xlu0 8
      %690 = vperm.xlu0 %689, %v514
      %v691 = vpop.permute.xlu0 %690
      %693 = vset.pattern.permute.xlu0 8
      %694 = vperm.xlu0 %693, %v515
      %v695 = vpop.permute.xlu0 %694
      %v697 = vperm.slane %v518, 0
      %v698 = vadd.f32 %v691, %v697
      %v699 = vadd.f32 %v695, %v697
      %s700 = sld [smem:[#allocation7 + $0x8]]
      %v701 = vmul.f32 %v698, 0.2
      %v702 = vmul.f32 %v699, 0.2
      %v703 = vmax.f32 %v698, %v701
      %v704 = vmax.f32 %v699, %v702
      %v705 = vstv %s700
      %v706 = vmul.f32 %v705, %v703
      %v707 = vmul.f32 %v705, %v704
      %v708 = vadd.f32 %v687, %v706
      %v709 = vadd.f32 %v688, %v707
      %710 = vset.pattern.permute.xlu0 9
      %711 = vperm.xlu0 %710, %v514
      %v712 = vpop.permute.xlu0 %711
      %714 = vset.pattern.permute.xlu0 9
      %715 = vperm.xlu0 %714, %v515
      %v716 = vpop.permute.xlu0 %715
      %v718 = vperm.slane %v518, 1
      %v719 = vadd.f32 %v712, %v718
      %v720 = vadd.f32 %v716, %v718
      %s721 = sld [smem:[#allocation7 + $0x9]]
      %v722 = vmul.f32 %v719, 0.2
      %v723 = vmul.f32 %v720, 0.2
      %v724 = vmax.f32 %v719, %v722
      %v725 = vmax.f32 %v720, %v723
      %v726 = vstv %s721
      %v727 = vmul.f32 %v726, %v724
      %v728 = vmul.f32 %v726, %v725
      %v729 = vadd.f32 %v708, %v727
      %v730 = vadd.f32 %v709, %v728
      %731 = vset.pattern.permute.xlu0 10
      %732 = vperm.xlu0 %731, %v514
      %v733 = vpop.permute.xlu0 %732
      %735 = vset.pattern.permute.xlu0 10
      %736 = vperm.xlu0 %735, %v515
      %v737 = vpop.permute.xlu0 %736
      %v739 = vperm.slane %v518, 2
      %v740 = vadd.f32 %v733, %v739
      %v741 = vadd.f32 %v737, %v739
      %s742 = sld [smem:[#allocation7 + $0xa]]
      %v743 = vmul.f32 %v740, 0.2
      %v744 = vmul.f32 %v741, 0.2
      %v745 = vmax.f32 %v740, %v743
      %v746 = vmax.f32 %v741, %v744
      %v747 = vstv %s742
      %v748 = vmul.f32 %v747, %v745
      %v749 = vmul.f32 %v747, %v746
      %v750 = vadd.f32 %v729, %v748
      %v751 = vadd.f32 %v730, %v749
      %752 = vset.pattern.permute.xlu0 11
      %753 = vperm.xlu0 %752, %v514
      %v754 = vpop.permute.xlu0 %753
      %756 = vset.pattern.permute.xlu0 11
      %757 = vperm.xlu0 %756, %v515
      %v758 = vpop.permute.xlu0 %757
      %v760 = vperm.slane %v518, 3
      %v761 = vadd.f32 %v754, %v760
      %v762 = vadd.f32 %v758, %v760
      %s763 = sld [smem:[#allocation7 + $0xb]]
      %v764 = vmul.f32 %v761, 0.2
      %v765 = vmul.f32 %v762, 0.2
      %v766 = vmax.f32 %v761, %v764
      %v767 = vmax.f32 %v762, %v765
      %v768 = vstv %s763
      %v769 = vmul.f32 %v768, %v766
      %v770 = vmul.f32 %v768, %v767
      %v771 = vadd.f32 %v750, %v769
      %v772 = vadd.f32 %v751, %v770
      %773 = vset.pattern.permute.xlu0 12
      %774 = vperm.xlu0 %773, %v514
      %v775 = vpop.permute.xlu0 %774
      %777 = vset.pattern.permute.xlu0 12
      %778 = vperm.xlu0 %777, %v515
      %v779 = vpop.permute.xlu0 %778
      %v781 = vperm.slane %v518, 4
      %v782 = vadd.f32 %v775, %v781
      %v783 = vadd.f32 %v779, %v781
      %s784 = sld [smem:[#allocation7 + $0xc]]
      %v785 = vmul.f32 %v782, 0.2
      %v786 = vmul.f32 %v783, 0.2
      %v787 = vmax.f32 %v782, %v785
      %v788 = vmax.f32 %v783, %v786
      %v789 = vstv %s784
      %v790 = vmul.f32 %v789, %v787
      %v791 = vmul.f32 %v789, %v788
      %v792 = vadd.f32 %v771, %v790
      %v793 = vadd.f32 %v772, %v791
      %794 = vset.pattern.permute.xlu0 13
      %795 = vperm.xlu0 %794, %v514
      %v796 = vpop.permute.xlu0 %795
      %798 = vset.pattern.permute.xlu0 13
      %799 = vperm.xlu0 %798, %v515
      %v800 = vpop.permute.xlu0 %799
      %v802 = vperm.slane %v518, 5
      %v803 = vadd.f32 %v796, %v802
      %v804 = vadd.f32 %v800, %v802
      %s805 = sld [smem:[#allocation7 + $0xd]]
      %v806 = vmul.f32 %v803, 0.2
      %v807 = vmul.f32 %v804, 0.2
      %v808 = vmax.f32 %v803, %v806
      %v809 = vmax.f32 %v804, %v807
      %v810 = vstv %s805
      %v811 = vmul.f32 %v810, %v808
      %v812 = vmul.f32 %v810, %v809
      %v813 = vadd.f32 %v792, %v811
      %v814 = vadd.f32 %v793, %v812
      %815 = vset.pattern.permute.xlu0 14
      %816 = vperm.xlu0 %815, %v514
      %v817 = vpop.permute.xlu0 %816
      %819 = vset.pattern.permute.xlu0 14
      %820 = vperm.xlu0 %819, %v515
      %v821 = vpop.permute.xlu0 %820
      %v823 = vperm.slane %v518, 6
      %v824 = vadd.f32 %v817, %v823
      %v825 = vadd.f32 %v821, %v823
      %s826 = sld [smem:[#allocation7 + $0xe]]
      %v827 = vmul.f32 %v824, 0.2
      %v828 = vmul.f32 %v825, 0.2
      %v829 = vmax.f32 %v824, %v827
      %v830 = vmax.f32 %v825, %v828
      %v831 = vstv %s826
      %v832 = vmul.f32 %v831, %v829
      %v833 = vmul.f32 %v831, %v830
      %v834 = vadd.f32 %v813, %v832
      %v835 = vadd.f32 %v814, %v833
      %836 = vset.pattern.permute.xlu0 15
      %837 = vperm.xlu0 %836, %v514
      %v838 = vpop.permute.xlu0 %837
      %840 = vset.pattern.permute.xlu0 15
      %841 = vperm.xlu0 %840, %v515
      %v842 = vpop.permute.xlu0 %841
      %v844 = vperm.slane %v518, 7
      %v845 = vadd.f32 %v838, %v844
      %v846 = vadd.f32 %v842, %v844
      %s847 = sld [smem:[#allocation7 + $0xf]]
      %v848 = vmul.f32 %v845, 0.2
      %v849 = vmul.f32 %v846, 0.2
      %v850 = vmax.f32 %v845, %v848
      %v851 = vmax.f32 %v846, %v849
      %v852 = vstv %s847
      %v853 = vmul.f32 %v852, %v850
      %v854 = vmul.f32 %v852, %v851
      %v855 = vadd.f32 %v834, %v853
      %v856 = vadd.f32 %v835, %v854
      %v857 = vsel %vm62, %v855, -1e+30
      %v858 = vsel %vm63, %v856, -1e+30
      %s859 = scalar_lea.vmem [#allocation2], 16
      %v860 = vld [vmem:[%s859] sm:$0xff]
      %v861 = vld [vmem:[%s859 + $0x8] sm:$0xff]
      %v862 = vsel %vm410, %v857, -inf
      %863 = vmax.xlane.f32.xlu0 %v862
      %v864 = vpop.xlane.xlu0 %863
      %v865 = vsel %vm410, %v858, -inf
      %866 = vmax.xlane.f32.xlu0 %v865
      %v867 = vpop.xlane.xlu0 %866
      %v868 = vmax.f32 %v860, %v864
      %v869 = vmax.f32 %v861, %v867
      %v870 = vsub.f32 %v860, %v868
      %v871 = vsub.f32 %v861, %v869
      %v872 = vmul.f32 %v870, 1.442695
      %v873 = vpow.pop %v872
      %v874 = vmul.f32 %v871, 1.442695
      %v875 = vpow.pop %v874
      %877 = vset.pattern.permute.xlu0 0
      %878 = vperm.xlu0 %877, %v868
      %v879 = vpop.permute.xlu0 %878
      %882 = vset.pattern.permute.xlu0 0
      %883 = vperm.xlu0 %882, %v869
      %v884 = vpop.permute.xlu0 %883
      %v886 = vsub.f32 %v857, %v879
      %v887 = vsub.f32 %v858, %v884
      %v888 = vmul.f32 %v886, 1.442695
      %v889 = vpow.pop %v888
      %v890 = vmul.f32 %v887, 1.442695
      %v891 = vpow.pop %v890
      %v892 = vsel %vm62, %v889, 0.0
      %v893 = vsel %vm63, %v891, 0.0
      %s894 = scalar_lea.vmem [#allocation3], 16
      %v895 = vld [vmem:[%s894] sm:$0xff]
      %v896 = vld [vmem:[%s894 + $0x8] sm:$0xff]
      %v897 = vmul.f32 %v873, %v895
      %v898 = vmul.f32 %v875, %v896
      %v899 = vsel %vm410, %v892, 0.0
      %900 = vadd.xlane.f32.xlu0 %v899
      %v901 = vpop.xlane.xlu0 %900
      %v902 = vsel %vm410, %v893, 0.0
      %903 = vadd.xlane.f32.xlu0 %v902
      %v904 = vpop.xlane.xlu0 %903
      %v905 = vadd.f32 %v897, %v901
      %v906 = vadd.f32 %v898, %v904
      %907 = vst.msk [vmem:[%s894] sm:$0xff] %vm455, %v905
      %908 = vst.msk [vmem:[%s894 + $0x8] sm:$0xff] %vm455, %v906
      %s909 = scalar_lea.vmem [#allocation4], 16
      %v910 = vld [vmem:[%s909] sm:$0xff]
      %v911 = vld [vmem:[%s909 + $0x8] sm:$0xff]
      %913 = vset.pattern.permute.xlu0 0
      %914 = vperm.xlu0 %913, %v873
      %v915 = vpop.permute.xlu0 %914
      %918 = vset.pattern.permute.xlu0 0
      %919 = vperm.xlu0 %918, %v875
      %v920 = vpop.permute.xlu0 %919
      %v922 = vmul.f32 %v915, %v910
      %v923 = vmul.f32 %v920, %v911
      %v925 = vsel %vm410, %v892, 0
      %v928 = vsel %vm410, %v893, 0
      %v931 = vsel %vm410, %v517, 0
      %v934 = vsel %vm410, %v518, 0
      %936 = vmatpush.xpose.msra.mxu0 0.0
      %937 = vmatpush.xpose.msra.mxu0 0.0
      %938 = vmatpush.xpose.msra.mxu0 0.0
      %939 = vmatpush.xpose.msra.mxu0 0.0
      %940 = vmatpush.xpose.msra.mxu0 0.0
      %941 = vmatpush.xpose.msra.mxu0 0.0
      %942 = vmatpush.xpose.msra.mxu0 0.0
      %943 = vmatpush.xpose.msra.mxu0 0.0
      %944 = vmatpush.xpose.msra.mxu0 0.0
      %945 = vmatpush.xpose.msra.mxu0 0.0
      %946 = vmatpush.xpose.msra.mxu0 0.0
      %947 = vmatpush.xpose.msra.mxu0 0.0
      %948 = vmatpush.xpose.msra.mxu0 0.0
      %949 = vmatpush.xpose.msra.mxu0 0.0
      %950 = vmatpush.xpose.msra.mxu0 %v934
      %951 = vmatpush.xpose.msra.mxu0 %v931
      %952 = vmatmul.f32.gmra.mxu0 %v925
      %v953 = vpop.f32.mrf.mxu0
      %v954 = vadd.f32 0.0, %v953
      %955 = vmatmul.f32.gmra.mxu0 %v928
      %v956 = vpop.f32.mrf.mxu0
      %v957 = vadd.f32 0.0, %v956
      %958 = vdwg.mxu0
      %v959 = vadd.f32 %v922, %v954
      %v960 = vadd.f32 %v923, %v957
      %961 = vst.msk [vmem:[%s909] sm:$0xff] %vm410, %v959
      %962 = vst.msk [vmem:[%s909 + $0x8] sm:$0xff] %vm410, %v960
      %963 = vst.msk [vmem:[%s859] sm:$0xff] %vm455, %v868
      %964 = vst.msk [vmem:[%s859 + $0x8] sm:$0xff] %vm455, %v869
    $region29: #{encoder_forward.5} parent=1 // pred_fallthru
      _
    // Predicated region
    $region30: #{encoder_forward.5} parent=1 // pred_check
      %p965 = pneg %p32
    $region31: #{encoder_forward.5} parent=1 // pred_check_branch
      %967 = sbr.rel (%p965) target = $region33
    $region32: #{encoder_forward.5} parent=1 // pred_region
      %v968 = vld [vmem:[#allocation3] sm:$0xff]
      %v969 = vld [vmem:[#allocation3 + $0x8] sm:$0xff]
      %v970 = vld [vmem:[#allocation3 + $0x10] sm:$0xff]
      %v971 = vld [vmem:[#allocation3 + $0x18] sm:$0xff]
      %v972 = vmax.f32 %v968, 1e-12
      %v973 = vmax.f32 %v969, 1e-12
      %v974 = vmax.f32 %v970, 1e-12
      %v975 = vmax.f32 %v971, 1e-12
      %v976 = vrcp.pop %v972
      %v977 = vrcp.pop %v973
      %v978 = vrcp.pop %v974
      %v979 = vrcp.pop %v975
      %v980 = vld [vmem:[#allocation4] sm:$0xff]
      %v981 = vld [vmem:[#allocation4 + $0x8] sm:$0xff]
      %v982 = vld [vmem:[#allocation4 + $0x10] sm:$0xff]
      %v983 = vld [vmem:[#allocation4 + $0x18] sm:$0xff]
      %985 = vset.pattern.permute.xlu0 0
      %986 = vperm.xlu0 %985, %v976
      %v987 = vpop.permute.xlu0 %986
      %990 = vset.pattern.permute.xlu0 0
      %991 = vperm.xlu0 %990, %v977
      %v992 = vpop.permute.xlu0 %991
      %995 = vset.pattern.permute.xlu0 0
      %996 = vperm.xlu0 %995, %v978
      %v997 = vpop.permute.xlu0 %996
      %1000 = vset.pattern.permute.xlu0 0
      %1001 = vperm.xlu0 %1000, %v979
      %v1002 = vpop.permute.xlu0 %1001
      %v1004 = vmul.f32 %v980, %v987
      %v1005 = vmul.f32 %v981, %v992
      %v1006 = vmul.f32 %v982, %v997
      %v1007 = vmul.f32 %v983, %v1002
      %vm1008 = vcmask 130048
      %1009 = vst.msk [vmem:[%s5] sm:$0xff] %vm1008, %v1004
      %1010 = vst.msk [vmem:[%s5 + $0x8] sm:$0xff] %vm1008, %v1005
      %1011 = vst.msk [vmem:[%s5 + $0x10] sm:$0xff] %vm1008, %v1006
      %1012 = vst.msk [vmem:[%s5 + $0x18] sm:$0xff] %vm1008, %v1007
    $region33: #{encoder_forward.5} parent=1 // pred_fallthru
      _
    // Predicated region
    $region34: #{encoder_forward.5} parent=1 // pred_check
      _
    $region35: #{encoder_forward.5} parent=1 // pred_check_branch
      %1014 = sbr.rel (0) target = $region37
    $region36: #{encoder_forward.5} parent=1 // pred_region
      _
    $region37: #{encoder_forward.5} parent=1 // pred_fallthru
      _
    // Predicated region
    $region38: #{encoder_forward.5} parent=1 // pred_check
      _
    $region39: #{encoder_forward.5} parent=1 // pred_check_branch
      %1016 = sbr.rel (0) target = $region41
    $region40: #{encoder_forward.5} parent=1 // pred_region
      _
    $region41: #{encoder_forward.5} parent=1 // pred_fallthru
      _
    %1017 = vsyncpa [#allocation8], 1

// kernel: encoder_forward.9
$region0: #{encoder_forward.9}
  #allocation0 [shape = 'u32[]', space=smem, size = 0x4, offset = 0x4, fixed_abs, tag = 'smem constant byte address 0x4 - core index']
  #allocation1 [shape = 'u32[72,128]{1,0:T(1,128)}', space=vmem, size = 0x9000, scoped, tag = 'internal scratch']
  #allocation2 [shape = 'f32[16,16]{1,0:T(8,128)}', space=vmem, size = 0x2000, scoped, tag = 'scratch operand']
  #allocation3 [shape = 'f32[16,16]{1,0:T(8,128)}', space=vmem, size = 0x2000, scoped, tag = 'scratch operand']
  #allocation4 [shape = 'f32[16,1]{1,0:T(8,128)}', space=vmem, size = 0x2000, scoped, tag = 'scratch operand']
  #allocation5 [shape = 'f32[1]{0:T(128)S(6)}', space=smem, size = 0x200, scoped, tag = 'scoped memory for encoder_forward.9']
  %s0 = inlined_call_operand.vmem [shape: bf16[16,16], index: 0, kind: input, shape index: {}]
  %s1 = inlined_call_operand.vmem [shape: bf16[2,16,16], index: 1, kind: input, shape index: {}]
  %s2 = inlined_call_operand.vmem [shape: f32[2,16,16], index: 2, kind: input, shape index: {}]
  %s3 = inlined_call_operand.vmem [shape: f32[16,16], index: 3, kind: input, shape index: {}]
  %s4 = inlined_call_operand.<no memory space> [shape: f32[1], index: 4, kind: input, shape index: {}]
  %s5 = inlined_call_operand.vmem [shape: f32[4,16], index: 5, kind: output, shape index: {}]
  %s6 = sld [smem:[#allocation0]]
  $region38: #{encoder_forward.9} parent=0
    _
  %s8 = ssub.s32 1, %s6
  %s9 = scalar_select 0, %s8, %s6
  %10 = sst [smem:[#allocation5]] %s4
  // Predicated region
  $region2: #{encoder_forward.9} parent=0 // pred_check
    _
  $region3: #{encoder_forward.9} parent=0 // pred_check_branch
    %12 = sbr.rel (0) target = $region5
  $region4: #{encoder_forward.9} parent=0 // pred_region
    _
  $region5: #{encoder_forward.9} parent=0 // pred_fallthru
    _
  // Predicated region
  $region6: #{encoder_forward.9} parent=0 // pred_check
    _
  $region7: #{encoder_forward.9} parent=0 // pred_check_branch
    %14 = sbr.rel (0) target = $region9
  $region8: #{encoder_forward.9} parent=0 // pred_region
    _
  $region9: #{encoder_forward.9} parent=0 // pred_fallthru
    _
  // Predicated region
  $region10: #{encoder_forward.9} parent=0 // pred_check
    _
  $region11: #{encoder_forward.9} parent=0 // pred_check_branch
    %16 = sbr.rel (0) target = $region13
  $region12: #{encoder_forward.9} parent=0 // pred_region
    _
  $region13: #{encoder_forward.9} parent=0 // pred_fallthru
    _
  // Predicated region
  $region14: #{encoder_forward.9} parent=0 // pred_check
    _
  $region15: #{encoder_forward.9} parent=0 // pred_check_branch
    %18 = sbr.rel (0) target = $region17
  $region16: #{encoder_forward.9} parent=0 // pred_region
    _
  $region17: #{encoder_forward.9} parent=0 // pred_fallthru
    _
  // Predicated region
  $region18: #{encoder_forward.9} parent=0 // pred_check
    _
  $region19: #{encoder_forward.9} parent=0 // pred_check_branch
    %20 = sbr.rel (0) target = $region21
  $region20: #{encoder_forward.9} parent=0 // pred_region
    _
  $region21: #{encoder_forward.9} parent=0 // pred_fallthru
    _
  %p22 = scmp.eq.s32.totalorder 0, 0
  // Predicated region
  $region22: #{encoder_forward.9} parent=0 // pred_check
    %p23 = pneg %p22
  $region23: #{encoder_forward.9} parent=0 // pred_check_branch
    %25 = sbr.rel (%p23) target = $region25
  $region24: #{encoder_forward.9} parent=0 // pred_region
    %vm26 = vcmask 130048
    %27 = vst.msk [vmem:[#allocation2] sm:$0xff] %vm26, 0.0
    %28 = vst.msk [vmem:[#allocation2 + $0x8] sm:$0xff] %vm26, 0.0
    %29 = vst.msk [vmem:[#allocation3] sm:$0xff] %vm26, 0.0
    %30 = vst.msk [vmem:[#allocation3 + $0x8] sm:$0xff] %vm26, 0.0
    %vm31 = vcmask 7168
    %32 = vst.msk [vmem:[#allocation4] sm:$0xff] %vm31, 0.0
    %33 = vst.msk [vmem:[#allocation4 + $0x8] sm:$0xff] %vm31, 0.0
  $region25: #{encoder_forward.9} parent=0 // pred_fallthru
    _
  %v34 = vld [vmem:[%s0] sm:$0xf]
  %v35 = vld [vmem:[%s0 + $0x4] sm:$0xf]
  %v36 = vld [vmem:[#allocation2] sm:$0xff]
  %v37 = vld [vmem:[#allocation2 + $0x8] sm:$0xff]
  %v38 = vld [vmem:[%s1] sm:$0xf]
  %v39 = vld [vmem:[%s1 + $0x4] sm:$0xf]
  %v42 = vunpack.c.l.b16 %v34
  %v43 = vunpack.c.l.b16 %v35
  %v44 = vpack.c.b16 %v43, %v42
  %v47 = vunpack.c.l.b16 %v38
  %v48 = vunpack.c.l.b16 %v39
  %v49 = vpack.c.b16 %v48, %v47
  %vm51 = vcmask 130048
  %v53 = vsel %vm51, %v44, 0
  %55 = vmatpush.bf16.msra.mxu0 0
  %56 = vmatpush.bf16.msra.mxu0 0
  %57 = vmatpush.bf16.msra.mxu0 0
  %58 = vmatpush.bf16.msra.mxu0 0
  %59 = vmatpush.bf16.msra.mxu0 0
  %60 = vmatpush.bf16.msra.mxu0 0
  %61 = vmatpush.bf16.msra.mxu0 0
  %62 = vmatpush.bf16.msra.mxu0 %v49
  %63 = vmatmul.bf16.gmra.mxu0 %v53
  %v64 = vpop.f32.mrf.mxu0
  %v65 = vadd.f32 0.0, %v64
  %v66 = vpop.f32.mrf.mxu0
  %v67 = vadd.f32 0.0, %v66
  %68 = vdwg.mxu0
  %v69 = vadd.f32 %v36, %v65
  %v70 = vadd.f32 %v37, %v67
  %71 = vst.msk [vmem:[#allocation2] sm:$0xff] %vm51, %v69
  %72 = vst.msk [vmem:[#allocation2 + $0x8] sm:$0xff] %vm51, %v70
  %v73 = vld [vmem:[#allocation3] sm:$0xff]
  %v74 = vld [vmem:[#allocation3 + $0x8] sm:$0xff]
  %s75 = scalar_lea.vmem %s1, 8
  %v76 = vld [vmem:[%s75] sm:$0xf]
  %v77 = vld [vmem:[%s75 + $0x4] sm:$0xf]
  %v80 = vunpack.c.l.b16 %v76
  %v81 = vunpack.c.l.b16 %v77
  %v82 = vpack.c.b16 %v81, %v80
  %84 = vmatpush.bf16.msra.mxu0 0
  %85 = vmatpush.bf16.msra.mxu0 0
  %86 = vmatpush.bf16.msra.mxu0 0
  %87 = vmatpush.bf16.msra.mxu0 0
  %88 = vmatpush.bf16.msra.mxu0 0
  %89 = vmatpush.bf16.msra.mxu0 0
  %90 = vmatpush.bf16.msra.mxu0 0
  %91 = vmatpush.bf16.msra.mxu0 %v82
  %92 = vmatmul.bf16.gmra.mxu0 %v53
  %v93 = vpop.f32.mrf.mxu0
  %v94 = vadd.f32 0.0, %v93
  %v95 = vpop.f32.mrf.mxu0
  %v96 = vadd.f32 0.0, %v95
  %97 = vdwg.mxu0
  %v98 = vadd.f32 %v73, %v94
  %v99 = vadd.f32 %v74, %v96
  %100 = vst.msk [vmem:[#allocation3] sm:$0xff] %vm51, %v98
  %101 = vst.msk [vmem:[#allocation3 + $0x8] sm:$0xff] %vm51, %v99
  %v102 = vld [vmem:[#allocation4] sm:$0xff]
  %v103 = vld [vmem:[#allocation4 + $0x8] sm:$0xff]
  %v104 = vunpack.c.l.bf16 %v34
  %v105 = vunpack.c.l.bf16 %v35
  %v106 = vsel %vm51, %v104, 0.0
  %107 = vadd.xlane.f32.xlu0 %v106
  %v108 = vpop.xlane.xlu0 %107
  %v109 = vsel %vm51, %v105, 0.0
  %110 = vadd.xlane.f32.xlu0 %v109
  %v111 = vpop.xlane.xlu0 %110
  %v112 = vadd.f32 %v102, %v108
  %v113 = vadd.f32 %v103, %v111
  %vm114 = vcmask 7168
  %115 = vst.msk [vmem:[#allocation4] sm:$0xff] %vm114, %v112
  %116 = vst.msk [vmem:[#allocation4 + $0x8] sm:$0xff] %vm114, %v113
  // Predicated region
  $region26: #{encoder_forward.9} parent=0 // pred_check
    %p117 = pneg %p22
  $region27: #{encoder_forward.9} parent=0 // pred_check_branch
    %119 = sbr.rel (%p117) target = $region29
  $region28: #{encoder_forward.9} parent=0 // pred_region
    %v120 = vld [vmem:[#allocation4] sm:$0xff]
    %v121 = vld [vmem:[#allocation4 + $0x8] sm:$0xff]
    %v122 = vmax.f32 %v120, 1e-12
    %v123 = vmax.f32 %v121, 1e-12
    %v124 = vrcp.pop %v122
    %v125 = vrcp.pop %v123
    %s126 = sld [smem:[#allocation5]]
    %v127 = vld [vmem:[#allocation2] sm:$0xff]
    %v128 = vld [vmem:[#allocation2 + $0x8] sm:$0xff]
    %130 = vset.pattern.permute.xlu0 0
    %131 = vperm.xlu0 %130, %v124
    %v132 = vpop.permute.xlu0 %131
    %135 = vset.pattern.permute.xlu0 0
    %136 = vperm.xlu0 %135, %v125
    %v137 = vpop.permute.xlu0 %136
    %v139 = vmul.f32 %v127, %v132
    %v140 = vmul.f32 %v128, %v137
    %v141 = vmul.f32 %v139, %v139
    %v142 = vmul.f32 %v140, %v140
    %v143 = vsel %vm51, %v141, 0.0
    %144 = vadd.xlane.f32.xlu0 %v143
    %v145 = vpop.xlane.xlu0 %144
    %v146 = vsel %vm51, %v142, 0.0
    %147 = vadd.xlane.f32.xlu0 %v146
    %v148 = vpop.xlane.xlu0 %147
    %v149 = vmax.f32 %v145, 1e-24
    %v150 = vmax.f32 %v148, 1e-24
    %v151 = vrsqrt.pop %v149
    %v152 = vmul.f32 %v151, %v149
    %v153 = vmul.f32 %v152, %v151
    %v154 = vmul.f32 0.5, %v153
    %v155 = vsub.f32 1.5, %v154
    %v156 = vmul.f32 %v151, %v155
    %vm157 = vweird.f32 %v149
    %vm158 = vweird.f32 %v151
    %vm159 = vmor %vm157, %vm158
    %v160 = vsel %vm159, %v151, %v156
    %v161 = vrsqrt.pop %v150
    %v162 = vmul.f32 %v161, %v150
    %v163 = vmul.f32 %v162, %v161
    %v164 = vmul.f32 0.5, %v163
    %v165 = vsub.f32 1.5, %v164
    %v166 = vmul.f32 %v161, %v165
    %vm167 = vweird.f32 %v150
    %vm168 = vweird.f32 %v161
    %vm169 = vmor %vm167, %vm168
    %v170 = vsel %vm169, %v161, %v166
    %v171 = vmul.f32 %v139, %v160
    %v172 = vmul.f32 %v140, %v170
    %v173 = vsub.f32 0.0, %v171
    %v174 = vsub.f32 0.0, %v172
    %v175 = vmul.f32 %v173, 1.442695
    %v176 = vpow.pop %v175
    %v177 = vmul.f32 %v174, 1.442695
    %v178 = vpow.pop %v177
    %v179 = vadd.f32 %v176, 1.0
    %v180 = vadd.f32 %v178, 1.0
    %v181 = vrcp.pop %v179
    %v182 = vmul.f32 %v179, %v181
    %v183 = vsub.f32 1.0, %v182
    %v184 = vmul.f32 %v181, %v183
    %v185 = vadd.f32 %v181, %v184
    %vm186 = vweird.f32 %v179
    %vm187 = vweird.f32 %v181
    %vm188 = vmor %vm186, %vm187
    %v189 = vsel %vm188, %v181, %v185
    %v190 = vand.u32 2147483647, %v179
    %vm191 = vcmp.eq.f32.partialorder %v190, 8.507059e+37
    %v192 = vand.u32 %v179, 2147483648
    %v193 = vor.u32 1.1754944e-38, %v192
    %v194 = vsel %vm191, %v193, %v189
    %v195 = vmul.f32 1.0, %v194
    %v196 = vrcp.pop %v180
    %v197 = vmul.f32 %v180, %v196
    %v198 = vsub.f32 1.0, %v197
    %v199 = vmul.f32 %v196, %v198
    %v200 = vadd.f32 %v196, %v199
    %vm201 = vweird.f32 %v180
    %vm202 = vweird.f32 %v196
    %vm203 = vmor %vm201, %vm202
    %v204 = vsel %vm203, %v196, %v200
    %v205 = vand.u32 2147483647, %v180
    %vm206 = vcmp.eq.f32.partialorder %v205, 8.507059e+37
    %v207 = vand.u32 %v180, 2147483648
    %v208 = vor.u32 1.1754944e-38, %v207
    %v209 = vsel %vm206, %v208, %v204
    %v210 = vmul.f32 1.0, %v209
    %v211 = vld [vmem:[#allocation3] sm:$0xff]
    %v212 = vld [vmem:[#allocation3 + $0x8] sm:$0xff]
    %v213 = vmul.f32 %v211, %v132
    %v214 = vmul.f32 %v212, %v137
    %v215 = vmul.f32 %v213, %v213
    %v216 = vmul.f32 %v214, %v214
    %v217 = vsel %vm51, %v215, 0.0
    %218 = vadd.xlane.f32.xlu0 %v217
    %v219 = vpop.xlane.xlu0 %218
    %v220 = vsel %vm51, %v216, 0.0
    %221 = vadd.xlane.f32.xlu0 %v220
    %v222 = vpop.xlane.xlu0 %221
    %v223 = vmax.f32 %v219, 1e-24
    %v224 = vmax.f32 %v222, 1e-24
    %v225 = vrsqrt.pop %v223
    %v226 = vmul.f32 %v225, %v223
    %v227 = vmul.f32 %v226, %v225
    %v228 = vmul.f32 0.5, %v227
    %v229 = vsub.f32 1.5, %v228
    %v230 = vmul.f32 %v225, %v229
    %vm231 = vweird.f32 %v223
    %vm232 = vweird.f32 %v225
    %vm233 = vmor %vm231, %vm232
    %v234 = vsel %vm233, %v225, %v230
    %v235 = vrsqrt.pop %v224
    %v236 = vmul.f32 %v235, %v224
    %v237 = vmul.f32 %v236, %v235
    %v238 = vmul.f32 0.5, %v237
    %v239 = vsub.f32 1.5, %v238
    %v240 = vmul.f32 %v235, %v239
    %vm241 = vweird.f32 %v224
    %vm242 = vweird.f32 %v235
    %vm243 = vmor %vm241, %vm242
    %v244 = vsel %vm243, %v235, %v240
    %v245 = vmul.f32 %v213, %v234
    %v246 = vmul.f32 %v214, %v244
    %v247 = vsub.f32 0.0, %v245
    %v248 = vsub.f32 0.0, %v246
    %v249 = vmul.f32 %v247, 1.442695
    %v250 = vpow.pop %v249
    %v251 = vmul.f32 %v248, 1.442695
    %v252 = vpow.pop %v251
    %v253 = vadd.f32 %v250, 1.0
    %v254 = vadd.f32 %v252, 1.0
    %v255 = vrcp.pop %v253
    %v256 = vmul.f32 %v253, %v255
    %v257 = vsub.f32 1.0, %v256
    %v258 = vmul.f32 %v255, %v257
    %v259 = vadd.f32 %v255, %v258
    %vm260 = vweird.f32 %v253
    %vm261 = vweird.f32 %v255
    %vm262 = vmor %vm260, %vm261
    %v263 = vsel %vm262, %v255, %v259
    %v264 = vand.u32 2147483647, %v253
    %vm265 = vcmp.eq.f32.partialorder %v264, 8.507059e+37
    %v266 = vand.u32 %v253, 2147483648
    %v267 = vor.u32 1.1754944e-38, %v266
    %v268 = vsel %vm265, %v267, %v263
    %v269 = vmul.f32 1.0, %v268
    %v270 = vrcp.pop %v254
    %v271 = vmul.f32 %v254, %v270
    %v272 = vsub.f32 1.0, %v271
    %v273 = vmul.f32 %v270, %v272
    %v274 = vadd.f32 %v270, %v273
    %vm275 = vweird.f32 %v254
    %vm276 = vweird.f32 %v270
    %vm277 = vmor %vm275, %vm276
    %v278 = vsel %vm277, %v270, %v274
    %v279 = vand.u32 2147483647, %v254
    %vm280 = vcmp.eq.f32.partialorder %v279, 8.507059e+37
    %v281 = vand.u32 %v254, 2147483648
    %v282 = vor.u32 1.1754944e-38, %v281
    %v283 = vsel %vm280, %v282, %v278
    %v284 = vmul.f32 1.0, %v283
    %v285 = vld [vmem:[%s3] sm:$0xff]
    %v286 = vld [vmem:[%s3 + $0x8] sm:$0xff]
    %v288 = vsel %vm51, %v195, 0
    %v291 = vsel %vm51, %v210, 0
    %293 = vmatpush.msra.mxu0 0.0
    %294 = vmatpush.msra.mxu0 0.0
    %295 = vmatpush.msra.mxu0 0.0
    %296 = vmatpush.msra.mxu0 0.0
    %297 = vmatpush.msra.mxu0 0.0
    %298 = vmatpush.msra.mxu0 0.0
    %299 = vmatpush.msra.mxu0 0.0
    %300 = vmatpush.msra.mxu0 0.0
    %301 = vmatpush.msra.mxu0 0.0
    %302 = vmatpush.msra.mxu0 0.0
    %303 = vmatpush.msra.mxu0 0.0
    %304 = vmatpush.msra.mxu0 0.0
    %305 = vmatpush.msra.mxu0 0.0
    %306 = vmatpush.msra.mxu0 0.0
    %307 = vmatpush.msra.mxu0 %v286
    %308 = vmatpush.msra.mxu0 %v285
    %309 = vmatmul.f32.gmra.mxu0 %v288
    %v310 = vpop.f32.mrf.mxu0
    %v311 = vadd.f32 0.0, %v310
    %312 = vmatmul.f32.gmra.mxu0 %v291
    %v313 = vpop.f32.mrf.mxu0
    %v314 = vadd.f32 0.0, %v313
    %315 = vdwg.mxu0
    %v317 = vsel %vm51, %v269, 0
    %v320 = vsel %vm51, %v284, 0
    %322 = vmatpush.msra.mxu0 0.0
    %323 = vmatpush.msra.mxu0 0.0
    %324 = vmatpush.msra.mxu0 0.0
    %325 = vmatpush.msra.mxu0 0.0
    %326 = vmatpush.msra.mxu0 0.0
    %327 = vmatpush.msra.mxu0 0.0
    %328 = vmatpush.msra.mxu0 0.0
    %329 = vmatpush.msra.mxu0 0.0
    %330 = vmatpush.msra.mxu0 0.0
    %331 = vmatpush.msra.mxu0 0.0
    %332 = vmatpush.msra.mxu0 0.0
    %333 = vmatpush.msra.mxu0 0.0
    %334 = vmatpush.msra.mxu0 0.0
    %335 = vmatpush.msra.mxu0 0.0
    %336 = vmatpush.msra.mxu0 %v286
    %337 = vmatpush.msra.mxu0 %v285
    %338 = vmatmul.f32.gmra.mxu0 %v317
    %v339 = vpop.f32.mrf.mxu0
    %v340 = vadd.f32 0.0, %v339
    %341 = vmatmul.f32.gmra.mxu0 %v320
    %v342 = vpop.f32.mrf.mxu0
    %v343 = vadd.f32 0.0, %v342
    %344 = vdwg.mxu0
    %v345 = vld [vmem:[%s2] sm:$0xff]
    %v346 = vld [vmem:[%s2 + $0x8] sm:$0xff]
    %s347 = scalar_lea.vmem %s2, 16
    %v348 = vld [vmem:[%s347] sm:$0xff]
    %v349 = vld [vmem:[%s347 + $0x8] sm:$0xff]
    %v350 = vmul.f32 %v345, %v311
    %v351 = vmul.f32 %v346, %v314
    %v352 = vmul.f32 %v348, %v311
    %v353 = vmul.f32 %v349, %v314
    %v354 = vmul.f32 %v348, %v340
    %v355 = vmul.f32 %v349, %v343
    %v356 = vmul.f32 %v345, %v340
    %v357 = vmul.f32 %v346, %v343
    %v358 = vsel %vm51, %v350, 0.0
    %359 = vadd.xlane.f32.xlu0 %v358
    %v360 = vpop.xlane.xlu0 %359
    %v361 = vsel %vm51, %v351, 0.0
    %362 = vadd.xlane.f32.xlu0 %v361
    %v363 = vpop.xlane.xlu0 %362
    %v364 = vsel %vm51, %v352, 0.0
    %365 = vadd.xlane.f32.xlu0 %v364
    %v366 = vpop.xlane.xlu0 %365
    %v367 = vsel %vm51, %v353, 0.0
    %368 = vadd.xlane.f32.xlu0 %v367
    %v369 = vpop.xlane.xlu0 %368
    %v370 = vsel %vm51, %v354, 0.0
    %371 = vadd.xlane.f32.xlu0 %v370
    %v372 = vpop.xlane.xlu0 %371
    %v373 = vsel %vm51, %v355, 0.0
    %374 = vadd.xlane.f32.xlu0 %v373
    %v375 = vpop.xlane.xlu0 %374
    %v376 = vsel %vm51, %v356, 0.0
    %377 = vadd.xlane.f32.xlu0 %v376
    %v378 = vpop.xlane.xlu0 %377
    %v379 = vsel %vm51, %v357, 0.0
    %380 = vadd.xlane.f32.xlu0 %v379
    %v381 = vpop.xlane.xlu0 %380
    %v382 = vstv %s126
    %v383 = vadd.f32 %v360, %v382
    %v384 = vadd.f32 %v363, %v382
    %v385 = vadd.f32 %v366, %v382
    %v386 = vadd.f32 %v369, %v382
    %v387 = vadd.f32 %v372, %v382
    %v388 = vadd.f32 %v375, %v382
    %v389 = vadd.f32 %v378, %v382
    %v390 = vadd.f32 %v381, %v382
    %v399 = vlaneseq
    %v400 = vand.u32 %v399, 127
    %v401 = vperm.slane %v383, %v400
    %v402 = vadd.s32 %v400, 4294967288
    %v403 = vperm.slane %v384, %v402
    %vm404 = vcmask 130112
    %v405 = vsel %vm404, %v403, %v401
    %v406 = vperm.slane %v385, %v400
    %v407 = vperm.slane %v386, %v402
    %v408 = vsel %vm404, %v407, %v406
    %v409 = vperm.slane %v387, %v400
    %v410 = vperm.slane %v388, %v402
    %v411 = vsel %vm404, %v410, %v409
    %v412 = vperm.slane %v389, %v400
    %v413 = vperm.slane %v390, %v402
    %v414 = vsel %vm404, %v413, %v412
    %vm415 = vcmask 1041409
    %v416 = vsel %vm415, %v408, %v405
    %vm417 = vcmask 1042434
    %v418 = vsel %vm417, %v411, %v416
    %vm419 = vcmask 1043459
    %v420 = vsel %vm419, %v414, %v418
    %vm422 = vcmask 125952
    %423 = vst.msk [vmem:[%s5] sm:$0xf] %vm422, %v420
  $region29: #{encoder_forward.9} parent=0 // pred_fallthru
    _
  // Predicated region
  $region30: #{encoder_forward.9} parent=0 // pred_check
    _
  $region31: #{encoder_forward.9} parent=0 // pred_check_branch
    %425 = sbr.rel (0) target = $region33
  $region32: #{encoder_forward.9} parent=0 // pred_region
    _
  $region33: #{encoder_forward.9} parent=0 // pred_fallthru
    _
  // Predicated region
  $region34: #{encoder_forward.9} parent=0 // pred_check
    _
  $region35: #{encoder_forward.9} parent=0 // pred_check_branch
    %427 = sbr.rel (0) target = $region37
  $region36: #{encoder_forward.9} parent=0 // pred_region
    _
  $region37: #{encoder_forward.9} parent=0 // pred_fallthru
    _

</llo_original>
